<compile_context>
chip_gen: v7x
topology: tpu7x:2x2x1
jax: 0.10.0
libtpu: 0.0.40
codegen_flags: <defaults>
</compile_context>

<pallas_src>
import math
import functools

import jax
import jax.numpy as jnp
from jax.experimental import pallas as pl
from jax.experimental.pallas import tpu as pltpu


# ----------------------------- small helpers -----------------------------

def _layernorm(x, eps=1e-6):
    # LayerNorm over the last dim, no affine, biased variance (PyTorch semantics).
    mu = jnp.mean(x, axis=-1, keepdims=True)
    xc = x - mu
    var = jnp.mean(xc * xc, axis=-1, keepdims=True)
    return xc * jax.lax.rsqrt(var + eps)


# "NT" contraction: contract the last dim of both operands, no batch dims.
_NT_DIMS = (((1,), (1,)), ((), ()))


def _vmem_capacity_bytes():
    try:
        return int(pltpu.get_tpu_info().vmem_capacity_bytes)
    except Exception:
        return 64 << 20  # conservative (v7x per-core VMEM)


def _choose_tile(length, max_tl):
    """Largest tile <= max_tl dividing `length`; prefer {512,384,256,128}, then
    multiples of 16 (bf16 sublane tile), then multiples of 8."""
    if length <= max_tl:
        return length
    for cand in (512, 384, 256, 128):
        if cand <= max_tl and length % cand == 0:
            return cand
    fallback = None
    for tl in range(min(max_tl, length), 0, -1):
        if length % tl == 0:
            if tl % 16 == 0:
                return tl
            if fallback is None and tl % 8 == 0:
                fallback = tl
    return fallback if fallback is not None else length


def _vmem_limit_bytes(L, C, TL, Hm, H, hd):
    bf, f4 = 2, 4
    w_bytes = 4 * C * C * bf + 2 * C * Hm * bf + (5 * C + Hm) * f4
    io_bytes = 2 * TL * C * f4 + L * C * bf + 6 * C * f4
    kv_scratch = 2 * H * hd * max(L, 128) * bf
    small_scratch = 2 * H * TL * max(hd, 128) * bf + TL * max(C, 128) * bf
    tmp = 2 * TL * L * f4 + C * L * (f4 + bf) + L * C * bf + TL * Hm * (f4 + bf)
    est = 2 * (w_bytes + io_bytes) + kv_scratch + small_scratch + tmp
    upper = min(_vmem_capacity_bytes() * 7 // 8, 100 << 20)
    return int(min(max(est + (8 << 20), 32 << 20), upper))


# ----------------------------- Pallas kernel -----------------------------

def _block_kernel(num_heads,
                  x_tile_ref, x_full_ref, modv_ref,
                  w_q_ref, b_q_ref, w_kt_ref, b_k_ref, w_vt_ref, b_v_ref,
                  w_so_ref, b_so_ref, w_m1_ref, b_m1_ref, w_m2_ref, b_m2_ref,
                  o_ref, k_sc, v_sc, q_sc, oh_sc, attn_sc):
    li = pl.program_id(1)
    C = x_tile_ref.shape[-1]
    hd = C // num_heads
    scale = 1.0 / math.sqrt(hd)

    mv = modv_ref[0]                                           # [6, C] f32
    shift_msa, scale_msa, gate_msa = mv[0:1], mv[1:2], mv[2:3]
    shift_mlp, scale_mlp, gate_mlp = mv[3:4], mv[4:5], mv[5:6]

    # ---- K / V for the full sequence: computed once per batch row ----
    @pl.when(li == 0)
    def _():
        xf = x_full_ref[0].astype(jnp.float32)                 # [L, C]
        hf = (_layernorm(xf) * (1.0 + scale_msa) + shift_msa).astype(jnp.bfloat16)
        # Fused full-width projections producing lane-dense [C, L] results.
        kt = (jax.lax.dot_general(w_kt_ref[...], hf, _NT_DIMS,
                                  preferred_element_type=jnp.float32)
              + b_k_ref[...]).astype(jnp.bfloat16)             # [C, L]
        vt = (jax.lax.dot_general(w_vt_ref[...], hf, _NT_DIMS,
                                  preferred_element_type=jnp.float32)
              + b_v_ref[...]).astype(jnp.bfloat16)             # [C, L]
        for hh in range(num_heads):                            # static sublane slices
            k_sc[hh] = kt[hh * hd:(hh + 1) * hd, :]
            v_sc[hh] = vt[hh * hd:(hh + 1) * hd, :]

    # ---- MSA branch on the query tile ----
    x = x_tile_ref[0]                                          # [TL, C] f32
    h = (_layernorm(x) * (1.0 + scale_msa) + shift_msa).astype(jnp.bfloat16)
    # Single full-width Q projection; 1/sqrt(hd) folded into q.
    q_all = ((jnp.dot(h, w_q_ref[...], preferred_element_type=jnp.float32)
              + b_q_ref[...]) * scale).astype(jnp.bfloat16)    # [TL, C]
    for hh in range(num_heads):                                # static lane slices
        q_sc[hh] = q_all[:, hh * hd:(hh + 1) * hd]

    def head_body(hh, carry):
        q_h = q_sc[hh]                                         # [TL, hd]
        s = jnp.dot(q_h, k_sc[hh],
                    preferred_element_type=jnp.float32)        # [TL, L]
        m = jnp.max(s, axis=-1, keepdims=True)
        e = jnp.exp(s - m)
        l = jnp.sum(e, axis=-1, keepdims=True)
        o_un = jax.lax.dot_general(e.astype(jnp.bfloat16), v_sc[hh], _NT_DIMS,
                                   preferred_element_type=jnp.float32)  # [TL, hd]
        oh_sc[hh] = (o_un * pl.reciprocal(l, approx=True)).astype(jnp.bfloat16)
        return carry
    jax.lax.fori_loop(0, num_heads, head_body, 0)

    # Assemble head outputs into a lane-dense [TL, C] bf16 tile, single out-proj matmul.
    for hh in range(num_heads):
        attn_sc[:, hh * hd:(hh + 1) * hd] = oh_sc[hh]
    attn = (jnp.dot(attn_sc[...], w_so_ref[...], preferred_element_type=jnp.float32)
            + b_so_ref[...])
    x = x + attn * gate_msa

    # ---- FFN branch ----
    h = (_layernorm(x) * (1.0 + scale_mlp) + shift_mlp).astype(jnp.bfloat16)
    h1 = jnp.dot(h, w_m1_ref[...], preferred_element_type=jnp.float32) + b_m1_ref[...]
    h1 = jax.nn.gelu(h1, approximate=True).astype(jnp.bfloat16)   # GELU(approximate="tanh")
    h2 = jnp.dot(h1, w_m2_ref[...], preferred_element_type=jnp.float32) + b_m2_ref[...]
    x = x + h2 * gate_mlp

    o_ref[0] = x.astype(o_ref.dtype)


# ----------------------------- weight preparation -----------------------------

def _prepare_weights(params):
    """Cast matmul operands to bf16 (biases stay f32).  K/V weights are passed
    transposed ([C_out, C_in]) so the kernel computes lane-dense [C, L] results
    with a single NT matmul; their biases become [C, 1] columns."""
    bf16, f32 = jnp.bfloat16, jnp.float32
    return (
        params['w_q'].astype(bf16),                       # [C, C]
        params['b_q'].reshape(1, -1).astype(f32),          # [1, C]
        params['w_k'].T.astype(bf16),                      # [C, C] (out, in)
        params['b_k'].reshape(-1, 1).astype(f32),          # [C, 1]
        params['w_v'].T.astype(bf16),                      # [C, C] (out, in)
        params['b_v'].reshape(-1, 1).astype(f32),          # [C, 1]
        params['w_so'].astype(bf16),                       # [C, C]
        params['b_so'].reshape(1, -1).astype(f32),          # [1, C]
        params['w_m1'].astype(bf16), params['b_m1'].reshape(1, -1).astype(f32),
        params['w_m2'].astype(bf16), params['b_m2'].reshape(1, -1).astype(f32),
    )


# ----------------------------- wrapper -----------------------------

def modulated_transformer_block(x, mod, params, num_heads, *, max_tl=None):
    B, L, C = x.shape
    assert C % num_heads == 0
    hd = C // num_heads
    x = x.astype(jnp.float32)
    mod = mod.astype(jnp.float32)

    if max_tl is None:
        max_tl = 512 if _vmem_capacity_bytes() >= (96 << 20) else 256

    # adaLN modulation (SiLU + Linear(C, 6C)) as one batched XLA matmul; w_mod
    # (the largest weight) never enters VMEM.
    mod_silu = mod * jax.nn.sigmoid(mod)
    modv = (jnp.dot(mod_silu, params['w_mod'], preferred_element_type=jnp.float32)
            + params['b_mod']).reshape(B, 6, C)

    weights = _prepare_weights(params)
    Hm = params['w_m1'].shape[1]

    TL = _choose_tile(L, max_tl)
    assert L % TL == 0
    nL = L // TL

    x_full_bf16 = x.astype(jnp.bfloat16)   # full row, K/V branch only

    vmem_limit = _vmem_limit_bytes(L, C, TL, Hm, num_heads, hd)
    kernel = functools.partial(_block_kernel, num_heads)

    in_specs = [
        pl.BlockSpec((1, TL, C), lambda b, l: (b, l, 0)),   # residual / query tile (f32)
        pl.BlockSpec((1, L, C), lambda b, l: (b, 0, 0)),    # full row (bf16, K/V at l == 0)
        pl.BlockSpec((1, 6, C), lambda b, l: (b, 0, 0)),    # adaLN vectors
    ] + [
        # Weights: constant block index -> resident, not re-fetched across grid steps.
        pl.BlockSpec(w.shape, lambda b, l: (0, 0))
        for w in weights
    ]

    return pl.pallas_call(
        kernel,
        out_shape=jax.ShapeDtypeStruct((B, L, C), jnp.float32),
        grid=(B, nL),
        in_specs=in_specs,
        out_specs=pl.BlockSpec((1, TL, C), lambda b, l: (b, l, 0)),
        scratch_shapes=[
            pltpu.VMEM((num_heads, hd, L), jnp.bfloat16),   # K, head-major, lanes = L
            pltpu.VMEM((num_heads, hd, L), jnp.bfloat16),   # V, head-major, lanes = L
            pltpu.VMEM((num_heads, TL, hd), jnp.bfloat16),  # Q, head-major
            pltpu.VMEM((num_heads, TL, hd), jnp.bfloat16),  # per-head attention output
            pltpu.VMEM((TL, C), jnp.bfloat16),              # assembled out-proj input
        ],
        compiler_params=pltpu.CompilerParams(
            dimension_semantics=("parallel", "arbitrary"),
            vmem_limit_bytes=vmem_limit,
        ),
    )(x, x_full_bf16, modv, *weights)


# ----------------------------- pure-JAX reference (self-check) -----------------------------

def _ref_block(x, mv, w, num_heads):
    (w_q, b_q, w_kt, b_k, w_vt, b_v, w_so, b_so, w_m1, b_m1, w_m2, b_m2) = w
    C = x.shape[-1]
    hd = C // num_heads
    scale = 1.0 / math.sqrt(hd)
    shift_msa, scale_msa, gate_msa = mv[0:1], mv[1:2], mv[2:3]
    shift_mlp, scale_mlp, gate_mlp = mv[3:4], mv[4:5], mv[5:6]

    # K/V branch (kernel reads a bf16 copy of the row).
    xf = x.astype(jnp.bfloat16).astype(jnp.float32)
    hf = (_layernorm(xf) * (1.0 + scale_msa) + shift_msa).astype(jnp.bfloat16)
    kt = (jax.lax.dot_general(w_kt, hf, _NT_DIMS,
                              preferred_element_type=jnp.float32) + b_k).astype(jnp.bfloat16)
    vt = (jax.lax.dot_general(w_vt, hf, _NT_DIMS,
                              preferred_element_type=jnp.float32) + b_v).astype(jnp.bfloat16)

    h = (_layernorm(x) * (1.0 + scale_msa) + shift_msa).astype(jnp.bfloat16)
    q = ((jnp.dot(h, w_q, preferred_element_type=jnp.float32) + b_q) * scale).astype(jnp.bfloat16)
    outs = []
    for hh in range(num_heads):
        s = jnp.dot(q[:, hh * hd:(hh + 1) * hd], kt[hh * hd:(hh + 1) * hd],
                    preferred_element_type=jnp.float32)
        m = jnp.max(s, axis=-1, keepdims=True)
        e = jnp.exp(s - m)
        l = jnp.sum(e, axis=-1, keepdims=True)
        o = jax.lax.dot_general(e.astype(jnp.bfloat16), vt[hh * hd:(hh + 1) * hd], _NT_DIMS,
                                preferred_element_type=jnp.float32)
        outs.append((o / l).astype(jnp.bfloat16))
    attn = jnp.dot(jnp.concatenate(outs, axis=-1), w_so,
                   preferred_element_type=jnp.float32) + b_so
    x = x + attn * gate_msa

    h = (_layernorm(x) * (1.0 + scale_mlp) + shift_mlp).astype(jnp.bfloat16)
    h1 = jnp.dot(h, w_m1, preferred_element_type=jnp.float32) + b_m1
    h1 = jax.nn.gelu(h1, approximate=True).astype(jnp.bfloat16)
    h2 = jnp.dot(h1, w_m2, preferred_element_type=jnp.float32) + b_m2
    return x + h2 * gate_mlp


def reference_forward(x, mod, params, num_heads):
    B, L, C = x.shape
    x = x.astype(jnp.float32)
    mod = mod.astype(jnp.float32)
    mod_silu = mod * jax.nn.sigmoid(mod)
    modv = (jnp.dot(mod_silu, params['w_mod'], preferred_element_type=jnp.float32)
            + params['b_mod']).reshape(B, 6, C)
    w = _prepare_weights(params)
    return jax.vmap(lambda xb, mb: _ref_block(xb, mb, w, num_heads))(x, modv)


# ----------------------------- parameter init -----------------------------

def init_params(key, channels, mlp_ratio=4.0):
    # w_q / w_k / w_v correspond to column slices of the module's fused to_qkv weight.
    C = channels
    Hm = int(C * mlp_ratio)
    ks = jax.random.split(key, 16)
    n = lambda k, shape: 0.02 * jax.random.normal(k, shape, jnp.float32)
    return {
        'w_mod': n(ks[0], (C, 6 * C)), 'b_mod': n(ks[1], (6 * C,)),
        'w_q': n(ks[2], (C, C)), 'b_q': n(ks[3], (1, C)),
        'w_k': n(ks[4], (C, C)), 'b_k': n(ks[5], (1, C)),
        'w_v': n(ks[6], (C, C)), 'b_v': n(ks[7], (1, C)),
        'w_so': n(ks[8], (C, C)), 'b_so': n(ks[9], (1, C)),
        'w_m1': n(ks[10], (C, Hm)), 'b_m1': n(ks[11], (1, Hm)),
        'w_m2': n(ks[12], (Hm, C)), 'b_m2': n(ks[13], (1, C)),
    }


# TODO(synk): windowed attention / shift_window, RoPE, qk RMS-norm, share_mod and
# use_checkpoint variants are not exercised by the default constructor flags and are
# not implemented.

if __name__ == "__main__":
    key = jax.random.PRNGKey(0)
    B, L, C = 2, 128, 64
    num_heads = 4
    mlp_ratio = 4.0

    k_x, k_m, k_p = jax.random.split(key, 3)
    x = jax.random.normal(k_x, (B, L, C), jnp.float32)
    mod = jax.random.normal(k_m, (B, C), jnp.float32)
    params = init_params(k_p, C, mlp_ratio)

    # max_tl=64 -> TL=64, two query tiles per batch row (exercises the L tiling path).
    out = modulated_transformer_block(x, mod, params, num_heads, max_tl=64)
    out = jax.block_until_ready(out)

    ref = reference_forward(x, mod, params, num_heads)
    assert out.shape == (B, L, C)
    err = float(jnp.max(jnp.abs(out - ref)))
    assert jnp.allclose(out, ref, atol=1e-2, rtol=1e-2), err

    print("KERNEL_OK")
</pallas_src>

<mosaic_0001>
module attributes {stable_mosaic.version = 11 : i64} {
  func.func @_block_kernel(%arg0: i32, %arg1: i32, %arg2: memref<1x64x64xf32, #tpu.memory_space<vmem>>, %arg3: memref<1x128x64xbf16, #tpu.memory_space<vmem>>, %arg4: memref<1x6x64xf32, #tpu.memory_space<vmem>>, %arg5: memref<64x64xbf16, #tpu.memory_space<vmem>>, %arg6: memref<1x64xf32, #tpu.memory_space<vmem>>, %arg7: memref<64x64xbf16, #tpu.memory_space<vmem>>, %arg8: memref<64x1xf32, #tpu.memory_space<vmem>>, %arg9: memref<64x64xbf16, #tpu.memory_space<vmem>>, %arg10: memref<64x1xf32, #tpu.memory_space<vmem>>, %arg11: memref<64x64xbf16, #tpu.memory_space<vmem>>, %arg12: memref<1x64xf32, #tpu.memory_space<vmem>>, %arg13: memref<64x256xbf16, #tpu.memory_space<vmem>>, %arg14: memref<1x256xf32, #tpu.memory_space<vmem>>, %arg15: memref<256x64xbf16, #tpu.memory_space<vmem>>, %arg16: memref<1x64xf32, #tpu.memory_space<vmem>>, %arg17: memref<1x64x64xf32, #tpu.memory_space<vmem>>, %arg18: memref<4x16x128xbf16, #tpu.memory_space<vmem>>, %arg19: memref<4x16x128xbf16, #tpu.memory_space<vmem>>, %arg20: memref<4x64x16xbf16, #tpu.memory_space<vmem>>, %arg21: memref<4x64x16xbf16, #tpu.memory_space<vmem>>, %arg22: memref<64x64xbf16, #tpu.memory_space<vmem>>) attributes {dimension_semantics = [#tpu.dimension_semantics<parallel>, #tpu.dimension_semantics<arbitrary>], iteration_bounds = array<i64: 2, 2>, scalar_prefetch = 0 : i64, scratch_operands = 5 : i64, tpu.core_type = #tpu.core_type<tc>, window_params = [{transform_indices = @transform_0, window_bounds = array<i64: 1, 64, 64>}, {transform_indices = @transform_1, window_bounds = array<i64: 1, 128, 64>}, {transform_indices = @transform_2, window_bounds = array<i64: 1, 6, 64>}, {pipeline_mode = #tpu.pipeline_mode<synchronous>, transform_indices = @transform_3, window_bounds = array<i64: 64, 64>}, {pipeline_mode = #tpu.pipeline_mode<synchronous>, transform_indices = @transform_4, window_bounds = array<i64: 1, 64>}, {pipeline_mode = #tpu.pipeline_mode<synchronous>, transform_indices = @transform_5, window_bounds = array<i64: 64, 64>}, {pipeline_mode = #tpu.pipeline_mode<synchronous>, transform_indices = @transform_6, window_bounds = array<i64: 64, 1>}, {pipeline_mode = #tpu.pipeline_mode<synchronous>, transform_indices = @transform_7, window_bounds = array<i64: 64, 64>}, {pipeline_mode = #tpu.pipeline_mode<synchronous>, transform_indices = @transform_8, window_bounds = array<i64: 64, 1>}, {pipeline_mode = #tpu.pipeline_mode<synchronous>, transform_indices = @transform_9, window_bounds = array<i64: 64, 64>}, {pipeline_mode = #tpu.pipeline_mode<synchronous>, transform_indices = @transform_10, window_bounds = array<i64: 1, 64>}, {pipeline_mode = #tpu.pipeline_mode<synchronous>, transform_indices = @transform_11, window_bounds = array<i64: 64, 256>}, {pipeline_mode = #tpu.pipeline_mode<synchronous>, transform_indices = @transform_12, window_bounds = array<i64: 1, 256>}, {pipeline_mode = #tpu.pipeline_mode<synchronous>, transform_indices = @transform_13, window_bounds = array<i64: 256, 64>}, {pipeline_mode = #tpu.pipeline_mode<synchronous>, transform_indices = @transform_14, window_bounds = array<i64: 1, 64>}, {transform_indices = @transform_15, window_bounds = array<i64: 1, 64, 64>}]} {
    %c0 = arith.constant 0 : index
    %c0_0 = arith.constant 0 : index
    %c0_1 = arith.constant 0 : index
    %0 = vector.load %arg4[%c0, %c0_0, %c0_1] : memref<1x6x64xf32, #tpu.memory_space<vmem>>, vector<1x6x64xf32>
    %1 = vector.shape_cast %0 : vector<1x6x64xf32> to vector<6x64xf32>
    %2 = vector.extract_strided_slice %1 {offsets = [0, 0], sizes = [1, 64], strides = [1, 1]} : vector<6x64xf32> to vector<1x64xf32>
    %3 = vector.extract_strided_slice %1 {offsets = [1, 0], sizes = [1, 64], strides = [1, 1]} : vector<6x64xf32> to vector<1x64xf32>
    %4 = vector.extract_strided_slice %1 {offsets = [2, 0], sizes = [1, 64], strides = [1, 1]} : vector<6x64xf32> to vector<1x64xf32>
    %5 = vector.extract_strided_slice %1 {offsets = [3, 0], sizes = [1, 64], strides = [1, 1]} : vector<6x64xf32> to vector<1x64xf32>
    %6 = vector.extract_strided_slice %1 {offsets = [4, 0], sizes = [1, 64], strides = [1, 1]} : vector<6x64xf32> to vector<1x64xf32>
    %7 = vector.extract_strided_slice %1 {offsets = [5, 0], sizes = [1, 64], strides = [1, 1]} : vector<6x64xf32> to vector<1x64xf32>
    %c0_i32 = arith.constant 0 : i32
    %8 = arith.cmpi eq, %arg1, %c0_i32 : i32
    %9 = arith.extui %8 : i1 to i32
    %c0_i32_2 = arith.constant 0 : i32
    %10 = arith.cmpi ne, %9, %c0_i32_2 : i32
    scf.if %10 {
      %c0_75 = arith.constant 0 : index
      %c0_76 = arith.constant 0 : index
      %c0_77 = arith.constant 0 : index
      %135 = vector.load %arg3[%c0_75, %c0_76, %c0_77] : memref<1x128x64xbf16, #tpu.memory_space<vmem>>, vector<1x128x64xbf16>
      %136 = vector.shape_cast %135 : vector<1x128x64xbf16> to vector<128x64xbf16>
      %137 = arith.extf %136 : vector<128x64xbf16> to vector<128x64xf32>
      %cst_78 = arith.constant dense<0.000000e+00> : vector<128xf32>
      %138 = vector.multi_reduction <add>, %137, %cst_78 [1] : vector<128x64xf32> to vector<128xf32>
      %139 = vector.shape_cast %138 : vector<128xf32> to vector<128x1xf32>
      %cst_79 = arith.constant 6.400000e+01 : f32
      %140 = vector.broadcast %cst_79 : f32 to vector<128x1xf32>
      %141 = arith.divf %139, %140 : vector<128x1xf32>
      %142 = vector.broadcast %141 : vector<128x1xf32> to vector<128x64xf32>
      %143 = arith.subf %137, %142 : vector<128x64xf32>
      %144 = arith.mulf %143, %143 : vector<128x64xf32>
      %cst_80 = arith.constant dense<0.000000e+00> : vector<128xf32>
      %145 = vector.multi_reduction <add>, %144, %cst_80 [1] : vector<128x64xf32> to vector<128xf32>
      %146 = vector.shape_cast %145 : vector<128xf32> to vector<128x1xf32>
      %cst_81 = arith.constant 6.400000e+01 : f32
      %147 = vector.broadcast %cst_81 : f32 to vector<128x1xf32>
      %148 = arith.divf %146, %147 : vector<128x1xf32>
      %cst_82 = arith.constant 9.99999997E-7 : f32
      %149 = vector.broadcast %cst_82 : f32 to vector<128x1xf32>
      %150 = arith.addf %148, %149 : vector<128x1xf32>
      %151 = math.rsqrt %150 : vector<128x1xf32>
      %152 = vector.broadcast %151 : vector<128x1xf32> to vector<128x64xf32>
      %153 = arith.mulf %143, %152 : vector<128x64xf32>
      %cst_83 = arith.constant 1.000000e+00 : f32
      %154 = vector.broadcast %cst_83 : f32 to vector<1x64xf32>
      %155 = arith.addf %154, %3 : vector<1x64xf32>
      %156 = vector.broadcast %155 : vector<1x64xf32> to vector<128x64xf32>
      %157 = arith.mulf %153, %156 : vector<128x64xf32>
      %158 = vector.broadcast %2 : vector<1x64xf32> to vector<128x64xf32>
      %159 = arith.addf %157, %158 : vector<128x64xf32>
      %160 = arith.truncf %159 : vector<128x64xf32> to vector<128x64xbf16>
      %c0_84 = arith.constant 0 : index
      %c0_85 = arith.constant 0 : index
      %161 = vector.load %arg7[%c0_84, %c0_85] : memref<64x64xbf16, #tpu.memory_space<vmem>>, vector<64x64xbf16>
      %cst_86 = arith.constant dense<0.000000e+00> : vector<64x128xf32>
      %162 = tpu.matmul %161, %160, %cst_86 {dimension_numbers = #tpu.dot_dimension_numbers<[1], [1], [0], [0], [0, 0, 1, 0], [], []>} : vector<64x64xbf16>, vector<128x64xbf16>, vector<64x128xf32> -> vector<64x128xf32>
      %c0_87 = arith.constant 0 : index
      %c0_88 = arith.constant 0 : index
      %163 = vector.load %arg8[%c0_87, %c0_88] : memref<64x1xf32, #tpu.memory_space<vmem>>, vector<64x1xf32>
      %164 = vector.broadcast %163 : vector<64x1xf32> to vector<64x128xf32>
      %165 = arith.addf %162, %164 : vector<64x128xf32>
      %166 = arith.truncf %165 : vector<64x128xf32> to vector<64x128xbf16>
      %c0_89 = arith.constant 0 : index
      %c0_90 = arith.constant 0 : index
      %167 = vector.load %arg9[%c0_89, %c0_90] : memref<64x64xbf16, #tpu.memory_space<vmem>>, vector<64x64xbf16>
      %cst_91 = arith.constant dense<0.000000e+00> : vector<64x128xf32>
      %168 = tpu.matmul %167, %160, %cst_91 {dimension_numbers = #tpu.dot_dimension_numbers<[1], [1], [0], [0], [0, 0, 1, 0], [], []>} : vector<64x64xbf16>, vector<128x64xbf16>, vector<64x128xf32> -> vector<64x128xf32>
      %c0_92 = arith.constant 0 : index
      %c0_93 = arith.constant 0 : index
      %169 = vector.load %arg10[%c0_92, %c0_93] : memref<64x1xf32, #tpu.memory_space<vmem>>, vector<64x1xf32>
      %170 = vector.broadcast %169 : vector<64x1xf32> to vector<64x128xf32>
      %171 = arith.addf %168, %170 : vector<64x128xf32>
      %172 = arith.truncf %171 : vector<64x128xf32> to vector<64x128xbf16>
      %173 = vector.extract_strided_slice %166 {offsets = [0, 0], sizes = [16, 128], strides = [1, 1]} : vector<64x128xbf16> to vector<16x128xbf16>
      %c0_94 = arith.constant 0 : index
      %c0_95 = arith.constant 0 : index
      %c0_96 = arith.constant 0 : index
      %174 = vector.load %arg18[%c0_94, %c0_95, %c0_96] : memref<4x16x128xbf16, #tpu.memory_space<vmem>>, vector<1x16x128xbf16>
      %175 = vector.shape_cast %174 : vector<1x16x128xbf16> to vector<16x128xbf16>
      %176 = vector.shape_cast %173 : vector<16x128xbf16> to vector<1x16x128xbf16>
      tpu.vector_store %arg18[%c0_94, %c0_95, %c0_96], %176 {strides = array<i32>} : memref<4x16x128xbf16, #tpu.memory_space<vmem>>, vector<1x16x128xbf16>,
      %177 = vector.extract_strided_slice %172 {offsets = [0, 0], sizes = [16, 128], strides = [1, 1]} : vector<64x128xbf16> to vector<16x128xbf16>
      %c0_97 = arith.constant 0 : index
      %c0_98 = arith.constant 0 : index
      %c0_99 = arith.constant 0 : index
      %178 = vector.load %arg19[%c0_97, %c0_98, %c0_99] : memref<4x16x128xbf16, #tpu.memory_space<vmem>>, vector<1x16x128xbf16>
      %179 = vector.shape_cast %178 : vector<1x16x128xbf16> to vector<16x128xbf16>
      %180 = vector.shape_cast %177 : vector<16x128xbf16> to vector<1x16x128xbf16>
      tpu.vector_store %arg19[%c0_97, %c0_98, %c0_99], %180 {strides = array<i32>} : memref<4x16x128xbf16, #tpu.memory_space<vmem>>, vector<1x16x128xbf16>,
      %181 = vector.extract_strided_slice %166 {offsets = [16, 0], sizes = [16, 128], strides = [1, 1]} : vector<64x128xbf16> to vector<16x128xbf16>
      %c1_100 = arith.constant 1 : index
      %c0_101 = arith.constant 0 : index
      %c0_102 = arith.constant 0 : index
      %182 = vector.load %arg18[%c1_100, %c0_101, %c0_102] : memref<4x16x128xbf16, #tpu.memory_space<vmem>>, vector<1x16x128xbf16>
      %183 = vector.shape_cast %182 : vector<1x16x128xbf16> to vector<16x128xbf16>
      %184 = vector.shape_cast %181 : vector<16x128xbf16> to vector<1x16x128xbf16>
      tpu.vector_store %arg18[%c1_100, %c0_101, %c0_102], %184 {strides = array<i32>} : memref<4x16x128xbf16, #tpu.memory_space<vmem>>, vector<1x16x128xbf16>,
      %185 = vector.extract_strided_slice %172 {offsets = [16, 0], sizes = [16, 128], strides = [1, 1]} : vector<64x128xbf16> to vector<16x128xbf16>
      %c1_103 = arith.constant 1 : index
      %c0_104 = arith.constant 0 : index
      %c0_105 = arith.constant 0 : index
      %186 = vector.load %arg19[%c1_103, %c0_104, %c0_105] : memref<4x16x128xbf16, #tpu.memory_space<vmem>>, vector<1x16x128xbf16>
      %187 = vector.shape_cast %186 : vector<1x16x128xbf16> to vector<16x128xbf16>
      %188 = vector.shape_cast %185 : vector<16x128xbf16> to vector<1x16x128xbf16>
      tpu.vector_store %arg19[%c1_103, %c0_104, %c0_105], %188 {strides = array<i32>} : memref<4x16x128xbf16, #tpu.memory_space<vmem>>, vector<1x16x128xbf16>,
      %189 = vector.extract_strided_slice %166 {offsets = [32, 0], sizes = [16, 128], strides = [1, 1]} : vector<64x128xbf16> to vector<16x128xbf16>
      %c2_106 = arith.constant 2 : index
      %c0_107 = arith.constant 0 : index
      %c0_108 = arith.constant 0 : index
      %190 = vector.load %arg18[%c2_106, %c0_107, %c0_108] : memref<4x16x128xbf16, #tpu.memory_space<vmem>>, vector<1x16x128xbf16>
      %191 = vector.shape_cast %190 : vector<1x16x128xbf16> to vector<16x128xbf16>
      %192 = vector.shape_cast %189 : vector<16x128xbf16> to vector<1x16x128xbf16>
      tpu.vector_store %arg18[%c2_106, %c0_107, %c0_108], %192 {strides = array<i32>} : memref<4x16x128xbf16, #tpu.memory_space<vmem>>, vector<1x16x128xbf16>,
      %193 = vector.extract_strided_slice %172 {offsets = [32, 0], sizes = [16, 128], strides = [1, 1]} : vector<64x128xbf16> to vector<16x128xbf16>
      %c2_109 = arith.constant 2 : index
      %c0_110 = arith.constant 0 : index
      %c0_111 = arith.constant 0 : index
      %194 = vector.load %arg19[%c2_109, %c0_110, %c0_111] : memref<4x16x128xbf16, #tpu.memory_space<vmem>>, vector<1x16x128xbf16>
      %195 = vector.shape_cast %194 : vector<1x16x128xbf16> to vector<16x128xbf16>
      %196 = vector.shape_cast %193 : vector<16x128xbf16> to vector<1x16x128xbf16>
      tpu.vector_store %arg19[%c2_109, %c0_110, %c0_111], %196 {strides = array<i32>} : memref<4x16x128xbf16, #tpu.memory_space<vmem>>, vector<1x16x128xbf16>,
      %197 = vector.extract_strided_slice %166 {offsets = [48, 0], sizes = [16, 128], strides = [1, 1]} : vector<64x128xbf16> to vector<16x128xbf16>
      %c3_112 = arith.constant 3 : index
      %c0_113 = arith.constant 0 : index
      %c0_114 = arith.constant 0 : index
      %198 = vector.load %arg18[%c3_112, %c0_113, %c0_114] : memref<4x16x128xbf16, #tpu.memory_space<vmem>>, vector<1x16x128xbf16>
      %199 = vector.shape_cast %198 : vector<1x16x128xbf16> to vector<16x128xbf16>
      %200 = vector.shape_cast %197 : vector<16x128xbf16> to vector<1x16x128xbf16>
      tpu.vector_store %arg18[%c3_112, %c0_113, %c0_114], %200 {strides = array<i32>} : memref<4x16x128xbf16, #tpu.memory_space<vmem>>, vector<1x16x128xbf16>,
      %201 = vector.extract_strided_slice %172 {offsets = [48, 0], sizes = [16, 128], strides = [1, 1]} : vector<64x128xbf16> to vector<16x128xbf16>
      %c3_115 = arith.constant 3 : index
      %c0_116 = arith.constant 0 : index
      %c0_117 = arith.constant 0 : index
      %202 = vector.load %arg19[%c3_115, %c0_116, %c0_117] : memref<4x16x128xbf16, #tpu.memory_space<vmem>>, vector<1x16x128xbf16>
      %203 = vector.shape_cast %202 : vector<1x16x128xbf16> to vector<16x128xbf16>
      %204 = vector.shape_cast %201 : vector<16x128xbf16> to vector<1x16x128xbf16>
      tpu.vector_store %arg19[%c3_115, %c0_116, %c0_117], %204 {strides = array<i32>} : memref<4x16x128xbf16, #tpu.memory_space<vmem>>, vector<1x16x128xbf16>,
    } else {
    }
    %c0_3 = arith.constant 0 : index
    %c0_4 = arith.constant 0 : index
    %c0_5 = arith.constant 0 : index
    %11 = vector.load %arg2[%c0_3, %c0_4, %c0_5] : memref<1x64x64xf32, #tpu.memory_space<vmem>>, vector<1x64x64xf32>
    %12 = vector.shape_cast %11 : vector<1x64x64xf32> to vector<64x64xf32>
    %cst = arith.constant dense<0.000000e+00> : vector<64xf32>
    %13 = vector.multi_reduction <add>, %12, %cst [1] : vector<64x64xf32> to vector<64xf32>
    %14 = vector.shape_cast %13 : vector<64xf32> to vector<64x1xf32>
    %cst_6 = arith.constant 6.400000e+01 : f32
    %15 = vector.broadcast %cst_6 : f32 to vector<64x1xf32>
    %16 = arith.divf %14, %15 : vector<64x1xf32>
    %17 = vector.broadcast %16 : vector<64x1xf32> to vector<64x64xf32>
    %18 = arith.subf %12, %17 : vector<64x64xf32>
    %19 = arith.mulf %18, %18 : vector<64x64xf32>
    %cst_7 = arith.constant dense<0.000000e+00> : vector<64xf32>
    %20 = vector.multi_reduction <add>, %19, %cst_7 [1] : vector<64x64xf32> to vector<64xf32>
    %21 = vector.shape_cast %20 : vector<64xf32> to vector<64x1xf32>
    %cst_8 = arith.constant 6.400000e+01 : f32
    %22 = vector.broadcast %cst_8 : f32 to vector<64x1xf32>
    %23 = arith.divf %21, %22 : vector<64x1xf32>
    %cst_9 = arith.constant 9.99999997E-7 : f32
    %24 = vector.broadcast %cst_9 : f32 to vector<64x1xf32>
    %25 = arith.addf %23, %24 : vector<64x1xf32>
    %26 = math.rsqrt %25 : vector<64x1xf32>
    %27 = vector.broadcast %26 : vector<64x1xf32> to vector<64x64xf32>
    %28 = arith.mulf %18, %27 : vector<64x64xf32>
    %cst_10 = arith.constant 1.000000e+00 : f32
    %29 = vector.broadcast %cst_10 : f32 to vector<1x64xf32>
    %30 = arith.addf %29, %3 : vector<1x64xf32>
    %31 = vector.broadcast %30 : vector<1x64xf32> to vector<64x64xf32>
    %32 = arith.mulf %28, %31 : vector<64x64xf32>
    %33 = vector.broadcast %2 : vector<1x64xf32> to vector<64x64xf32>
    %34 = arith.addf %32, %33 : vector<64x64xf32>
    %35 = arith.truncf %34 : vector<64x64xf32> to vector<64x64xbf16>
    %c0_11 = arith.constant 0 : index
    %c0_12 = arith.constant 0 : index
    %36 = vector.load %arg5[%c0_11, %c0_12] : memref<64x64xbf16, #tpu.memory_space<vmem>>, vector<64x64xbf16>
    %cst_13 = arith.constant dense<0.000000e+00> : vector<64x64xf32>
    %37 = tpu.matmul %35, %36, %cst_13 {dimension_numbers = #tpu.dot_dimension_numbers<[1], [0], [0], [1], [0, 0, 1, 1], [], []>} : vector<64x64xbf16>, vector<64x64xbf16>, vector<64x64xf32> -> vector<64x64xf32>
    %c0_14 = arith.constant 0 : index
    %c0_15 = arith.constant 0 : index
    %38 = vector.load %arg6[%c0_14, %c0_15] : memref<1x64xf32, #tpu.memory_space<vmem>>, vector<1x64xf32>
    %39 = vector.broadcast %38 : vector<1x64xf32> to vector<64x64xf32>
    %40 = arith.addf %37, %39 : vector<64x64xf32>
    %cst_16 = arith.constant 2.500000e-01 : f32
    %41 = vector.broadcast %cst_16 : f32 to vector<64x64xf32>
    %42 = arith.mulf %40, %41 : vector<64x64xf32>
    %43 = arith.truncf %42 : vector<64x64xf32> to vector<64x64xbf16>
    %44 = vector.extract_strided_slice %43 {offsets = [0, 0], sizes = [64, 16], strides = [1, 1]} : vector<64x64xbf16> to vector<64x16xbf16>
    %c0_17 = arith.constant 0 : index
    %c0_18 = arith.constant 0 : index
    %c0_19 = arith.constant 0 : index
    %45 = vector.load %arg20[%c0_17, %c0_18, %c0_19] : memref<4x64x16xbf16, #tpu.memory_space<vmem>>, vector<1x64x16xbf16>
    %46 = vector.shape_cast %45 : vector<1x64x16xbf16> to vector<64x16xbf16>
    %47 = vector.shape_cast %44 : vector<64x16xbf16> to vector<1x64x16xbf16>
    tpu.vector_store %arg20[%c0_17, %c0_18, %c0_19], %47 {strides = array<i32>} : memref<4x64x16xbf16, #tpu.memory_space<vmem>>, vector<1x64x16xbf16>,
    %48 = vector.extract_strided_slice %43 {offsets = [0, 16], sizes = [64, 16], strides = [1, 1]} : vector<64x64xbf16> to vector<64x16xbf16>
    %c1 = arith.constant 1 : index
    %c0_20 = arith.constant 0 : index
    %c0_21 = arith.constant 0 : index
    %49 = vector.load %arg20[%c1, %c0_20, %c0_21] : memref<4x64x16xbf16, #tpu.memory_space<vmem>>, vector<1x64x16xbf16>
    %50 = vector.shape_cast %49 : vector<1x64x16xbf16> to vector<64x16xbf16>
    %51 = vector.shape_cast %48 : vector<64x16xbf16> to vector<1x64x16xbf16>
    tpu.vector_store %arg20[%c1, %c0_20, %c0_21], %51 {strides = array<i32>} : memref<4x64x16xbf16, #tpu.memory_space<vmem>>, vector<1x64x16xbf16>,
    %52 = vector.extract_strided_slice %43 {offsets = [0, 32], sizes = [64, 16], strides = [1, 1]} : vector<64x64xbf16> to vector<64x16xbf16>
    %c2 = arith.constant 2 : index
    %c0_22 = arith.constant 0 : index
    %c0_23 = arith.constant 0 : index
    %53 = vector.load %arg20[%c2, %c0_22, %c0_23] : memref<4x64x16xbf16, #tpu.memory_space<vmem>>, vector<1x64x16xbf16>
    %54 = vector.shape_cast %53 : vector<1x64x16xbf16> to vector<64x16xbf16>
    %55 = vector.shape_cast %52 : vector<64x16xbf16> to vector<1x64x16xbf16>
    tpu.vector_store %arg20[%c2, %c0_22, %c0_23], %55 {strides = array<i32>} : memref<4x64x16xbf16, #tpu.memory_space<vmem>>, vector<1x64x16xbf16>,
    %56 = vector.extract_strided_slice %43 {offsets = [0, 48], sizes = [64, 16], strides = [1, 1]} : vector<64x64xbf16> to vector<64x16xbf16>
    %c3 = arith.constant 3 : index
    %c0_24 = arith.constant 0 : index
    %c0_25 = arith.constant 0 : index
    %57 = vector.load %arg20[%c3, %c0_24, %c0_25] : memref<4x64x16xbf16, #tpu.memory_space<vmem>>, vector<1x64x16xbf16>
    %58 = vector.shape_cast %57 : vector<1x64x16xbf16> to vector<64x16xbf16>
    %59 = vector.shape_cast %56 : vector<64x16xbf16> to vector<1x64x16xbf16>
    tpu.vector_store %arg20[%c3, %c0_24, %c0_25], %59 {strides = array<i32>} : memref<4x64x16xbf16, #tpu.memory_space<vmem>>, vector<1x64x16xbf16>,
    %c0_i32_26 = arith.constant 0 : i32
    %c4_i32 = arith.constant 4 : i32
    %60 = arith.addi %c0_i32_26, %c4_i32 : i32
    %c1_i32 = arith.constant 1 : i32
    scf.for %arg23 = %c0_i32_26 to %60 step %c1_i32  : i32 {
      %135 = arith.index_cast %arg23 : i32 to index
      %c0_75 = arith.constant 0 : index
      %c0_76 = arith.constant 0 : index
      %136 = vector.load %arg20[%135, %c0_75, %c0_76] : memref<4x64x16xbf16, #tpu.memory_space<vmem>>, vector<1x64x16xbf16>
      %137 = vector.shape_cast %136 : vector<1x64x16xbf16> to vector<64x16xbf16>
      %138 = arith.index_cast %arg23 : i32 to index
      %c0_77 = arith.constant 0 : index
      %c0_78 = arith.constant 0 : index
      %139 = vector.load %arg18[%138, %c0_77, %c0_78] : memref<4x16x128xbf16, #tpu.memory_space<vmem>>, vector<1x16x128xbf16>
      %140 = vector.shape_cast %139 : vector<1x16x128xbf16> to vector<16x128xbf16>
      %cst_79 = arith.constant dense<0.000000e+00> : vector<64x128xf32>
      %141 = tpu.matmul %137, %140, %cst_79 {dimension_numbers = #tpu.dot_dimension_numbers<[1], [0], [0], [1], [0, 0, 1, 1], [], []>} : vector<64x16xbf16>, vector<16x128xbf16>, vector<64x128xf32> -> vector<64x128xf32>
      %cst_80 = arith.constant dense<0xFF800000> : vector<64xf32>
      %142 = vector.multi_reduction <maximumf>, %141, %cst_80 [1] : vector<64x128xf32> to vector<64xf32>
      %143 = vector.shape_cast %142 : vector<64xf32> to vector<64x1xf32>
      %144 = vector.broadcast %143 : vector<64x1xf32> to vector<64x128xf32>
      %145 = arith.subf %141, %144 : vector<64x128xf32>
      %146 = math.exp %145 : vector<64x128xf32>
      %cst_81 = arith.constant dense<0.000000e+00> : vector<64xf32>
      %147 = vector.multi_reduction <add>, %146, %cst_81 [1] : vector<64x128xf32> to vector<64xf32>
      %148 = vector.shape_cast %147 : vector<64xf32> to vector<64x1xf32>
      %149 = arith.truncf %146 : vector<64x128xf32> to vector<64x128xbf16>
      %150 = arith.index_cast %arg23 : i32 to index
      %c0_82 = arith.constant 0 : index
      %c0_83 = arith.constant 0 : index
      %151 = vector.load %arg19[%150, %c0_82, %c0_83] : memref<4x16x128xbf16, #tpu.memory_space<vmem>>, vector<1x16x128xbf16>
      %152 = vector.shape_cast %151 : vector<1x16x128xbf16> to vector<16x128xbf16>
      %cst_84 = arith.constant dense<0.000000e+00> : vector<64x16xf32>
      %153 = tpu.matmul %149, %152, %cst_84 {dimension_numbers = #tpu.dot_dimension_numbers<[1], [1], [0], [0], [0, 0, 1, 0], [], []>} : vector<64x128xbf16>, vector<16x128xbf16>, vector<64x16xf32> -> vector<64x16xf32>
      %154 = tpu.reciprocal %148 {approx = true} : vector<64x1xf32> -> vector<64x1xf32>
      %155 = vector.broadcast %154 : vector<64x1xf32> to vector<64x16xf32>
      %156 = arith.mulf %153, %155 : vector<64x16xf32>
      %157 = arith.truncf %156 : vector<64x16xf32> to vector<64x16xbf16>
      %158 = arith.index_cast %arg23 : i32 to index
      %c0_85 = arith.constant 0 : index
      %c0_86 = arith.constant 0 : index
      %159 = vector.load %arg21[%158, %c0_85, %c0_86] : memref<4x64x16xbf16, #tpu.memory_space<vmem>>, vector<1x64x16xbf16>
      %160 = vector.shape_cast %159 : vector<1x64x16xbf16> to vector<64x16xbf16>
      %161 = vector.shape_cast %157 : vector<64x16xbf16> to vector<1x64x16xbf16>
      tpu.vector_store %arg21[%158, %c0_85, %c0_86], %161 {strides = array<i32>} : memref<4x64x16xbf16, #tpu.memory_space<vmem>>, vector<1x64x16xbf16>,
    }
    %c4_i32_27 = arith.constant 4 : i32
    %c0_28 = arith.constant 0 : index
    %c0_29 = arith.constant 0 : index
    %c0_30 = arith.constant 0 : index
    %61 = vector.load %arg21[%c0_28, %c0_29, %c0_30] : memref<4x64x16xbf16, #tpu.memory_space<vmem>>, vector<1x64x16xbf16>
    %62 = vector.shape_cast %61 : vector<1x64x16xbf16> to vector<64x16xbf16>
    %c0_31 = arith.constant 0 : index
    %c0_32 = arith.constant 0 : index
    %63 = vector.load %arg22[%c0_31, %c0_32] : memref<64x64xbf16, #tpu.memory_space<vmem>>, vector<64x16xbf16>
    tpu.vector_store %arg22[%c0_31, %c0_32], %62 {strides = array<i32>} : memref<64x64xbf16, #tpu.memory_space<vmem>>, vector<64x16xbf16>,
    %c1_33 = arith.constant 1 : index
    %c0_34 = arith.constant 0 : index
    %c0_35 = arith.constant 0 : index
    %64 = vector.load %arg21[%c1_33, %c0_34, %c0_35] : memref<4x64x16xbf16, #tpu.memory_space<vmem>>, vector<1x64x16xbf16>
    %65 = vector.shape_cast %64 : vector<1x64x16xbf16> to vector<64x16xbf16>
    %c0_36 = arith.constant 0 : index
    %c16 = arith.constant 16 : index
    %66 = vector.load %arg22[%c0_36, %c16] : memref<64x64xbf16, #tpu.memory_space<vmem>>, vector<64x16xbf16>
    tpu.vector_store %arg22[%c0_36, %c16], %65 {strides = array<i32>} : memref<64x64xbf16, #tpu.memory_space<vmem>>, vector<64x16xbf16>,
    %c2_37 = arith.constant 2 : index
    %c0_38 = arith.constant 0 : index
    %c0_39 = arith.constant 0 : index
    %67 = vector.load %arg21[%c2_37, %c0_38, %c0_39] : memref<4x64x16xbf16, #tpu.memory_space<vmem>>, vector<1x64x16xbf16>
    %68 = vector.shape_cast %67 : vector<1x64x16xbf16> to vector<64x16xbf16>
    %c0_40 = arith.constant 0 : index
    %c32 = arith.constant 32 : index
    %69 = vector.load %arg22[%c0_40, %c32] : memref<64x64xbf16, #tpu.memory_space<vmem>>, vector<64x16xbf16>
    tpu.vector_store %arg22[%c0_40, %c32], %68 {strides = array<i32>} : memref<64x64xbf16, #tpu.memory_space<vmem>>, vector<64x16xbf16>,
    %c3_41 = arith.constant 3 : index
    %c0_42 = arith.constant 0 : index
    %c0_43 = arith.constant 0 : index
    %70 = vector.load %arg21[%c3_41, %c0_42, %c0_43] : memref<4x64x16xbf16, #tpu.memory_space<vmem>>, vector<1x64x16xbf16>
    %71 = vector.shape_cast %70 : vector<1x64x16xbf16> to vector<64x16xbf16>
    %c0_44 = arith.constant 0 : index
    %c48 = arith.constant 48 : index
    %72 = vector.load %arg22[%c0_44, %c48] : memref<64x64xbf16, #tpu.memory_space<vmem>>, vector<64x16xbf16>
    tpu.vector_store %arg22[%c0_44, %c48], %71 {strides = array<i32>} : memref<64x64xbf16, #tpu.memory_space<vmem>>, vector<64x16xbf16>,
    %c0_45 = arith.constant 0 : index
    %c0_46 = arith.constant 0 : index
    %73 = vector.load %arg22[%c0_45, %c0_46] : memref<64x64xbf16, #tpu.memory_space<vmem>>, vector<64x64xbf16>
    %c0_47 = arith.constant 0 : index
    %c0_48 = arith.constant 0 : index
    %74 = vector.load %arg11[%c0_47, %c0_48] : memref<64x64xbf16, #tpu.memory_space<vmem>>, vector<64x64xbf16>
    %cst_49 = arith.constant dense<0.000000e+00> : vector<64x64xf32>
    %75 = tpu.matmul %73, %74, %cst_49 {dimension_numbers = #tpu.dot_dimension_numbers<[1], [0], [0], [1], [0, 0, 1, 1], [], []>} : vector<64x64xbf16>, vector<64x64xbf16>, vector<64x64xf32> -> vector<64x64xf32>
    %c0_50 = arith.constant 0 : index
    %c0_51 = arith.constant 0 : index
    %76 = vector.load %arg12[%c0_50, %c0_51] : memref<1x64xf32, #tpu.memory_space<vmem>>, vector<1x64xf32>
    %77 = vector.broadcast %76 : vector<1x64xf32> to vector<64x64xf32>
    %78 = arith.addf %75, %77 : vector<64x64xf32>
    %79 = vector.broadcast %4 : vector<1x64xf32> to vector<64x64xf32>
    %80 = arith.mulf %78, %79 : vector<64x64xf32>
    %81 = arith.addf %12, %80 : vector<64x64xf32>
    %cst_52 = arith.constant dense<0.000000e+00> : vector<64xf32>
    %82 = vector.multi_reduction <add>, %81, %cst_52 [1] : vector<64x64xf32> to vector<64xf32>
    %83 = vector.shape_cast %82 : vector<64xf32> to vector<64x1xf32>
    %cst_53 = arith.constant 6.400000e+01 : f32
    %84 = vector.broadcast %cst_53 : f32 to vector<64x1xf32>
    %85 = arith.divf %83, %84 : vector<64x1xf32>
    %86 = vector.broadcast %85 : vector<64x1xf32> to vector<64x64xf32>
    %87 = arith.subf %81, %86 : vector<64x64xf32>
    %88 = arith.mulf %87, %87 : vector<64x64xf32>
    %cst_54 = arith.constant dense<0.000000e+00> : vector<64xf32>
    %89 = vector.multi_reduction <add>, %88, %cst_54 [1] : vector<64x64xf32> to vector<64xf32>
    %90 = vector.shape_cast %89 : vector<64xf32> to vector<64x1xf32>
    %cst_55 = arith.constant 6.400000e+01 : f32
    %91 = vector.broadcast %cst_55 : f32 to vector<64x1xf32>
    %92 = arith.divf %90, %91 : vector<64x1xf32>
    %cst_56 = arith.constant 9.99999997E-7 : f32
    %93 = vector.broadcast %cst_56 : f32 to vector<64x1xf32>
    %94 = arith.addf %92, %93 : vector<64x1xf32>
    %95 = math.rsqrt %94 : vector<64x1xf32>
    %96 = vector.broadcast %95 : vector<64x1xf32> to vector<64x64xf32>
    %97 = arith.mulf %87, %96 : vector<64x64xf32>
    %cst_57 = arith.constant 1.000000e+00 : f32
    %98 = vector.broadcast %cst_57 : f32 to vector<1x64xf32>
    %99 = arith.addf %98, %6 : vector<1x64xf32>
    %100 = vector.broadcast %99 : vector<1x64xf32> to vector<64x64xf32>
    %101 = arith.mulf %97, %100 : vector<64x64xf32>
    %102 = vector.broadcast %5 : vector<1x64xf32> to vector<64x64xf32>
    %103 = arith.addf %101, %102 : vector<64x64xf32>
    %104 = arith.truncf %103 : vector<64x64xf32> to vector<64x64xbf16>
    %c0_58 = arith.constant 0 : index
    %c0_59 = arith.constant 0 : index
    %105 = vector.load %arg13[%c0_58, %c0_59] : memref<64x256xbf16, #tpu.memory_space<vmem>>, vector<64x256xbf16>
    %cst_60 = arith.constant dense<0.000000e+00> : vector<64x256xf32>
    %106 = tpu.matmul %104, %105, %cst_60 {dimension_numbers = #tpu.dot_dimension_numbers<[1], [0], [0], [1], [0, 0, 1, 1], [], []>} : vector<64x64xbf16>, vector<64x256xbf16>, vector<64x256xf32> -> vector<64x256xf32>
    %c0_61 = arith.constant 0 : index
    %c0_62 = arith.constant 0 : index
    %107 = vector.load %arg14[%c0_61, %c0_62] : memref<1x256xf32, #tpu.memory_space<vmem>>, vector<1x256xf32>
    %108 = vector.broadcast %107 : vector<1x256xf32> to vector<64x256xf32>
    %109 = arith.addf %106, %108 : vector<64x256xf32>
    %110 = arith.mulf %109, %109 : vector<64x256xf32>
    %111 = arith.mulf %109, %110 : vector<64x256xf32>
    %cst_63 = arith.constant 4.471500e-02 : f32
    %112 = vector.broadcast %cst_63 : f32 to vector<64x256xf32>
    %113 = arith.mulf %112, %111 : vector<64x256xf32>
    %114 = arith.addf %109, %113 : vector<64x256xf32>
    %cst_64 = arith.constant 0.797884583 : f32
    %115 = vector.broadcast %cst_64 : f32 to vector<64x256xf32>
    %116 = arith.mulf %115, %114 : vector<64x256xf32>
    %117 = math.tanh %116 : vector<64x256xf32>
    %cst_65 = arith.constant 1.000000e+00 : f32
    %118 = vector.broadcast %cst_65 : f32 to vector<64x256xf32>
    %119 = arith.addf %118, %117 : vector<64x256xf32>
    %cst_66 = arith.constant 5.000000e-01 : f32
    %120 = vector.broadcast %cst_66 : f32 to vector<64x256xf32>
    %121 = arith.mulf %120, %119 : vector<64x256xf32>
    %122 = arith.mulf %109, %121 : vector<64x256xf32>
    %123 = arith.truncf %122 : vector<64x256xf32> to vector<64x256xbf16>
    %c0_67 = arith.constant 0 : index
    %c0_68 = arith.constant 0 : index
    %124 = vector.load %arg15[%c0_67, %c0_68] : memref<256x64xbf16, #tpu.memory_space<vmem>>, vector<256x64xbf16>
    %cst_69 = arith.constant dense<0.000000e+00> : vector<64x64xf32>
    %125 = tpu.matmul %123, %124, %cst_69 {dimension_numbers = #tpu.dot_dimension_numbers<[1], [0], [0], [1], [0, 0, 1, 1], [], []>} : vector<64x256xbf16>, vector<256x64xbf16>, vector<64x64xf32> -> vector<64x64xf32>
    %c0_70 = arith.constant 0 : index
    %c0_71 = arith.constant 0 : index
    %126 = vector.load %arg16[%c0_70, %c0_71] : memref<1x64xf32, #tpu.memory_space<vmem>>, vector<1x64xf32>
    %127 = vector.broadcast %126 : vector<1x64xf32> to vector<64x64xf32>
    %128 = arith.addf %125, %127 : vector<64x64xf32>
    %129 = vector.broadcast %7 : vector<1x64xf32> to vector<64x64xf32>
    %130 = arith.mulf %128, %129 : vector<64x64xf32>
    %131 = arith.addf %81, %130 : vector<64x64xf32>
    %c0_72 = arith.constant 0 : index
    %c0_73 = arith.constant 0 : index
    %c0_74 = arith.constant 0 : index
    %132 = vector.load %arg17[%c0_72, %c0_73, %c0_74] : memref<1x64x64xf32, #tpu.memory_space<vmem>>, vector<1x64x64xf32>
    %133 = vector.shape_cast %132 : vector<1x64x64xf32> to vector<64x64xf32>
    %134 = vector.shape_cast %131 : vector<64x64xf32> to vector<1x64x64xf32>
    tpu.vector_store %arg17[%c0_72, %c0_73, %c0_74], %134 {strides = array<i32>} : memref<1x64x64xf32, #tpu.memory_space<vmem>>, vector<1x64x64xf32>,
    return
  }
  func.func @transform_0(%arg0: i32, %arg1: i32) -> (i32, i32, i32) {
    %c0_i32 = arith.constant 0 : i32
    %c0_i32_0 = arith.constant 0 : i32
    return %arg0, %arg1, %c0_i32 : i32, i32, i32
  }
  func.func @transform_1(%arg0: i32, %arg1: i32) -> (i32, i32, i32) {
    %c0_i32 = arith.constant 0 : i32
    %c0_i32_0 = arith.constant 0 : i32
    %c0_i32_1 = arith.constant 0 : i32
    return %arg0, %c0_i32, %c0_i32_0 : i32, i32, i32
  }
  func.func @transform_2(%arg0: i32, %arg1: i32) -> (i32, i32, i32) {
    %c0_i32 = arith.constant 0 : i32
    %c0_i32_0 = arith.constant 0 : i32
    %c0_i32_1 = arith.constant 0 : i32
    return %arg0, %c0_i32, %c0_i32_0 : i32, i32, i32
  }
  func.func @transform_3(%arg0: i32, %arg1: i32) -> (i32, i32) {
    %c0_i32 = arith.constant 0 : i32
    %c0_i32_0 = arith.constant 0 : i32
    %c0_i32_1 = arith.constant 0 : i32
    return %c0_i32, %c0_i32_0 : i32, i32
  }
  func.func @transform_4(%arg0: i32, %arg1: i32) -> (i32, i32) {
    %c0_i32 = arith.constant 0 : i32
    %c0_i32_0 = arith.constant 0 : i32
    %c0_i32_1 = arith.constant 0 : i32
    return %c0_i32, %c0_i32_0 : i32, i32
  }
  func.func @transform_5(%arg0: i32, %arg1: i32) -> (i32, i32) {
    %c0_i32 = arith.constant 0 : i32
    %c0_i32_0 = arith.constant 0 : i32
    %c0_i32_1 = arith.constant 0 : i32
    return %c0_i32, %c0_i32_0 : i32, i32
  }
  func.func @transform_6(%arg0: i32, %arg1: i32) -> (i32, i32) {
    %c0_i32 = arith.constant 0 : i32
    %c0_i32_0 = arith.constant 0 : i32
    %c0_i32_1 = arith.constant 0 : i32
    return %c0_i32, %c0_i32_0 : i32, i32
  }
  func.func @transform_7(%arg0: i32, %arg1: i32) -> (i32, i32) {
    %c0_i32 = arith.constant 0 : i32
    %c0_i32_0 = arith.constant 0 : i32
    %c0_i32_1 = arith.constant 0 : i32
    return %c0_i32, %c0_i32_0 : i32, i32
  }
  func.func @transform_8(%arg0: i32, %arg1: i32) -> (i32, i32) {
    %c0_i32 = arith.constant 0 : i32
    %c0_i32_0 = arith.constant 0 : i32
    %c0_i32_1 = arith.constant 0 : i32
    return %c0_i32, %c0_i32_0 : i32, i32
  }
  func.func @transform_9(%arg0: i32, %arg1: i32) -> (i32, i32) {
    %c0_i32 = arith.constant 0 : i32
    %c0_i32_0 = arith.constant 0 : i32
    %c0_i32_1 = arith.constant 0 : i32
    return %c0_i32, %c0_i32_0 : i32, i32
  }
  func.func @transform_10(%arg0: i32, %arg1: i32) -> (i32, i32) {
    %c0_i32 = arith.constant 0 : i32
    %c0_i32_0 = arith.constant 0 : i32
    %c0_i32_1 = arith.constant 0 : i32
    return %c0_i32, %c0_i32_0 : i32, i32
  }
  func.func @transform_11(%arg0: i32, %arg1: i32) -> (i32, i32) {
    %c0_i32 = arith.constant 0 : i32
    %c0_i32_0 = arith.constant 0 : i32
    %c0_i32_1 = arith.constant 0 : i32
    return %c0_i32, %c0_i32_0 : i32, i32
  }
  func.func @transform_12(%arg0: i32, %arg1: i32) -> (i32, i32) {
    %c0_i32 = arith.constant 0 : i32
    %c0_i32_0 = arith.constant 0 : i32
    %c0_i32_1 = arith.constant 0 : i32
    return %c0_i32, %c0_i32_0 : i32, i32
  }
  func.func @transform_13(%arg0: i32, %arg1: i32) -> (i32, i32) {
    %c0_i32 = arith.constant 0 : i32
    %c0_i32_0 = arith.constant 0 : i32
    %c0_i32_1 = arith.constant 0 : i32
    return %c0_i32, %c0_i32_0 : i32, i32
  }
  func.func @transform_14(%arg0: i32, %arg1: i32) -> (i32, i32) {
    %c0_i32 = arith.constant 0 : i32
    %c0_i32_0 = arith.constant 0 : i32
    %c0_i32_1 = arith.constant 0 : i32
    return %c0_i32, %c0_i32_0 : i32, i32
  }
  func.func @transform_15(%arg0: i32, %arg1: i32) -> (i32, i32, i32) {
    %c0_i32 = arith.constant 0 : i32
    %c0_i32_0 = arith.constant 0 : i32
    return %arg0, %arg1, %c0_i32 : i32, i32, i32
  }
}

</mosaic_0001>

<llo_original>
// kernel: tpu_custom_call.1
$region0: #{tpu_custom_call.1}
  #allocation0 [shape = 'u32[]', space=smem, size = 0x4, offset = 0x4, fixed_abs, tag = 'smem constant byte address 0x4 - core index']
  #allocation1 [shape = 'u32[144,128]{1,0:T(1,128)}', space=vmem, size = 0x12000, scoped, tag = 'internal scratch']
  #allocation2 [shape = 'bf16[4,16,128]{2,1,0:T(16,128)(2,1)}', space=vmem, size = 0x4000, scoped, tag = 'scratch operand']
  #allocation3 [shape = 'bf16[4,16,128]{2,1,0:T(16,128)(2,1)}', space=vmem, size = 0x4000, scoped, tag = 'scratch operand']
  #allocation4 [shape = 'bf16[4,64,16]{2,1,0:T(16,128)(2,1)}', space=vmem, size = 0x10000, scoped, tag = 'scratch operand']
  #allocation5 [shape = 'bf16[4,64,16]{2,1,0:T(16,128)(2,1)}', space=vmem, size = 0x10000, scoped, tag = 'scratch operand']
  #allocation6 [shape = 'bf16[64,64]{1,0:T(16,128)(2,1)}', space=vmem, size = 0x4000, scoped, tag = 'scratch operand']
  %s0 = inlined_call_operand.vmem [shape: f32[2,128,64], index: 0, kind: input, shape index: {}]
  %s1 = inlined_call_operand.vmem [shape: bf16[2,128,64], index: 1, kind: input, shape index: {}]
  %s2 = inlined_call_operand.vmem [shape: f32[2,6,64], index: 2, kind: input, shape index: {}]
  %s3 = inlined_call_operand.vmem [shape: bf16[64,64], index: 3, kind: input, shape index: {}]
  %s4 = inlined_call_operand.vmem [shape: f32[1,64], index: 4, kind: input, shape index: {}]
  %s5 = inlined_call_operand.vmem [shape: bf16[64,64], index: 5, kind: input, shape index: {}]
  %s6 = inlined_call_operand.vmem [shape: f32[64,1], index: 6, kind: input, shape index: {}]
  %s7 = inlined_call_operand.vmem [shape: bf16[64,64], index: 7, kind: input, shape index: {}]
  %s8 = inlined_call_operand.vmem [shape: f32[64,1], index: 8, kind: input, shape index: {}]
  %s9 = inlined_call_operand.vmem [shape: bf16[64,64], index: 9, kind: input, shape index: {}]
  %s10 = inlined_call_operand.vmem [shape: f32[1,64], index: 10, kind: input, shape index: {}]
  %s11 = inlined_call_operand.vmem [shape: bf16[64,256], index: 11, kind: input, shape index: {}]
  %s12 = inlined_call_operand.vmem [shape: f32[1,256], index: 12, kind: input, shape index: {}]
  %s13 = inlined_call_operand.vmem [shape: bf16[256,64], index: 13, kind: input, shape index: {}]
  %s14 = inlined_call_operand.vmem [shape: f32[1,64], index: 14, kind: input, shape index: {}]
  %s15 = inlined_call_operand.vmem [shape: f32[2,128,64], index: 15, kind: output, shape index: {}]
  %s16 = sld [smem:[#allocation0]]
  $region104: #{tpu_custom_call.1} parent=0
    _
  %s18 = ssub.s32 1, %s16
  %s19 = scalar_select 0, %s18, %s16
  loop: start=0, step=1, limit=6
  $region2: #{tpu_custom_call.1} parent=0 // loop_pre_header
    _
  $region3: #{tpu_custom_call.1} parent=0 // loop_header
    %s21 = sphi 0, %s25
    %p22 = scmp.ge.s32.totalorder %s21, 6
    %s28 = sphi 0, %s40
    %s29 = sphi 0, %s36
    %s30 = sphi 0, %s28
    %s31 = sphi 0, %s29
    %s32 = sphi 0, %s30
    %s33 = sphi 0, %s31
    %s45 = sphi 0, %s47
    %s48 = sphi 0, %s45
    %s49 = sphi 0, %s48
    %s65 = sphi 0, %s49
    %s71 = sphi 0, %s73
    %s74 = sphi 0, %s71
    %s75 = sphi 0, %s74
    %s91 = sphi 0, %s75
    %s97 = sphi 0, %s99
    %s100 = sphi 0, %s97
    %s101 = sphi 0, %s100
    %s117 = sphi 0, %s101
    %s121 = sphi 0, %s121
    %s123 = sphi 0, %s121
    %s124 = sphi 0, %s123
    %s138 = sphi 0, %s124
    %s142 = sphi 0, %s142
    %s144 = sphi 0, %s142
    %s145 = sphi 0, %s144
    %s159 = sphi 0, %s145
    %s163 = sphi 0, %s163
    %s165 = sphi 0, %s163
    %s166 = sphi 0, %s165
    %s180 = sphi 0, %s166
    %s184 = sphi 0, %s184
    %s186 = sphi 0, %s184
    %s187 = sphi 0, %s186
    %s201 = sphi 0, %s187
    %s205 = sphi 0, %s205
    %s207 = sphi 0, %s205
    %s208 = sphi 0, %s207
    %s222 = sphi 0, %s208
    %s226 = sphi 0, %s226
    %s228 = sphi 0, %s226
    %s229 = sphi 0, %s228
    %s243 = sphi 0, %s229
    %s247 = sphi 0, %s247
    %s249 = sphi 0, %s247
    %s250 = sphi 0, %s249
    %s264 = sphi 0, %s250
    %s268 = sphi 0, %s268
    %s270 = sphi 0, %s268
    %s271 = sphi 0, %s270
    %s285 = sphi 0, %s271
    %s289 = sphi 0, %s289
    %s291 = sphi 0, %s289
    %s292 = sphi 0, %s291
    %s306 = sphi 0, %s292
    %s310 = sphi 0, %s310
    %s312 = sphi 0, %s310
    %s313 = sphi 0, %s312
    %s327 = sphi 0, %s313
    %s331 = sphi 0, %s331
    %s333 = sphi 0, %s331
    %s334 = sphi 0, %s333
    %s348 = sphi 0, %s334
    %s352 = sphi 0, %s352
    %s354 = sphi 0, %s352
    %s355 = sphi 0, %s354
    %s369 = sphi 0, %s355
    %s377 = sphi 0, %s379
    %s380 = sphi 0, %s377
    %s381 = sphi 0, %s380
    %s397 = sphi 0, %s381
  $region4: #{tpu_custom_call.1} parent=0 // loop_header_branch
    %24 = sbr.rel (%p22) target = $region8
  $region5: #{tpu_custom_call.1} parent=0 // loop_body
    %s26 = ssub.s32 %s21, 1
    %s27 = ssub.s32 %s21, 2
    %s34 = sadd.s32 1, %s29
    %p35 = scmp.ge.s32.totalorder %s34, 2
    %s36 = scalar_select %p35, 0, %s34
    %s37 = sadd.s32 1, %s28
    %s38 = scalar_select %p35, %s37, %s28
    %p39 = scmp.ge.s32.totalorder %s38, 2
    %s40 = scalar_select %p39, 0, %s38
    %s41 = ssub.s32 %s28, %s40
    %s42 = ssub.s32 %s29, %s36
    %s43 = sor.u32 %s41, %s42
    %p44 = scmp.eq.s32.totalorder %s43, 0
    %s46 = sadd.s32 %s45, 1
    %s47 = scalar_select %p44, %s45, %s46
    %p50 = pneg %p44
    %p51 = scmp.eq.s32.totalorder %s21, 3
    %p52 = por %p50, %p51
    %p53 = scmp.ne.s32.totalorder %s45, %s48
    %p54 = scmp.eq.s32.totalorder %s21, 0
    %p55 = por %p53, %p54
    %p56 = scmp.ne.s32.totalorder %s45, %s48
    %p57 = scmp.eq.s32.totalorder %s26, 3
    %p58 = por %p56, %p57
    %p59 = scmp.ne.s32.totalorder %s48, %s49
    %p60 = scmp.eq.s32.totalorder %s26, 0
    %p61 = por %p59, %p60
    %p62 = scmp.ne.s32.totalorder %s48, %s49
    %p63 = scmp.eq.s32.totalorder %s27, 3
    %p64 = por %p62, %p63
    %p66 = scmp.ne.s32.totalorder %s49, %s65
    %p67 = scmp.eq.s32.totalorder %s27, 0
    %p68 = por %p66, %p67
    %s69 = ssub.s32 %s28, %s40
    %p70 = scmp.eq.s32.totalorder %s69, 0
    %s72 = sadd.s32 %s71, 1
    %s73 = scalar_select %p70, %s71, %s72
    %p76 = pneg %p70
    %p77 = scmp.eq.s32.totalorder %s21, 3
    %p78 = por %p76, %p77
    %p79 = scmp.ne.s32.totalorder %s71, %s74
    %p80 = scmp.eq.s32.totalorder %s21, 0
    %p81 = por %p79, %p80
    %p82 = scmp.ne.s32.totalorder %s71, %s74
    %p83 = scmp.eq.s32.totalorder %s26, 3
    %p84 = por %p82, %p83
    %p85 = scmp.ne.s32.totalorder %s74, %s75
    %p86 = scmp.eq.s32.totalorder %s26, 0
    %p87 = por %p85, %p86
    %p88 = scmp.ne.s32.totalorder %s74, %s75
    %p89 = scmp.eq.s32.totalorder %s27, 3
    %p90 = por %p88, %p89
    %p92 = scmp.ne.s32.totalorder %s75, %s91
    %p93 = scmp.eq.s32.totalorder %s27, 0
    %p94 = por %p92, %p93
    %s95 = ssub.s32 %s28, %s40
    %p96 = scmp.eq.s32.totalorder %s95, 0
    %s98 = sadd.s32 %s97, 1
    %s99 = scalar_select %p96, %s97, %s98
    %p102 = pneg %p96
    %p103 = scmp.eq.s32.totalorder %s21, 3
    %p104 = por %p102, %p103
    %p105 = scmp.ne.s32.totalorder %s97, %s100
    %p106 = scmp.eq.s32.totalorder %s21, 0
    %p107 = por %p105, %p106
    %p108 = scmp.ne.s32.totalorder %s97, %s100
    %p109 = scmp.eq.s32.totalorder %s26, 3
    %p110 = por %p108, %p109
    %p111 = scmp.ne.s32.totalorder %s100, %s101
    %p112 = scmp.eq.s32.totalorder %s26, 0
    %p113 = por %p111, %p112
    %p114 = scmp.ne.s32.totalorder %s100, %s101
    %p115 = scmp.eq.s32.totalorder %s27, 3
    %p116 = por %p114, %p115
    %p118 = scmp.ne.s32.totalorder %s101, %s117
    %p119 = scmp.eq.s32.totalorder %s27, 0
    %p120 = por %p118, %p119
    %s122 = sadd.s32 %s121, 1
    %p125 = scmp.eq.s32.totalorder %s21, 3
    %p126 = scmp.ne.s32.totalorder %s121, %s123
    %p127 = scmp.eq.s32.totalorder %s21, 0
    %p128 = por %p126, %p127
    %p129 = scmp.ne.s32.totalorder %s121, %s123
    %p130 = scmp.eq.s32.totalorder %s26, 3
    %p131 = por %p129, %p130
    %p132 = scmp.ne.s32.totalorder %s123, %s124
    %p133 = scmp.eq.s32.totalorder %s26, 0
    %p134 = por %p132, %p133
    %p135 = scmp.ne.s32.totalorder %s123, %s124
    %p136 = scmp.eq.s32.totalorder %s27, 3
    %p137 = por %p135, %p136
    %p139 = scmp.ne.s32.totalorder %s124, %s138
    %p140 = scmp.eq.s32.totalorder %s27, 0
    %p141 = por %p139, %p140
    %s143 = sadd.s32 %s142, 1
    %p146 = scmp.eq.s32.totalorder %s21, 3
    %p147 = scmp.ne.s32.totalorder %s142, %s144
    %p148 = scmp.eq.s32.totalorder %s21, 0
    %p149 = por %p147, %p148
    %p150 = scmp.ne.s32.totalorder %s142, %s144
    %p151 = scmp.eq.s32.totalorder %s26, 3
    %p152 = por %p150, %p151
    %p153 = scmp.ne.s32.totalorder %s144, %s145
    %p154 = scmp.eq.s32.totalorder %s26, 0
    %p155 = por %p153, %p154
    %p156 = scmp.ne.s32.totalorder %s144, %s145
    %p157 = scmp.eq.s32.totalorder %s27, 3
    %p158 = por %p156, %p157
    %p160 = scmp.ne.s32.totalorder %s145, %s159
    %p161 = scmp.eq.s32.totalorder %s27, 0
    %p162 = por %p160, %p161
    %s164 = sadd.s32 %s163, 1
    %p167 = scmp.eq.s32.totalorder %s21, 3
    %p168 = scmp.ne.s32.totalorder %s163, %s165
    %p169 = scmp.eq.s32.totalorder %s21, 0
    %p170 = por %p168, %p169
    %p171 = scmp.ne.s32.totalorder %s163, %s165
    %p172 = scmp.eq.s32.totalorder %s26, 3
    %p173 = por %p171, %p172
    %p174 = scmp.ne.s32.totalorder %s165, %s166
    %p175 = scmp.eq.s32.totalorder %s26, 0
    %p176 = por %p174, %p175
    %p177 = scmp.ne.s32.totalorder %s165, %s166
    %p178 = scmp.eq.s32.totalorder %s27, 3
    %p179 = por %p177, %p178
    %p181 = scmp.ne.s32.totalorder %s166, %s180
    %p182 = scmp.eq.s32.totalorder %s27, 0
    %p183 = por %p181, %p182
    %s185 = sadd.s32 %s184, 1
    %p188 = scmp.eq.s32.totalorder %s21, 3
    %p189 = scmp.ne.s32.totalorder %s184, %s186
    %p190 = scmp.eq.s32.totalorder %s21, 0
    %p191 = por %p189, %p190
    %p192 = scmp.ne.s32.totalorder %s184, %s186
    %p193 = scmp.eq.s32.totalorder %s26, 3
    %p194 = por %p192, %p193
    %p195 = scmp.ne.s32.totalorder %s186, %s187
    %p196 = scmp.eq.s32.totalorder %s26, 0
    %p197 = por %p195, %p196
    %p198 = scmp.ne.s32.totalorder %s186, %s187
    %p199 = scmp.eq.s32.totalorder %s27, 3
    %p200 = por %p198, %p199
    %p202 = scmp.ne.s32.totalorder %s187, %s201
    %p203 = scmp.eq.s32.totalorder %s27, 0
    %p204 = por %p202, %p203
    %s206 = sadd.s32 %s205, 1
    %p209 = scmp.eq.s32.totalorder %s21, 3
    %p210 = scmp.ne.s32.totalorder %s205, %s207
    %p211 = scmp.eq.s32.totalorder %s21, 0
    %p212 = por %p210, %p211
    %p213 = scmp.ne.s32.totalorder %s205, %s207
    %p214 = scmp.eq.s32.totalorder %s26, 3
    %p215 = por %p213, %p214
    %p216 = scmp.ne.s32.totalorder %s207, %s208
    %p217 = scmp.eq.s32.totalorder %s26, 0
    %p218 = por %p216, %p217
    %p219 = scmp.ne.s32.totalorder %s207, %s208
    %p220 = scmp.eq.s32.totalorder %s27, 3
    %p221 = por %p219, %p220
    %p223 = scmp.ne.s32.totalorder %s208, %s222
    %p224 = scmp.eq.s32.totalorder %s27, 0
    %p225 = por %p223, %p224
    %s227 = sadd.s32 %s226, 1
    %p230 = scmp.eq.s32.totalorder %s21, 3
    %p231 = scmp.ne.s32.totalorder %s226, %s228
    %p232 = scmp.eq.s32.totalorder %s21, 0
    %p233 = por %p231, %p232
    %p234 = scmp.ne.s32.totalorder %s226, %s228
    %p235 = scmp.eq.s32.totalorder %s26, 3
    %p236 = por %p234, %p235
    %p237 = scmp.ne.s32.totalorder %s228, %s229
    %p238 = scmp.eq.s32.totalorder %s26, 0
    %p239 = por %p237, %p238
    %p240 = scmp.ne.s32.totalorder %s228, %s229
    %p241 = scmp.eq.s32.totalorder %s27, 3
    %p242 = por %p240, %p241
    %p244 = scmp.ne.s32.totalorder %s229, %s243
    %p245 = scmp.eq.s32.totalorder %s27, 0
    %p246 = por %p244, %p245
    %s248 = sadd.s32 %s247, 1
    %p251 = scmp.eq.s32.totalorder %s21, 3
    %p252 = scmp.ne.s32.totalorder %s247, %s249
    %p253 = scmp.eq.s32.totalorder %s21, 0
    %p254 = por %p252, %p253
    %p255 = scmp.ne.s32.totalorder %s247, %s249
    %p256 = scmp.eq.s32.totalorder %s26, 3
    %p257 = por %p255, %p256
    %p258 = scmp.ne.s32.totalorder %s249, %s250
    %p259 = scmp.eq.s32.totalorder %s26, 0
    %p260 = por %p258, %p259
    %p261 = scmp.ne.s32.totalorder %s249, %s250
    %p262 = scmp.eq.s32.totalorder %s27, 3
    %p263 = por %p261, %p262
    %p265 = scmp.ne.s32.totalorder %s250, %s264
    %p266 = scmp.eq.s32.totalorder %s27, 0
    %p267 = por %p265, %p266
    %s269 = sadd.s32 %s268, 1
    %p272 = scmp.eq.s32.totalorder %s21, 3
    %p273 = scmp.ne.s32.totalorder %s268, %s270
    %p274 = scmp.eq.s32.totalorder %s21, 0
    %p275 = por %p273, %p274
    %p276 = scmp.ne.s32.totalorder %s268, %s270
    %p277 = scmp.eq.s32.totalorder %s26, 3
    %p278 = por %p276, %p277
    %p279 = scmp.ne.s32.totalorder %s270, %s271
    %p280 = scmp.eq.s32.totalorder %s26, 0
    %p281 = por %p279, %p280
    %p282 = scmp.ne.s32.totalorder %s270, %s271
    %p283 = scmp.eq.s32.totalorder %s27, 3
    %p284 = por %p282, %p283
    %p286 = scmp.ne.s32.totalorder %s271, %s285
    %p287 = scmp.eq.s32.totalorder %s27, 0
    %p288 = por %p286, %p287
    %s290 = sadd.s32 %s289, 1
    %p293 = scmp.eq.s32.totalorder %s21, 3
    %p294 = scmp.ne.s32.totalorder %s289, %s291
    %p295 = scmp.eq.s32.totalorder %s21, 0
    %p296 = por %p294, %p295
    %p297 = scmp.ne.s32.totalorder %s289, %s291
    %p298 = scmp.eq.s32.totalorder %s26, 3
    %p299 = por %p297, %p298
    %p300 = scmp.ne.s32.totalorder %s291, %s292
    %p301 = scmp.eq.s32.totalorder %s26, 0
    %p302 = por %p300, %p301
    %p303 = scmp.ne.s32.totalorder %s291, %s292
    %p304 = scmp.eq.s32.totalorder %s27, 3
    %p305 = por %p303, %p304
    %p307 = scmp.ne.s32.totalorder %s292, %s306
    %p308 = scmp.eq.s32.totalorder %s27, 0
    %p309 = por %p307, %p308
    %s311 = sadd.s32 %s310, 1
    %p314 = scmp.eq.s32.totalorder %s21, 3
    %p315 = scmp.ne.s32.totalorder %s310, %s312
    %p316 = scmp.eq.s32.totalorder %s21, 0
    %p317 = por %p315, %p316
    %p318 = scmp.ne.s32.totalorder %s310, %s312
    %p319 = scmp.eq.s32.totalorder %s26, 3
    %p320 = por %p318, %p319
    %p321 = scmp.ne.s32.totalorder %s312, %s313
    %p322 = scmp.eq.s32.totalorder %s26, 0
    %p323 = por %p321, %p322
    %p324 = scmp.ne.s32.totalorder %s312, %s313
    %p325 = scmp.eq.s32.totalorder %s27, 3
    %p326 = por %p324, %p325
    %p328 = scmp.ne.s32.totalorder %s313, %s327
    %p329 = scmp.eq.s32.totalorder %s27, 0
    %p330 = por %p328, %p329
    %s332 = sadd.s32 %s331, 1
    %p335 = scmp.eq.s32.totalorder %s21, 3
    %p336 = scmp.ne.s32.totalorder %s331, %s333
    %p337 = scmp.eq.s32.totalorder %s21, 0
    %p338 = por %p336, %p337
    %p339 = scmp.ne.s32.totalorder %s331, %s333
    %p340 = scmp.eq.s32.totalorder %s26, 3
    %p341 = por %p339, %p340
    %p342 = scmp.ne.s32.totalorder %s333, %s334
    %p343 = scmp.eq.s32.totalorder %s26, 0
    %p344 = por %p342, %p343
    %p345 = scmp.ne.s32.totalorder %s333, %s334
    %p346 = scmp.eq.s32.totalorder %s27, 3
    %p347 = por %p345, %p346
    %p349 = scmp.ne.s32.totalorder %s334, %s348
    %p350 = scmp.eq.s32.totalorder %s27, 0
    %p351 = por %p349, %p350
    %s353 = sadd.s32 %s352, 1
    %p356 = scmp.eq.s32.totalorder %s21, 3
    %p357 = scmp.ne.s32.totalorder %s352, %s354
    %p358 = scmp.eq.s32.totalorder %s21, 0
    %p359 = por %p357, %p358
    %p360 = scmp.ne.s32.totalorder %s352, %s354
    %p361 = scmp.eq.s32.totalorder %s26, 3
    %p362 = por %p360, %p361
    %p363 = scmp.ne.s32.totalorder %s354, %s355
    %p364 = scmp.eq.s32.totalorder %s26, 0
    %p365 = por %p363, %p364
    %p366 = scmp.ne.s32.totalorder %s354, %s355
    %p367 = scmp.eq.s32.totalorder %s27, 3
    %p368 = por %p366, %p367
    %p370 = scmp.ne.s32.totalorder %s355, %s369
    %p371 = scmp.eq.s32.totalorder %s27, 0
    %p372 = por %p370, %p371
    %s373 = ssub.s32 %s28, %s40
    %s374 = ssub.s32 %s29, %s36
    %s375 = sor.u32 %s373, %s374
    %p376 = scmp.eq.s32.totalorder %s375, 0
    %s378 = sadd.s32 %s377, 1
    %s379 = scalar_select %p376, %s377, %s378
    %p382 = pneg %p376
    %p383 = scmp.eq.s32.totalorder %s21, 3
    %p384 = por %p382, %p383
    %p385 = scmp.ne.s32.totalorder %s377, %s380
    %p386 = scmp.eq.s32.totalorder %s21, 0
    %p387 = por %p385, %p386
    %p388 = scmp.ne.s32.totalorder %s377, %s380
    %p389 = scmp.eq.s32.totalorder %s26, 3
    %p390 = por %p388, %p389
    %p391 = scmp.ne.s32.totalorder %s380, %s381
    %p392 = scmp.eq.s32.totalorder %s26, 0
    %p393 = por %p391, %p392
    %p394 = scmp.ne.s32.totalorder %s380, %s381
    %p395 = scmp.eq.s32.totalorder %s27, 3
    %p396 = por %p394, %p395
    %p398 = scmp.ne.s32.totalorder %s381, %s397
    %p399 = scmp.eq.s32.totalorder %s27, 0
    %p400 = por %p398, %p399
    %p401 = scmp.le.s32.totalorder 1, %s21
    %p402 = scmp.lt.s32.totalorder %s21, 5
    %p403 = pnand %p401, %p402
    %p404 = pneg %p403
    // Predicated region
    $region9: #{tpu_custom_call.1} parent=5 // pred_check
      _
    $region10: #{tpu_custom_call.1} parent=5 // pred_check_branch
      %406 = sbr.rel (%p403) target = $region12
    $region11: #{tpu_custom_call.1} parent=5 // pred_region
      %s407 = ssub.s32 %s21, 1
      // Predicated region
      $region13: #{tpu_custom_call.1} parent=11 // pred_check
        %p408 = pneg %p134
      $region14: #{tpu_custom_call.1} parent=11 // pred_check_branch
        %410 = sbr.rel (%p408) target = $region16
      $region15: #{tpu_custom_call.1} parent=11 // pred_region
        _
      $region16: #{tpu_custom_call.1} parent=11 // pred_fallthru
        _
      // Predicated region
      $region17: #{tpu_custom_call.1} parent=11 // pred_check
        %p411 = pneg %p155
      $region18: #{tpu_custom_call.1} parent=11 // pred_check_branch
        %413 = sbr.rel (%p411) target = $region20
      $region19: #{tpu_custom_call.1} parent=11 // pred_region
        _
      $region20: #{tpu_custom_call.1} parent=11 // pred_fallthru
        _
      // Predicated region
      $region21: #{tpu_custom_call.1} parent=11 // pred_check
        %p414 = pneg %p176
      $region22: #{tpu_custom_call.1} parent=11 // pred_check_branch
        %416 = sbr.rel (%p414) target = $region24
      $region23: #{tpu_custom_call.1} parent=11 // pred_region
        _
      $region24: #{tpu_custom_call.1} parent=11 // pred_fallthru
        _
      // Predicated region
      $region25: #{tpu_custom_call.1} parent=11 // pred_check
        %p417 = pneg %p197
      $region26: #{tpu_custom_call.1} parent=11 // pred_check_branch
        %419 = sbr.rel (%p417) target = $region28
      $region27: #{tpu_custom_call.1} parent=11 // pred_region
        _
      $region28: #{tpu_custom_call.1} parent=11 // pred_fallthru
        _
      // Predicated region
      $region29: #{tpu_custom_call.1} parent=11 // pred_check
        %p420 = pneg %p218
      $region30: #{tpu_custom_call.1} parent=11 // pred_check_branch
        %422 = sbr.rel (%p420) target = $region32
      $region31: #{tpu_custom_call.1} parent=11 // pred_region
        _
      $region32: #{tpu_custom_call.1} parent=11 // pred_fallthru
        _
      // Predicated region
      $region33: #{tpu_custom_call.1} parent=11 // pred_check
        %p423 = pneg %p239
      $region34: #{tpu_custom_call.1} parent=11 // pred_check_branch
        %425 = sbr.rel (%p423) target = $region36
      $region35: #{tpu_custom_call.1} parent=11 // pred_region
        _
      $region36: #{tpu_custom_call.1} parent=11 // pred_fallthru
        _
      // Predicated region
      $region37: #{tpu_custom_call.1} parent=11 // pred_check
        %p426 = pneg %p260
      $region38: #{tpu_custom_call.1} parent=11 // pred_check_branch
        %428 = sbr.rel (%p426) target = $region40
      $region39: #{tpu_custom_call.1} parent=11 // pred_region
        _
      $region40: #{tpu_custom_call.1} parent=11 // pred_fallthru
        _
      // Predicated region
      $region41: #{tpu_custom_call.1} parent=11 // pred_check
        %p429 = pneg %p281
      $region42: #{tpu_custom_call.1} parent=11 // pred_check_branch
        %431 = sbr.rel (%p429) target = $region44
      $region43: #{tpu_custom_call.1} parent=11 // pred_region
        _
      $region44: #{tpu_custom_call.1} parent=11 // pred_fallthru
        _
      // Predicated region
      $region45: #{tpu_custom_call.1} parent=11 // pred_check
        %p432 = pneg %p302
      $region46: #{tpu_custom_call.1} parent=11 // pred_check_branch
        %434 = sbr.rel (%p432) target = $region48
      $region47: #{tpu_custom_call.1} parent=11 // pred_region
        _
      $region48: #{tpu_custom_call.1} parent=11 // pred_fallthru
        _
      // Predicated region
      $region49: #{tpu_custom_call.1} parent=11 // pred_check
        %p435 = pneg %p323
      $region50: #{tpu_custom_call.1} parent=11 // pred_check_branch
        %437 = sbr.rel (%p435) target = $region52
      $region51: #{tpu_custom_call.1} parent=11 // pred_region
        _
      $region52: #{tpu_custom_call.1} parent=11 // pred_fallthru
        _
      // Predicated region
      $region53: #{tpu_custom_call.1} parent=11 // pred_check
        %p438 = pneg %p344
      $region54: #{tpu_custom_call.1} parent=11 // pred_check_branch
        %440 = sbr.rel (%p438) target = $region56
      $region55: #{tpu_custom_call.1} parent=11 // pred_region
        _
      $region56: #{tpu_custom_call.1} parent=11 // pred_fallthru
        _
      // Predicated region
      $region57: #{tpu_custom_call.1} parent=11 // pred_check
        %p441 = pneg %p365
      $region58: #{tpu_custom_call.1} parent=11 // pred_check_branch
        %443 = sbr.rel (%p441) target = $region60
      $region59: #{tpu_custom_call.1} parent=11 // pred_region
        _
      $region60: #{tpu_custom_call.1} parent=11 // pred_fallthru
        _
    $region12: #{tpu_custom_call.1} parent=5 // pred_fallthru
      _
    %p444 = scmp.lt.s32.totalorder %s21, 4
    // Predicated region
    $region61: #{tpu_custom_call.1} parent=5 // pred_check
      %p445 = pneg %p444
    $region62: #{tpu_custom_call.1} parent=5 // pred_check_branch
      %447 = sbr.rel (%p445) target = $region64
    $region63: #{tpu_custom_call.1} parent=5 // pred_region
      // Predicated region
      $region65: #{tpu_custom_call.1} parent=63 // pred_check
        %p448 = pneg %p55
      $region66: #{tpu_custom_call.1} parent=63 // pred_check_branch
        %450 = sbr.rel (%p448) target = $region68
      $region67: #{tpu_custom_call.1} parent=63 // pred_region
        %s451 = smul.u32 8, %s29
        %p452 = scmp.lt.s32.totalorder %s28, 1
        %s453 = scalar_select %p452, %s28, 1
        %p454 = scmp.lt.s32.totalorder %s451, 15
        %s455 = scalar_select %p454, %s451, 15
        %s456 = smul.addr %s453, 16
        %s457 = sadd.s32 %s455, %s456
        %s458 = smul.addr %s457, 8
        %s459 = scalar_lea.vmem %s0, %s458
        %s460 = smul.u32 8, %s29
      $region68: #{tpu_custom_call.1} parent=63 // pred_fallthru
        _
      // Predicated region
      $region69: #{tpu_custom_call.1} parent=63 // pred_check
        %p461 = pneg %p81
      $region70: #{tpu_custom_call.1} parent=63 // pred_check_branch
        %463 = sbr.rel (%p461) target = $region72
      $region71: #{tpu_custom_call.1} parent=63 // pred_region
        %p464 = scmp.lt.s32.totalorder %s28, 1
        %s465 = scalar_select %p464, %s28, 1
        %s466 = smul.addr %s465, 16
        %s467 = smul.addr %s466, 4
        %s468 = scalar_lea.vmem %s1, %s467
      $region72: #{tpu_custom_call.1} parent=63 // pred_fallthru
        _
      // Predicated region
      $region73: #{tpu_custom_call.1} parent=63 // pred_check
        %p469 = pneg %p107
      $region74: #{tpu_custom_call.1} parent=63 // pred_check_branch
        %471 = sbr.rel (%p469) target = $region76
      $region75: #{tpu_custom_call.1} parent=63 // pred_region
        %p472 = scmp.lt.s32.totalorder %s28, 1
        %s473 = scalar_select %p472, %s28, 1
        %s474 = smul.addr %s473, 8
        %s475 = scalar_lea.vmem %s2, %s474
      $region76: #{tpu_custom_call.1} parent=63 // pred_fallthru
        _
    $region64: #{tpu_custom_call.1} parent=5 // pred_fallthru
      _
    %p476 = scmp.le.s32.totalorder 1, %s21
    %p477 = scmp.lt.s32.totalorder %s21, 5
    %p478 = pnand %p476, %p477
    %p479 = pneg %p478
    // Predicated region
    $region77: #{tpu_custom_call.1} parent=5 // pred_check
      _
    $region78: #{tpu_custom_call.1} parent=5 // pred_check_branch
      %481 = sbr.rel (%p478) target = $region80
    $region79: #{tpu_custom_call.1} parent=5 // pred_region
      %s482 = ssub.s32 %s21, 1
      %s483 = smul.u32 8, %s31
      %p484 = scmp.lt.s32.totalorder %s30, 1
      %s485 = scalar_select %p484, %s30, 1
      %p486 = scmp.lt.s32.totalorder %s483, 15
      %s487 = scalar_select %p486, %s483, 15
      %s488 = smul.addr %s485, 16
      %s489 = sadd.s32 %s487, %s488
      %s490 = smul.addr %s489, 8
      %s491 = scalar_lea.vmem %s0, %s490
      %p492 = pneg %p61
      %p493 = pneg %p58
      %p494 = scmp.lt.s32.totalorder %s30, 1
      %s495 = scalar_select %p494, %s30, 1
      %s496 = smul.addr %s495, 16
      %s497 = smul.addr %s496, 4
      %s498 = scalar_lea.vmem %s1, %s497
      %p499 = pneg %p87
      %p500 = pneg %p84
      %p501 = scmp.lt.s32.totalorder %s30, 1
      %s502 = scalar_select %p501, %s30, 1
      %s503 = smul.addr %s502, 8
      %s504 = scalar_lea.vmem %s2, %s503
      %p505 = pneg %p113
      %p506 = pneg %p110
      %p507 = pneg %p134
      %p508 = pneg %p131
      %p509 = pneg %p155
      %p510 = pneg %p152
      %p511 = pneg %p176
      %p512 = pneg %p173
      %p513 = pneg %p197
      %p514 = pneg %p194
      %p515 = pneg %p218
      %p516 = pneg %p215
      %p517 = pneg %p239
      %p518 = pneg %p236
      %p519 = pneg %p260
      %p520 = pneg %p257
      %p521 = pneg %p281
      %p522 = pneg %p278
      %p523 = pneg %p302
      %p524 = pneg %p299
      %p525 = pneg %p323
      %p526 = pneg %p320
      %p527 = pneg %p344
      %p528 = pneg %p341
      %p529 = pneg %p365
      %p530 = pneg %p362
      %p531 = pneg %p393
      %p532 = pneg %p390
      %s533 = smul.u32 8, %s31
      %p534 = scmp.lt.s32.totalorder %s30, 1
      %s535 = scalar_select %p534, %s30, 1
      %p536 = scmp.lt.s32.totalorder %s533, 15
      %s537 = scalar_select %p536, %s533, 15
      %s538 = smul.addr %s535, 16
      %s539 = sadd.s32 %s537, %s538
      %s540 = smul.addr %s539, 8
      %s541 = scalar_lea.vmem %s15, %s540
      %s542 = smul.u32 8, %s31
      %p543 = scmp.lt.s32.totalorder %s30, 1
      %s544 = scalar_select %p543, %s30, 1
      %p545 = scmp.lt.s32.totalorder %s542, 15
      %s546 = scalar_select %p545, %s542, 15
      %s547 = smul.addr %s544, 16
      %s548 = sadd.s32 %s546, %s547
      %s549 = smul.addr %s548, 8
      %s550 = scalar_lea.vmem %s0, %s549
      %s551 = smul.u32 8, %s31
      %p552 = scmp.lt.s32.totalorder %s30, 1
      %s553 = scalar_select %p552, %s30, 1
      %s554 = smul.addr %s553, 16
      %s555 = smul.addr %s554, 4
      %s556 = scalar_lea.vmem %s1, %s555
      %p557 = scmp.lt.s32.totalorder %s30, 1
      %s558 = scalar_select %p557, %s30, 1
      %s559 = smul.addr %s558, 8
      %s560 = scalar_lea.vmem %s2, %s559
      %s561 = smul.u32 8, %s31
      %p562 = scmp.lt.s32.totalorder %s30, 1
      %s563 = scalar_select %p562, %s30, 1
      %p564 = scmp.lt.s32.totalorder %s561, 15
      %s565 = scalar_select %p564, %s561, 15
      %s566 = smul.addr %s563, 16
      %s567 = sadd.s32 %s565, %s566
      %s568 = smul.addr %s567, 8
      %s569 = scalar_lea.vmem %s15, %s568
      %s570 = smul.u32 8, %s31
      %v572 = vld [vmem:[%s560] sm:$0x3f]
      %p573 = scmp.eq.s32.totalorder %s31, 0
      // Predicated region
      $region81: #{tpu_custom_call.1} parent=79 // pred_check
        %p574 = pneg %p573
      $region82: #{tpu_custom_call.1} parent=79 // pred_check_branch
        %576 = sbr.rel (%p574) target = $region84
      $region83: #{tpu_custom_call.1} parent=79 // pred_region
        %v577 = vld [vmem:[%s556] sm:$0xf]
        %v578 = vld [vmem:[%s556 + $0x4] sm:$0xf]
        %v579 = vld [vmem:[%s556 + $0x8] sm:$0xf]
        %v580 = vld [vmem:[%s556 + $0xc] sm:$0xf]
        %v581 = vld [vmem:[%s556 + $0x10] sm:$0xf]
        %v582 = vld [vmem:[%s556 + $0x14] sm:$0xf]
        %v583 = vld [vmem:[%s556 + $0x18] sm:$0xf]
        %v584 = vld [vmem:[%s556 + $0x1c] sm:$0xf]
        %v585 = vld [vmem:[%s556 + $0x20] sm:$0xf]
        %v586 = vld [vmem:[%s556 + $0x24] sm:$0xf]
        %v587 = vld [vmem:[%s556 + $0x28] sm:$0xf]
        %v588 = vld [vmem:[%s556 + $0x2c] sm:$0xf]
        %v589 = vld [vmem:[%s556 + $0x30] sm:$0xf]
        %v590 = vld [vmem:[%s556 + $0x34] sm:$0xf]
        %v591 = vld [vmem:[%s556 + $0x38] sm:$0xf]
        %v592 = vld [vmem:[%s556 + $0x3c] sm:$0xf]
        %v593 = vunpack.c.l.bf16 %v577
        %v594 = vunpack.c.l.bf16 %v578
        %v595 = vunpack.c.l.bf16 %v579
        %v596 = vunpack.c.l.bf16 %v580
        %v597 = vunpack.c.l.bf16 %v581
        %v598 = vunpack.c.l.bf16 %v582
        %v599 = vunpack.c.l.bf16 %v583
        %v600 = vunpack.c.l.bf16 %v584
        %v601 = vunpack.c.l.bf16 %v585
        %v602 = vunpack.c.l.bf16 %v586
        %v603 = vunpack.c.l.bf16 %v587
        %v604 = vunpack.c.l.bf16 %v588
        %v605 = vunpack.c.l.bf16 %v589
        %v606 = vunpack.c.l.bf16 %v590
        %v607 = vunpack.c.l.bf16 %v591
        %v608 = vunpack.c.l.bf16 %v592
        %vm609 = vcmask 523264
        %v610 = vsel %vm609, %v593, 0.0
        %611 = vadd.xlane.f32.xlu0 %v610
        %v612 = vpop.xlane.xlu0 %611
        %v613 = vsel %vm609, %v594, 0.0
        %614 = vadd.xlane.f32.xlu0 %v613
        %v615 = vpop.xlane.xlu0 %614
        %v616 = vsel %vm609, %v595, 0.0
        %617 = vadd.xlane.f32.xlu0 %v616
        %v618 = vpop.xlane.xlu0 %617
        %v619 = vsel %vm609, %v596, 0.0
        %620 = vadd.xlane.f32.xlu0 %v619
        %v621 = vpop.xlane.xlu0 %620
        %v622 = vsel %vm609, %v597, 0.0
        %623 = vadd.xlane.f32.xlu0 %v622
        %v624 = vpop.xlane.xlu0 %623
        %v625 = vsel %vm609, %v598, 0.0
        %626 = vadd.xlane.f32.xlu0 %v625
        %v627 = vpop.xlane.xlu0 %626
        %v628 = vsel %vm609, %v599, 0.0
        %629 = vadd.xlane.f32.xlu0 %v628
        %v630 = vpop.xlane.xlu0 %629
        %v631 = vsel %vm609, %v600, 0.0
        %632 = vadd.xlane.f32.xlu0 %v631
        %v633 = vpop.xlane.xlu0 %632
        %v634 = vsel %vm609, %v601, 0.0
        %635 = vadd.xlane.f32.xlu0 %v634
        %v636 = vpop.xlane.xlu0 %635
        %v637 = vsel %vm609, %v602, 0.0
        %638 = vadd.xlane.f32.xlu0 %v637
        %v639 = vpop.xlane.xlu0 %638
        %v640 = vsel %vm609, %v603, 0.0
        %641 = vadd.xlane.f32.xlu0 %v640
        %v642 = vpop.xlane.xlu0 %641
        %v643 = vsel %vm609, %v604, 0.0
        %644 = vadd.xlane.f32.xlu0 %v643
        %v645 = vpop.xlane.xlu0 %644
        %v646 = vsel %vm609, %v605, 0.0
        %647 = vadd.xlane.f32.xlu0 %v646
        %v648 = vpop.xlane.xlu0 %647
        %v649 = vsel %vm609, %v606, 0.0
        %650 = vadd.xlane.f32.xlu0 %v649
        %v651 = vpop.xlane.xlu0 %650
        %v652 = vsel %vm609, %v607, 0.0
        %653 = vadd.xlane.f32.xlu0 %v652
        %v654 = vpop.xlane.xlu0 %653
        %v655 = vsel %vm609, %v608, 0.0
        %656 = vadd.xlane.f32.xlu0 %v655
        %v657 = vpop.xlane.xlu0 %656
        %v658 = vrcp.pop 64.0
        %v659 = vmul.f32 %v612, %v658
        %v660 = vmul.f32 %v615, %v658
        %v661 = vmul.f32 %v618, %v658
        %v662 = vmul.f32 %v621, %v658
        %v663 = vmul.f32 %v624, %v658
        %v664 = vmul.f32 %v627, %v658
        %v665 = vmul.f32 %v630, %v658
        %v666 = vmul.f32 %v633, %v658
        %v667 = vmul.f32 %v636, %v658
        %v668 = vmul.f32 %v639, %v658
        %v669 = vmul.f32 %v642, %v658
        %v670 = vmul.f32 %v645, %v658
        %v671 = vmul.f32 %v648, %v658
        %v672 = vmul.f32 %v651, %v658
        %v673 = vmul.f32 %v654, %v658
        %v674 = vmul.f32 %v657, %v658
        %v675 = vsub.f32 %v593, %v659
        %v676 = vsub.f32 %v594, %v660
        %v677 = vsub.f32 %v595, %v661
        %v678 = vsub.f32 %v596, %v662
        %v679 = vsub.f32 %v597, %v663
        %v680 = vsub.f32 %v598, %v664
        %v681 = vsub.f32 %v599, %v665
        %v682 = vsub.f32 %v600, %v666
        %v683 = vsub.f32 %v601, %v667
        %v684 = vsub.f32 %v602, %v668
        %v685 = vsub.f32 %v603, %v669
        %v686 = vsub.f32 %v604, %v670
        %v687 = vsub.f32 %v605, %v671
        %v688 = vsub.f32 %v606, %v672
        %v689 = vsub.f32 %v607, %v673
        %v690 = vsub.f32 %v608, %v674
        %v691 = vmul.f32 %v675, %v675
        %v692 = vmul.f32 %v676, %v676
        %v693 = vmul.f32 %v677, %v677
        %v694 = vmul.f32 %v678, %v678
        %v695 = vmul.f32 %v679, %v679
        %v696 = vmul.f32 %v680, %v680
        %v697 = vmul.f32 %v681, %v681
        %v698 = vmul.f32 %v682, %v682
        %v699 = vmul.f32 %v683, %v683
        %v700 = vmul.f32 %v684, %v684
        %v701 = vmul.f32 %v685, %v685
        %v702 = vmul.f32 %v686, %v686
        %v703 = vmul.f32 %v687, %v687
        %v704 = vmul.f32 %v688, %v688
        %v705 = vmul.f32 %v689, %v689
        %v706 = vmul.f32 %v690, %v690
        %v707 = vsel %vm609, %v691, 0.0
        %708 = vadd.xlane.f32.xlu0 %v707
        %v709 = vpop.xlane.xlu0 %708
        %v710 = vsel %vm609, %v692, 0.0
        %711 = vadd.xlane.f32.xlu0 %v710
        %v712 = vpop.xlane.xlu0 %711
        %v713 = vsel %vm609, %v693, 0.0
        %714 = vadd.xlane.f32.xlu0 %v713
        %v715 = vpop.xlane.xlu0 %714
        %v716 = vsel %vm609, %v694, 0.0
        %717 = vadd.xlane.f32.xlu0 %v716
        %v718 = vpop.xlane.xlu0 %717
        %v719 = vsel %vm609, %v695, 0.0
        %720 = vadd.xlane.f32.xlu0 %v719
        %v721 = vpop.xlane.xlu0 %720
        %v722 = vsel %vm609, %v696, 0.0
        %723 = vadd.xlane.f32.xlu0 %v722
        %v724 = vpop.xlane.xlu0 %723
        %v725 = vsel %vm609, %v697, 0.0
        %726 = vadd.xlane.f32.xlu0 %v725
        %v727 = vpop.xlane.xlu0 %726
        %v728 = vsel %vm609, %v698, 0.0
        %729 = vadd.xlane.f32.xlu0 %v728
        %v730 = vpop.xlane.xlu0 %729
        %v731 = vsel %vm609, %v699, 0.0
        %732 = vadd.xlane.f32.xlu0 %v731
        %v733 = vpop.xlane.xlu0 %732
        %v734 = vsel %vm609, %v700, 0.0
        %735 = vadd.xlane.f32.xlu0 %v734
        %v736 = vpop.xlane.xlu0 %735
        %v737 = vsel %vm609, %v701, 0.0
        %738 = vadd.xlane.f32.xlu0 %v737
        %v739 = vpop.xlane.xlu0 %738
        %v740 = vsel %vm609, %v702, 0.0
        %741 = vadd.xlane.f32.xlu0 %v740
        %v742 = vpop.xlane.xlu0 %741
        %v743 = vsel %vm609, %v703, 0.0
        %744 = vadd.xlane.f32.xlu0 %v743
        %v745 = vpop.xlane.xlu0 %744
        %v746 = vsel %vm609, %v704, 0.0
        %747 = vadd.xlane.f32.xlu0 %v746
        %v748 = vpop.xlane.xlu0 %747
        %v749 = vsel %vm609, %v705, 0.0
        %750 = vadd.xlane.f32.xlu0 %v749
        %v751 = vpop.xlane.xlu0 %750
        %v752 = vsel %vm609, %v706, 0.0
        %753 = vadd.xlane.f32.xlu0 %v752
        %v754 = vpop.xlane.xlu0 %753
        %v755 = vmul.f32 %v709, %v658
        %v756 = vmul.f32 %v712, %v658
        %v757 = vmul.f32 %v715, %v658
        %v758 = vmul.f32 %v718, %v658
        %v759 = vmul.f32 %v721, %v658
        %v760 = vmul.f32 %v724, %v658
        %v761 = vmul.f32 %v727, %v658
        %v762 = vmul.f32 %v730, %v658
        %v763 = vmul.f32 %v733, %v658
        %v764 = vmul.f32 %v736, %v658
        %v765 = vmul.f32 %v739, %v658
        %v766 = vmul.f32 %v742, %v658
        %v767 = vmul.f32 %v745, %v658
        %v768 = vmul.f32 %v748, %v658
        %v769 = vmul.f32 %v751, %v658
        %v770 = vmul.f32 %v754, %v658
        %v771 = vadd.f32 %v755, 1e-06
        %v772 = vadd.f32 %v756, 1e-06
        %v773 = vadd.f32 %v757, 1e-06
        %v774 = vadd.f32 %v758, 1e-06
        %v775 = vadd.f32 %v759, 1e-06
        %v776 = vadd.f32 %v760, 1e-06
        %v777 = vadd.f32 %v761, 1e-06
        %v778 = vadd.f32 %v762, 1e-06
        %v779 = vadd.f32 %v763, 1e-06
        %v780 = vadd.f32 %v764, 1e-06
        %v781 = vadd.f32 %v765, 1e-06
        %v782 = vadd.f32 %v766, 1e-06
        %v783 = vadd.f32 %v767, 1e-06
        %v784 = vadd.f32 %v768, 1e-06
        %v785 = vadd.f32 %v769, 1e-06
        %v786 = vadd.f32 %v770, 1e-06
        %v787 = vrsqrt.pop %v771
        %v788 = vrsqrt.pop %v772
        %v789 = vrsqrt.pop %v773
        %v790 = vrsqrt.pop %v774
        %v791 = vrsqrt.pop %v775
        %v792 = vrsqrt.pop %v776
        %v793 = vrsqrt.pop %v777
        %v794 = vrsqrt.pop %v778
        %v795 = vrsqrt.pop %v779
        %v796 = vrsqrt.pop %v780
        %v797 = vrsqrt.pop %v781
        %v798 = vrsqrt.pop %v782
        %v799 = vrsqrt.pop %v783
        %v800 = vrsqrt.pop %v784
        %v801 = vrsqrt.pop %v785
        %v802 = vrsqrt.pop %v786
        %v803 = vmul.f32 %v675, %v787
        %v804 = vmul.f32 %v676, %v788
        %v805 = vmul.f32 %v677, %v789
        %v806 = vmul.f32 %v678, %v790
        %v807 = vmul.f32 %v679, %v791
        %v808 = vmul.f32 %v680, %v792
        %v809 = vmul.f32 %v681, %v793
        %v810 = vmul.f32 %v682, %v794
        %v811 = vmul.f32 %v683, %v795
        %v812 = vmul.f32 %v684, %v796
        %v813 = vmul.f32 %v685, %v797
        %v814 = vmul.f32 %v686, %v798
        %v815 = vmul.f32 %v687, %v799
        %v816 = vmul.f32 %v688, %v800
        %v817 = vmul.f32 %v689, %v801
        %v818 = vmul.f32 %v690, %v802
        %v819 = vadd.f32 %v572, 1.0
        %v820 = vlaneseq
        %v821 = vshrl.u32 %v820, 7
        %v822 = vsub.s32 1, %v821
        %v823 = vrot.slane %v819, %v822
        %v824 = vmul.f32 %v803, %v823
        %v825 = vmul.f32 %v804, %v823
        %v826 = vmul.f32 %v805, %v823
        %v827 = vmul.f32 %v806, %v823
        %v828 = vmul.f32 %v807, %v823
        %v829 = vmul.f32 %v808, %v823
        %v830 = vmul.f32 %v809, %v823
        %v831 = vmul.f32 %v810, %v823
        %v832 = vmul.f32 %v811, %v823
        %v833 = vmul.f32 %v812, %v823
        %v834 = vmul.f32 %v813, %v823
        %v835 = vmul.f32 %v814, %v823
        %v836 = vmul.f32 %v815, %v823
        %v837 = vmul.f32 %v816, %v823
        %v838 = vmul.f32 %v817, %v823
        %v839 = vmul.f32 %v818, %v823
        %v840 = vlaneseq
        %v841 = vshrl.u32 %v840, 7
        %v842 = vsub.s32 0, %v841
        %v843 = vrot.slane %v572, %v842
        %v844 = vadd.f32 %v824, %v843
        %v845 = vadd.f32 %v825, %v843
        %v846 = vadd.f32 %v826, %v843
        %v847 = vadd.f32 %v827, %v843
        %v848 = vadd.f32 %v828, %v843
        %v849 = vadd.f32 %v829, %v843
        %v850 = vadd.f32 %v830, %v843
        %v851 = vadd.f32 %v831, %v843
        %v852 = vadd.f32 %v832, %v843
        %v853 = vadd.f32 %v833, %v843
        %v854 = vadd.f32 %v834, %v843
        %v855 = vadd.f32 %v835, %v843
        %v856 = vadd.f32 %v836, %v843
        %v857 = vadd.f32 %v837, %v843
        %v858 = vadd.f32 %v838, %v843
        %v859 = vadd.f32 %v839, %v843
        %v860 = vpack.c.bf16 %v845, %v844
        %v861 = vpack.c.bf16 %v847, %v846
        %v862 = vpack.c.bf16 %v849, %v848
        %v863 = vpack.c.bf16 %v851, %v850
        %v864 = vpack.c.bf16 %v853, %v852
        %v865 = vpack.c.bf16 %v855, %v854
        %v866 = vpack.c.bf16 %v857, %v856
        %v867 = vpack.c.bf16 %v859, %v858
        %v868 = vld [vmem:[%s5] sm:$0xf]
        %v869 = vld [vmem:[%s5 + $0x4] sm:$0xf]
        %v870 = vld [vmem:[%s5 + $0x8] sm:$0xf]
        %v871 = vld [vmem:[%s5 + $0xc] sm:$0xf]
        %v872 = vld [vmem:[%s5 + $0x10] sm:$0xf]
        %v873 = vld [vmem:[%s5 + $0x14] sm:$0xf]
        %v874 = vld [vmem:[%s5 + $0x18] sm:$0xf]
        %v875 = vld [vmem:[%s5 + $0x1c] sm:$0xf]
        %v876 = vld [vmem:[%s6] sm:$0xff]
        %v877 = vld [vmem:[%s6 + $0x8] sm:$0xff]
        %v878 = vld [vmem:[%s6 + $0x10] sm:$0xff]
        %v879 = vld [vmem:[%s6 + $0x18] sm:$0xff]
        %v880 = vld [vmem:[%s6 + $0x20] sm:$0xff]
        %v881 = vld [vmem:[%s6 + $0x28] sm:$0xff]
        %v882 = vld [vmem:[%s6 + $0x30] sm:$0xff]
        %v883 = vld [vmem:[%s6 + $0x38] sm:$0xff]
        %885 = vset.pattern.permute.xlu0 0
        %886 = vperm.xlu0 %885, %v876
        %v887 = vpop.permute.xlu0 %886
        %890 = vset.pattern.permute.xlu0 0
        %891 = vperm.xlu0 %890, %v877
        %v892 = vpop.permute.xlu0 %891
        %895 = vset.pattern.permute.xlu0 0
        %896 = vperm.xlu0 %895, %v878
        %v897 = vpop.permute.xlu0 %896
        %900 = vset.pattern.permute.xlu0 0
        %901 = vperm.xlu0 %900, %v879
        %v902 = vpop.permute.xlu0 %901
        %905 = vset.pattern.permute.xlu0 0
        %906 = vperm.xlu0 %905, %v880
        %v907 = vpop.permute.xlu0 %906
        %910 = vset.pattern.permute.xlu0 0
        %911 = vperm.xlu0 %910, %v881
        %v912 = vpop.permute.xlu0 %911
        %915 = vset.pattern.permute.xlu0 0
        %916 = vperm.xlu0 %915, %v882
        %v917 = vpop.permute.xlu0 %916
        %920 = vset.pattern.permute.xlu0 0
        %921 = vperm.xlu0 %920, %v883
        %v922 = vpop.permute.xlu0 %921
        %v932 = vunpack.c.l.b16 %v868
        %v933 = vunpack.c.l.b16 %v869
        %v934 = vunpack.c.l.b16 %v870
        %v935 = vunpack.c.l.b16 %v871
        %v936 = vunpack.c.l.b16 %v872
        %v937 = vunpack.c.l.b16 %v873
        %v938 = vunpack.c.l.b16 %v874
        %v939 = vunpack.c.l.b16 %v875
        %v940 = vpack.c.b16 %v933, %v932
        %v941 = vpack.c.b16 %v935, %v934
        %v942 = vpack.c.b16 %v937, %v936
        %v943 = vpack.c.b16 %v939, %v938
        %v945 = vsel %vm609, %v940, 0
        %v948 = vsel %vm609, %v941, 0
        %v951 = vsel %vm609, %v942, 0
        %v954 = vsel %vm609, %v943, 0
        %v957 = vsel %vm609, %v860, 0
        %v960 = vsel %vm609, %v861, 0
        %v963 = vsel %vm609, %v862, 0
        %v966 = vsel %vm609, %v863, 0
        %v969 = vsel %vm609, %v864, 0
        %v972 = vsel %vm609, %v865, 0
        %v975 = vsel %vm609, %v866, 0
        %v978 = vsel %vm609, %v867, 0
        %980 = vmatprep.subr.bf16.mxu0 0
        %981 = vmatpush1.bf16.xpose.msra.mxu0 %v957
        %982 = vmatprep.subr.bf16.mxu0 0
        %983 = vmatpush1.bf16.xpose.msra.mxu0 %v960
        %984 = vmatprep.subr.bf16.mxu0 0
        %985 = vmatpush1.bf16.xpose.msra.mxu0 %v963
        %986 = vmatprep.subr.bf16.mxu0 0
        %987 = vmatpush1.bf16.xpose.msra.mxu0 %v966
        %988 = vmatprep.subr.bf16.mxu0 0
        %989 = vmatpush1.bf16.xpose.msra.mxu0 %v969
        %990 = vmatprep.subr.bf16.mxu0 0
        %991 = vmatpush1.bf16.xpose.msra.mxu0 %v972
        %992 = vmatprep.subr.bf16.mxu0 0
        %993 = vmatpush1.bf16.xpose.msra.mxu0 %v975
        %994 = vmatprep.subr.bf16.mxu0 0
        %995 = vmatpush1.bf16.xpose.msra.mxu0 %v978
        %996 = vmatprep.subr.bf16.mxu0 0
        %997 = vmatpush1.bf16.xpose.msra.mxu0 0
        %998 = vmatprep.subr.bf16.mxu0 0
        %999 = vmatpush1.bf16.xpose.msra.mxu0 0
        %1000 = vmatprep.subr.bf16.mxu0 0
        %1001 = vmatpush1.bf16.xpose.msra.mxu0 0
        %1002 = vmatprep.subr.bf16.mxu0 0
        %1003 = vmatpush1.bf16.xpose.msra.mxu0 0
        %1004 = vmatprep.subr.bf16.mxu0 0
        %1005 = vmatpush1.bf16.xpose.msra.mxu0 0
        %1006 = vmatprep.subr.bf16.mxu0 0
        %1007 = vmatpush1.bf16.xpose.msra.mxu0 0
        %1008 = vmatprep.subr.bf16.mxu0 0
        %1009 = vmatpush1.bf16.xpose.msra.mxu0 0
        %1010 = vmatprep.subr.bf16.mxu0 0
        %1011 = vmatpush1.bf16.xpose.msra.mxu0 0
        %1012 = vmatprep.mubr.bf16.mxu0 0
        %1013 = vmatmul.mubr.bf16.gmra.mrb[0].mxu0 %v945
        %v1014 = vpop.f32.mrb[0].mxu0
        %v1015 = vadd.f32 %v887, %v1014
        %v1016 = vpop.f32.mrb[0].mxu0
        %v1017 = vpop.f32.mrb[0].mxu0
        %v1018 = vadd.f32 %v892, %v1017
        %v1019 = vpop.f32.mrb[0].mxu0
        %1020 = vmatprep.mubr.bf16.mxu0 0
        %1021 = vmatmul.mubr.bf16.gmra.mrb[0].mxu0 %v948
        %v1022 = vpop.f32.mrb[0].mxu0
        %v1023 = vadd.f32 %v897, %v1022
        %v1024 = vpop.f32.mrb[0].mxu0
        %v1025 = vpop.f32.mrb[0].mxu0
        %v1026 = vadd.f32 %v902, %v1025
        %v1027 = vpop.f32.mrb[0].mxu0
        %1028 = vmatprep.mubr.bf16.mxu0 0
        %1029 = vmatmul.mubr.bf16.gmra.mrb[0].mxu0 %v951
        %v1030 = vpop.f32.mrb[0].mxu0
        %v1031 = vadd.f32 %v907, %v1030
        %v1032 = vpop.f32.mrb[0].mxu0
        %v1033 = vpop.f32.mrb[0].mxu0
        %v1034 = vadd.f32 %v912, %v1033
        %v1035 = vpop.f32.mrb[0].mxu0
        %1036 = vmatprep.mubr.bf16.mxu0 0
        %1037 = vmatmul.mubr.bf16.gmra.mrb[0].mxu0 %v954
        %v1038 = vpop.f32.mrb[0].mxu0
        %v1039 = vadd.f32 %v917, %v1038
        %v1040 = vpop.f32.mrb[0].mxu0
        %v1041 = vpop.f32.mrb[0].mxu0
        %v1042 = vadd.f32 %v922, %v1041
        %v1043 = vpop.f32.mrb[0].mxu0
        %1044 = vdwg.mxu0
        %v1045 = vpack.c.bf16 %v1018, %v1015
        %v1046 = vpack.c.bf16 %v1026, %v1023
        %v1047 = vpack.c.bf16 %v1034, %v1031
        %v1048 = vpack.c.bf16 %v1042, %v1039
        %v1049 = vld [vmem:[%s7] sm:$0xf]
        %v1050 = vld [vmem:[%s7 + $0x4] sm:$0xf]
        %v1051 = vld [vmem:[%s7 + $0x8] sm:$0xf]
        %v1052 = vld [vmem:[%s7 + $0xc] sm:$0xf]
        %v1053 = vld [vmem:[%s7 + $0x10] sm:$0xf]
        %v1054 = vld [vmem:[%s7 + $0x14] sm:$0xf]
        %v1055 = vld [vmem:[%s7 + $0x18] sm:$0xf]
        %v1056 = vld [vmem:[%s7 + $0x1c] sm:$0xf]
        %v1057 = vld [vmem:[%s8] sm:$0xff]
        %v1058 = vld [vmem:[%s8 + $0x8] sm:$0xff]
        %v1059 = vld [vmem:[%s8 + $0x10] sm:$0xff]
        %v1060 = vld [vmem:[%s8 + $0x18] sm:$0xff]
        %v1061 = vld [vmem:[%s8 + $0x20] sm:$0xff]
        %v1062 = vld [vmem:[%s8 + $0x28] sm:$0xff]
        %v1063 = vld [vmem:[%s8 + $0x30] sm:$0xff]
        %v1064 = vld [vmem:[%s8 + $0x38] sm:$0xff]
        %1066 = vset.pattern.permute.xlu0 0
        %1067 = vperm.xlu0 %1066, %v1057
        %v1068 = vpop.permute.xlu0 %1067
        %1071 = vset.pattern.permute.xlu0 0
        %1072 = vperm.xlu0 %1071, %v1058
        %v1073 = vpop.permute.xlu0 %1072
        %1076 = vset.pattern.permute.xlu0 0
        %1077 = vperm.xlu0 %1076, %v1059
        %v1078 = vpop.permute.xlu0 %1077
        %1081 = vset.pattern.permute.xlu0 0
        %1082 = vperm.xlu0 %1081, %v1060
        %v1083 = vpop.permute.xlu0 %1082
        %1086 = vset.pattern.permute.xlu0 0
        %1087 = vperm.xlu0 %1086, %v1061
        %v1088 = vpop.permute.xlu0 %1087
        %1091 = vset.pattern.permute.xlu0 0
        %1092 = vperm.xlu0 %1091, %v1062
        %v1093 = vpop.permute.xlu0 %1092
        %1096 = vset.pattern.permute.xlu0 0
        %1097 = vperm.xlu0 %1096, %v1063
        %v1098 = vpop.permute.xlu0 %1097
        %1101 = vset.pattern.permute.xlu0 0
        %1102 = vperm.xlu0 %1101, %v1064
        %v1103 = vpop.permute.xlu0 %1102
        %v1113 = vunpack.c.l.b16 %v1049
        %v1114 = vunpack.c.l.b16 %v1050
        %v1115 = vunpack.c.l.b16 %v1051
        %v1116 = vunpack.c.l.b16 %v1052
        %v1117 = vunpack.c.l.b16 %v1053
        %v1118 = vunpack.c.l.b16 %v1054
        %v1119 = vunpack.c.l.b16 %v1055
        %v1120 = vunpack.c.l.b16 %v1056
        %v1121 = vpack.c.b16 %v1114, %v1113
        %v1122 = vpack.c.b16 %v1116, %v1115
        %v1123 = vpack.c.b16 %v1118, %v1117
        %v1124 = vpack.c.b16 %v1120, %v1119
        %v1126 = vsel %vm609, %v1121, 0
        %v1129 = vsel %vm609, %v1122, 0
        %v1132 = vsel %vm609, %v1123, 0
        %v1135 = vsel %vm609, %v1124, 0
        %1137 = vmatprep.subr.bf16.mxu0 0
        %1138 = vmatpush1.bf16.xpose.msra.mxu0 %v957
        %1139 = vmatprep.subr.bf16.mxu0 0
        %1140 = vmatpush1.bf16.xpose.msra.mxu0 %v960
        %1141 = vmatprep.subr.bf16.mxu0 0
        %1142 = vmatpush1.bf16.xpose.msra.mxu0 %v963
        %1143 = vmatprep.subr.bf16.mxu0 0
        %1144 = vmatpush1.bf16.xpose.msra.mxu0 %v966
        %1145 = vmatprep.subr.bf16.mxu0 0
        %1146 = vmatpush1.bf16.xpose.msra.mxu0 %v969
        %1147 = vmatprep.subr.bf16.mxu0 0
        %1148 = vmatpush1.bf16.xpose.msra.mxu0 %v972
        %1149 = vmatprep.subr.bf16.mxu0 0
        %1150 = vmatpush1.bf16.xpose.msra.mxu0 %v975
        %1151 = vmatprep.subr.bf16.mxu0 0
        %1152 = vmatpush1.bf16.xpose.msra.mxu0 %v978
        %1153 = vmatprep.subr.bf16.mxu0 0
        %1154 = vmatpush1.bf16.xpose.msra.mxu0 0
        %1155 = vmatprep.subr.bf16.mxu0 0
        %1156 = vmatpush1.bf16.xpose.msra.mxu0 0
        %1157 = vmatprep.subr.bf16.mxu0 0
        %1158 = vmatpush1.bf16.xpose.msra.mxu0 0
        %1159 = vmatprep.subr.bf16.mxu0 0
        %1160 = vmatpush1.bf16.xpose.msra.mxu0 0
        %1161 = vmatprep.subr.bf16.mxu0 0
        %1162 = vmatpush1.bf16.xpose.msra.mxu0 0
        %1163 = vmatprep.subr.bf16.mxu0 0
        %1164 = vmatpush1.bf16.xpose.msra.mxu0 0
        %1165 = vmatprep.subr.bf16.mxu0 0
        %1166 = vmatpush1.bf16.xpose.msra.mxu0 0
        %1167 = vmatprep.subr.bf16.mxu0 0
        %1168 = vmatpush1.bf16.xpose.msra.mxu0 0
        %1169 = vmatprep.mubr.bf16.mxu0 0
        %1170 = vmatmul.mubr.bf16.gmra.mrb[0].mxu0 %v1126
        %v1171 = vpop.f32.mrb[0].mxu0
        %v1172 = vadd.f32 %v1068, %v1171
        %v1173 = vpop.f32.mrb[0].mxu0
        %v1174 = vpop.f32.mrb[0].mxu0
        %v1175 = vadd.f32 %v1073, %v1174
        %v1176 = vpop.f32.mrb[0].mxu0
        %1177 = vmatprep.mubr.bf16.mxu0 0
        %1178 = vmatmul.mubr.bf16.gmra.mrb[0].mxu0 %v1129
        %v1179 = vpop.f32.mrb[0].mxu0
        %v1180 = vadd.f32 %v1078, %v1179
        %v1181 = vpop.f32.mrb[0].mxu0
        %v1182 = vpop.f32.mrb[0].mxu0
        %v1183 = vadd.f32 %v1083, %v1182
        %v1184 = vpop.f32.mrb[0].mxu0
        %1185 = vmatprep.mubr.bf16.mxu0 0
        %1186 = vmatmul.mubr.bf16.gmra.mrb[0].mxu0 %v1132
        %v1187 = vpop.f32.mrb[0].mxu0
        %v1188 = vadd.f32 %v1088, %v1187
        %v1189 = vpop.f32.mrb[0].mxu0
        %v1190 = vpop.f32.mrb[0].mxu0
        %v1191 = vadd.f32 %v1093, %v1190
        %v1192 = vpop.f32.mrb[0].mxu0
        %1193 = vmatprep.mubr.bf16.mxu0 0
        %1194 = vmatmul.mubr.bf16.gmra.mrb[0].mxu0 %v1135
        %v1195 = vpop.f32.mrb[0].mxu0
        %v1196 = vadd.f32 %v1098, %v1195
        %v1197 = vpop.f32.mrb[0].mxu0
        %v1198 = vpop.f32.mrb[0].mxu0
        %v1199 = vadd.f32 %v1103, %v1198
        %v1200 = vpop.f32.mrb[0].mxu0
        %1201 = vdwg.mxu0
        %v1202 = vpack.c.bf16 %v1175, %v1172
        %v1203 = vpack.c.bf16 %v1183, %v1180
        %v1204 = vpack.c.bf16 %v1191, %v1188
        %v1205 = vpack.c.bf16 %v1199, %v1196
        %1206 = vst [vmem:[#allocation2] sm:$0xff] %v1045
        %1207 = vst [vmem:[#allocation3] sm:$0xff] %v1202
        %s1208 = scalar_lea.vmem [#allocation2], 8
        %1209 = vst [vmem:[%s1208] sm:$0xff] %v1046
        %s1210 = scalar_lea.vmem [#allocation3], 8
        %1211 = vst [vmem:[%s1210] sm:$0xff] %v1203
        %s1212 = scalar_lea.vmem [#allocation2], 16
        %1213 = vst [vmem:[%s1212] sm:$0xff] %v1047
        %s1214 = scalar_lea.vmem [#allocation3], 16
        %1215 = vst [vmem:[%s1214] sm:$0xff] %v1204
        %s1216 = scalar_lea.vmem [#allocation2], 24
        %1217 = vst [vmem:[%s1216] sm:$0xff] %v1048
        %s1218 = scalar_lea.vmem [#allocation3], 24
        %1219 = vst [vmem:[%s1218] sm:$0xff] %v1205
      $region84: #{tpu_custom_call.1} parent=79 // pred_fallthru
        _
      %v1220 = vld [vmem:[%s550] sm:$0xff]
      %v1221 = vld [vmem:[%s550 + $0x8] sm:$0xff]
      %v1222 = vld [vmem:[%s550 + $0x10] sm:$0xff]
      %v1223 = vld [vmem:[%s550 + $0x18] sm:$0xff]
      %v1224 = vld [vmem:[%s550 + $0x20] sm:$0xff]
      %v1225 = vld [vmem:[%s550 + $0x28] sm:$0xff]
      %v1226 = vld [vmem:[%s550 + $0x30] sm:$0xff]
      %v1227 = vld [vmem:[%s550 + $0x38] sm:$0xff]
      %vm1228 = vcmask 523264
      %v1229 = vsel %vm1228, %v1220, 0.0
      %1230 = vadd.xlane.f32.xlu0 %v1229
      %v1231 = vpop.xlane.xlu0 %1230
      %v1232 = vsel %vm1228, %v1221, 0.0
      %1233 = vadd.xlane.f32.xlu0 %v1232
      %v1234 = vpop.xlane.xlu0 %1233
      %v1235 = vsel %vm1228, %v1222, 0.0
      %1236 = vadd.xlane.f32.xlu0 %v1235
      %v1237 = vpop.xlane.xlu0 %1236
      %v1238 = vsel %vm1228, %v1223, 0.0
      %1239 = vadd.xlane.f32.xlu0 %v1238
      %v1240 = vpop.xlane.xlu0 %1239
      %v1241 = vsel %vm1228, %v1224, 0.0
      %1242 = vadd.xlane.f32.xlu0 %v1241
      %v1243 = vpop.xlane.xlu0 %1242
      %v1244 = vsel %vm1228, %v1225, 0.0
      %1245 = vadd.xlane.f32.xlu0 %v1244
      %v1246 = vpop.xlane.xlu0 %1245
      %v1247 = vsel %vm1228, %v1226, 0.0
      %1248 = vadd.xlane.f32.xlu0 %v1247
      %v1249 = vpop.xlane.xlu0 %1248
      %v1250 = vsel %vm1228, %v1227, 0.0
      %1251 = vadd.xlane.f32.xlu0 %v1250
      %v1252 = vpop.xlane.xlu0 %1251
      %v1253 = vrcp.pop 64.0
      %v1254 = vmul.f32 %v1231, %v1253
      %v1255 = vmul.f32 %v1234, %v1253
      %v1256 = vmul.f32 %v1237, %v1253
      %v1257 = vmul.f32 %v1240, %v1253
      %v1258 = vmul.f32 %v1243, %v1253
      %v1259 = vmul.f32 %v1246, %v1253
      %v1260 = vmul.f32 %v1249, %v1253
      %v1261 = vmul.f32 %v1252, %v1253
      %v1262 = vsub.f32 %v1220, %v1254
      %v1263 = vsub.f32 %v1221, %v1255
      %v1264 = vsub.f32 %v1222, %v1256
      %v1265 = vsub.f32 %v1223, %v1257
      %v1266 = vsub.f32 %v1224, %v1258
      %v1267 = vsub.f32 %v1225, %v1259
      %v1268 = vsub.f32 %v1226, %v1260
      %v1269 = vsub.f32 %v1227, %v1261
      %v1270 = vmul.f32 %v1262, %v1262
      %v1271 = vmul.f32 %v1263, %v1263
      %v1272 = vmul.f32 %v1264, %v1264
      %v1273 = vmul.f32 %v1265, %v1265
      %v1274 = vmul.f32 %v1266, %v1266
      %v1275 = vmul.f32 %v1267, %v1267
      %v1276 = vmul.f32 %v1268, %v1268
      %v1277 = vmul.f32 %v1269, %v1269
      %v1278 = vsel %vm1228, %v1270, 0.0
      %1279 = vadd.xlane.f32.xlu0 %v1278
      %v1280 = vpop.xlane.xlu0 %1279
      %v1281 = vsel %vm1228, %v1271, 0.0
      %1282 = vadd.xlane.f32.xlu0 %v1281
      %v1283 = vpop.xlane.xlu0 %1282
      %v1284 = vsel %vm1228, %v1272, 0.0
      %1285 = vadd.xlane.f32.xlu0 %v1284
      %v1286 = vpop.xlane.xlu0 %1285
      %v1287 = vsel %vm1228, %v1273, 0.0
      %1288 = vadd.xlane.f32.xlu0 %v1287
      %v1289 = vpop.xlane.xlu0 %1288
      %v1290 = vsel %vm1228, %v1274, 0.0
      %1291 = vadd.xlane.f32.xlu0 %v1290
      %v1292 = vpop.xlane.xlu0 %1291
      %v1293 = vsel %vm1228, %v1275, 0.0
      %1294 = vadd.xlane.f32.xlu0 %v1293
      %v1295 = vpop.xlane.xlu0 %1294
      %v1296 = vsel %vm1228, %v1276, 0.0
      %1297 = vadd.xlane.f32.xlu0 %v1296
      %v1298 = vpop.xlane.xlu0 %1297
      %v1299 = vsel %vm1228, %v1277, 0.0
      %1300 = vadd.xlane.f32.xlu0 %v1299
      %v1301 = vpop.xlane.xlu0 %1300
      %v1302 = vmul.f32 %v1280, %v1253
      %v1303 = vmul.f32 %v1283, %v1253
      %v1304 = vmul.f32 %v1286, %v1253
      %v1305 = vmul.f32 %v1289, %v1253
      %v1306 = vmul.f32 %v1292, %v1253
      %v1307 = vmul.f32 %v1295, %v1253
      %v1308 = vmul.f32 %v1298, %v1253
      %v1309 = vmul.f32 %v1301, %v1253
      %v1310 = vadd.f32 %v1302, 1e-06
      %v1311 = vadd.f32 %v1303, 1e-06
      %v1312 = vadd.f32 %v1304, 1e-06
      %v1313 = vadd.f32 %v1305, 1e-06
      %v1314 = vadd.f32 %v1306, 1e-06
      %v1315 = vadd.f32 %v1307, 1e-06
      %v1316 = vadd.f32 %v1308, 1e-06
      %v1317 = vadd.f32 %v1309, 1e-06
      %v1318 = vrsqrt.pop %v1310
      %v1319 = vrsqrt.pop %v1311
      %v1320 = vrsqrt.pop %v1312
      %v1321 = vrsqrt.pop %v1313
      %v1322 = vrsqrt.pop %v1314
      %v1323 = vrsqrt.pop %v1315
      %v1324 = vrsqrt.pop %v1316
      %v1325 = vrsqrt.pop %v1317
      %v1326 = vmul.f32 %v1262, %v1318
      %v1327 = vmul.f32 %v1263, %v1319
      %v1328 = vmul.f32 %v1264, %v1320
      %v1329 = vmul.f32 %v1265, %v1321
      %v1330 = vmul.f32 %v1266, %v1322
      %v1331 = vmul.f32 %v1267, %v1323
      %v1332 = vmul.f32 %v1268, %v1324
      %v1333 = vmul.f32 %v1269, %v1325
      %v1334 = vadd.f32 %v572, 1.0
      %v1335 = vlaneseq
      %v1336 = vshrl.u32 %v1335, 7
      %v1337 = vsub.s32 1, %v1336
      %v1338 = vrot.slane %v1334, %v1337
      %v1339 = vmul.f32 %v1326, %v1338
      %v1340 = vmul.f32 %v1327, %v1338
      %v1341 = vmul.f32 %v1328, %v1338
      %v1342 = vmul.f32 %v1329, %v1338
      %v1343 = vmul.f32 %v1330, %v1338
      %v1344 = vmul.f32 %v1331, %v1338
      %v1345 = vmul.f32 %v1332, %v1338
      %v1346 = vmul.f32 %v1333, %v1338
      %v1347 = vlaneseq
      %v1348 = vshrl.u32 %v1347, 7
      %v1349 = vsub.s32 0, %v1348
      %v1350 = vrot.slane %v572, %v1349
      %v1351 = vadd.f32 %v1339, %v1350
      %v1352 = vadd.f32 %v1340, %v1350
      %v1353 = vadd.f32 %v1341, %v1350
      %v1354 = vadd.f32 %v1342, %v1350
      %v1355 = vadd.f32 %v1343, %v1350
      %v1356 = vadd.f32 %v1344, %v1350
      %v1357 = vadd.f32 %v1345, %v1350
      %v1358 = vadd.f32 %v1346, %v1350
      %v1359 = vpack.c.bf16 %v1352, %v1351
      %v1360 = vpack.c.bf16 %v1354, %v1353
      %v1361 = vpack.c.bf16 %v1356, %v1355
      %v1362 = vpack.c.bf16 %v1358, %v1357
      %v1363 = vld [vmem:[%s3] sm:$0xf]
      %v1364 = vld [vmem:[%s3 + $0x4] sm:$0xf]
      %v1365 = vld [vmem:[%s3 + $0x8] sm:$0xf]
      %v1366 = vld [vmem:[%s3 + $0xc] sm:$0xf]
      %v1367 = vld [vmem:[%s3 + $0x10] sm:$0xf]
      %v1368 = vld [vmem:[%s3 + $0x14] sm:$0xf]
      %v1369 = vld [vmem:[%s3 + $0x18] sm:$0xf]
      %v1370 = vld [vmem:[%s3 + $0x1c] sm:$0xf]
      %v1371 = vld [vmem:[%s4] sm:$0x1]
      %v1373 = vlaneseq
      %v1374 = vshrl.u32 %v1373, 7
      %v1375 = vsub.s32 0, %v1374
      %v1376 = vrot.slane %v1371, %v1375
      %v1386 = vunpack.c.l.b16 %v1363
      %v1387 = vunpack.c.l.b16 %v1364
      %v1388 = vunpack.c.l.b16 %v1365
      %v1389 = vunpack.c.l.b16 %v1366
      %v1390 = vunpack.c.l.b16 %v1367
      %v1391 = vunpack.c.l.b16 %v1368
      %v1392 = vunpack.c.l.b16 %v1369
      %v1393 = vunpack.c.l.b16 %v1370
      %v1394 = vpack.c.b16 %v1387, %v1386
      %v1395 = vpack.c.b16 %v1389, %v1388
      %v1396 = vpack.c.b16 %v1391, %v1390
      %v1397 = vpack.c.b16 %v1393, %v1392
      %v1403 = vsel %vm1228, %v1359, 0
      %v1406 = vsel %vm1228, %v1360, 0
      %v1409 = vsel %vm1228, %v1361, 0
      %v1412 = vsel %vm1228, %v1362, 0
      %1414 = vmatprep.subr.bf16.mxu0 0
      %1415 = vmatpush1.bf16.msra.mxu0 %v1394
      %1416 = vmatprep.subr.bf16.mxu0 0
      %1417 = vmatpush1.bf16.msra.mxu0 %v1395
      %1418 = vmatprep.subr.bf16.mxu0 0
      %1419 = vmatpush1.bf16.msra.mxu0 %v1396
      %1420 = vmatprep.subr.bf16.mxu0 0
      %1421 = vmatpush1.bf16.msra.mxu0 %v1397
      %1422 = vmatprep.subr.bf16.mxu0 0
      %1423 = vmatpush1.bf16.msra.mxu0 0
      %1424 = vmatprep.subr.bf16.mxu0 0
      %1425 = vmatpush1.bf16.msra.mxu0 0
      %1426 = vmatprep.subr.bf16.mxu0 0
      %1427 = vmatpush1.bf16.msra.mxu0 0
      %1428 = vmatprep.subr.bf16.mxu0 0
      %1429 = vmatpush1.bf16.msra.mxu0 0
      %1430 = vmatprep.subr.bf16.mxu0 0
      %1431 = vmatpush1.bf16.msra.mxu0 0
      %1432 = vmatprep.subr.bf16.mxu0 0
      %1433 = vmatpush1.bf16.msra.mxu0 0
      %1434 = vmatprep.subr.bf16.mxu0 0
      %1435 = vmatpush1.bf16.msra.mxu0 0
      %1436 = vmatprep.subr.bf16.mxu0 0
      %1437 = vmatpush1.bf16.msra.mxu0 0
      %1438 = vmatprep.subr.bf16.mxu0 0
      %1439 = vmatpush1.bf16.msra.mxu0 0
      %1440 = vmatprep.subr.bf16.mxu0 0
      %1441 = vmatpush1.bf16.msra.mxu0 0
      %1442 = vmatprep.subr.bf16.mxu0 0
      %1443 = vmatpush1.bf16.msra.mxu0 0
      %1444 = vmatprep.subr.bf16.mxu0 0
      %1445 = vmatpush1.bf16.msra.mxu0 0
      %1446 = vmatprep.mubr.bf16.mxu0 0
      %1447 = vmatmul.mubr.bf16.gmra.mrb[0].mxu0 %v1403
      %v1448 = vpop.f32.mrb[0].mxu0
      %v1449 = vadd.f32 %v1376, %v1448
      %v1450 = vpop.f32.mrb[0].mxu0
      %v1451 = vpop.f32.mrb[0].mxu0
      %v1452 = vadd.f32 %v1376, %v1451
      %v1453 = vpop.f32.mrb[0].mxu0
      %1454 = vmatprep.mubr.bf16.mxu0 0
      %1455 = vmatmul.mubr.bf16.gmra.mrb[0].mxu0 %v1406
      %v1456 = vpop.f32.mrb[0].mxu0
      %v1457 = vadd.f32 %v1376, %v1456
      %v1458 = vpop.f32.mrb[0].mxu0
      %v1459 = vpop.f32.mrb[0].mxu0
      %v1460 = vadd.f32 %v1376, %v1459
      %v1461 = vpop.f32.mrb[0].mxu0
      %1462 = vmatprep.mubr.bf16.mxu0 0
      %1463 = vmatmul.mubr.bf16.gmra.mrb[0].mxu0 %v1409
      %v1464 = vpop.f32.mrb[0].mxu0
      %v1465 = vadd.f32 %v1376, %v1464
      %v1466 = vpop.f32.mrb[0].mxu0
      %v1467 = vpop.f32.mrb[0].mxu0
      %v1468 = vadd.f32 %v1376, %v1467
      %v1469 = vpop.f32.mrb[0].mxu0
      %1470 = vmatprep.mubr.bf16.mxu0 0
      %1471 = vmatmul.mubr.bf16.gmra.mrb[0].mxu0 %v1412
      %v1472 = vpop.f32.mrb[0].mxu0
      %v1473 = vadd.f32 %v1376, %v1472
      %v1474 = vpop.f32.mrb[0].mxu0
      %v1475 = vpop.f32.mrb[0].mxu0
      %v1476 = vadd.f32 %v1376, %v1475
      %v1477 = vpop.f32.mrb[0].mxu0
      %1478 = vdwg.mxu0
      %v1479 = vmul.f32 %v1449, 0.25
      %v1480 = vmul.f32 %v1452, 0.25
      %v1481 = vmul.f32 %v1457, 0.25
      %v1482 = vmul.f32 %v1460, 0.25
      %v1483 = vmul.f32 %v1465, 0.25
      %v1484 = vmul.f32 %v1468, 0.25
      %v1485 = vmul.f32 %v1473, 0.25
      %v1486 = vmul.f32 %v1476, 0.25
      %v1487 = vpack.c.bf16 %v1480, %v1479
      %v1488 = vpack.c.bf16 %v1482, %v1481
      %v1489 = vpack.c.bf16 %v1484, %v1483
      %v1490 = vpack.c.bf16 %v1486, %v1485
      %vm1491 = vcmask 130048
      %1492 = vst.msk [vmem:[#allocation4] sm:$0xff] %vm1491, %v1487
      %1493 = vst.msk [vmem:[#allocation4 + $0x8] sm:$0xff] %vm1491, %v1488
      %1494 = vst.msk [vmem:[#allocation4 + $0x10] sm:$0xff] %vm1491, %v1489
      %1495 = vst.msk [vmem:[#allocation4 + $0x18] sm:$0xff] %vm1491, %v1490
      %1500 = vrot.lane.b32.xlu0 %v1487, 112
      %v1501 = vpop.permute.xlu0 %1500
      %1502 = vrot.lane.b32.xlu0 %v1488, 112
      %v1503 = vpop.permute.xlu0 %1502
      %1504 = vrot.lane.b32.xlu0 %v1489, 112
      %v1505 = vpop.permute.xlu0 %1504
      %1506 = vrot.lane.b32.xlu0 %v1490, 112
      %v1507 = vpop.permute.xlu0 %1506
      %s1512 = scalar_lea.vmem [#allocation4], 32
      %1513 = vst.msk [vmem:[%s1512] sm:$0xff] %vm1491, %v1501
      %1514 = vst.msk [vmem:[%s1512 + $0x8] sm:$0xff] %vm1491, %v1503
      %1515 = vst.msk [vmem:[%s1512 + $0x10] sm:$0xff] %vm1491, %v1505
      %1516 = vst.msk [vmem:[%s1512 + $0x18] sm:$0xff] %vm1491, %v1507
      %1517 = vrot.lane.b32.xlu0 %v1487, 96
      %v1518 = vpop.permute.xlu0 %1517
      %1519 = vrot.lane.b32.xlu0 %v1488, 96
      %v1520 = vpop.permute.xlu0 %1519
      %1521 = vrot.lane.b32.xlu0 %v1489, 96
      %v1522 = vpop.permute.xlu0 %1521
      %1523 = vrot.lane.b32.xlu0 %v1490, 96
      %v1524 = vpop.permute.xlu0 %1523
      %s1529 = scalar_lea.vmem [#allocation4], 64
      %1530 = vst.msk [vmem:[%s1529] sm:$0xff] %vm1491, %v1518
      %1531 = vst.msk [vmem:[%s1529 + $0x8] sm:$0xff] %vm1491, %v1520
      %1532 = vst.msk [vmem:[%s1529 + $0x10] sm:$0xff] %vm1491, %v1522
      %1533 = vst.msk [vmem:[%s1529 + $0x18] sm:$0xff] %vm1491, %v1524
      %1534 = vrot.lane.b32.xlu0 %v1487, 80
      %v1535 = vpop.permute.xlu0 %1534
      %1536 = vrot.lane.b32.xlu0 %v1488, 80
      %v1537 = vpop.permute.xlu0 %1536
      %1538 = vrot.lane.b32.xlu0 %v1489, 80
      %v1539 = vpop.permute.xlu0 %1538
      %1540 = vrot.lane.b32.xlu0 %v1490, 80
      %v1541 = vpop.permute.xlu0 %1540
      %s1546 = scalar_lea.vmem [#allocation4], 96
      %1547 = vst.msk [vmem:[%s1546] sm:$0xff] %vm1491, %v1535
      %1548 = vst.msk [vmem:[%s1546 + $0x8] sm:$0xff] %vm1491, %v1537
      %1549 = vst.msk [vmem:[%s1546 + $0x10] sm:$0xff] %vm1491, %v1539
      %1550 = vst.msk [vmem:[%s1546 + $0x18] sm:$0xff] %vm1491, %v1541
      loop: start=0, step=1, limit=4
      $region85: #{tpu_custom_call.1} parent=79 // loop_pre_header
        _
      $region86: #{tpu_custom_call.1} parent=79 // loop_header
        %s1552 = sphi 0, %s1556
        %p1553 = scmp.ge.s32.totalorder %s1552, 4
      $region87: #{tpu_custom_call.1} parent=79 // loop_header_branch
        %1555 = sbr.rel (%p1553) target = $region91
      $region88: #{tpu_custom_call.1} parent=79 // loop_body
        %s1557 = smul.u32 %s1552, 4
        %s1558 = smul.addr %s1557, 8
        %s1559 = scalar_lea.vmem [#allocation4], %s1558
        %v1560 = vld [vmem:[%s1559] sm:$0xff]
        %v1561 = vld [vmem:[%s1559 + $0x8] sm:$0xff]
        %v1562 = vld [vmem:[%s1559 + $0x10] sm:$0xff]
        %v1563 = vld [vmem:[%s1559 + $0x18] sm:$0xff]
        %s1564 = smul.addr %s1552, 8
        %s1565 = scalar_lea.vmem [#allocation2], %s1564
        %v1566 = vld [vmem:[%s1565] sm:$0xff]
        %v1568 = vsel %vm1491, %v1560, 0
        %v1571 = vsel %vm1491, %v1561, 0
        %v1574 = vsel %vm1491, %v1562, 0
        %v1577 = vsel %vm1491, %v1563, 0
        %1579 = vmatprep.subr.bf16.mxu0 0
        %1580 = vmatpush1.bf16.msra.mxu0 %v1566
        %1581 = vmatprep.subr.bf16.mxu0 0
        %1582 = vmatpush1.bf16.msra.mxu0 0
        %1583 = vmatprep.subr.bf16.mxu0 0
        %1584 = vmatpush1.bf16.msra.mxu0 0
        %1585 = vmatprep.subr.bf16.mxu0 0
        %1586 = vmatpush1.bf16.msra.mxu0 0
        %1587 = vmatprep.subr.bf16.mxu0 0
        %1588 = vmatpush1.bf16.msra.mxu0 0
        %1589 = vmatprep.subr.bf16.mxu0 0
        %1590 = vmatpush1.bf16.msra.mxu0 0
        %1591 = vmatprep.subr.bf16.mxu0 0
        %1592 = vmatpush1.bf16.msra.mxu0 0
        %1593 = vmatprep.subr.bf16.mxu0 0
        %1594 = vmatpush1.bf16.msra.mxu0 0
        %1595 = vmatprep.subr.bf16.mxu0 0
        %1596 = vmatpush1.bf16.msra.mxu0 0
        %1597 = vmatprep.subr.bf16.mxu0 0
        %1598 = vmatpush1.bf16.msra.mxu0 0
        %1599 = vmatprep.subr.bf16.mxu0 0
        %1600 = vmatpush1.bf16.msra.mxu0 0
        %1601 = vmatprep.subr.bf16.mxu0 0
        %1602 = vmatpush1.bf16.msra.mxu0 0
        %1603 = vmatprep.subr.bf16.mxu0 0
        %1604 = vmatpush1.bf16.msra.mxu0 0
        %1605 = vmatprep.subr.bf16.mxu0 0
        %1606 = vmatpush1.bf16.msra.mxu0 0
        %1607 = vmatprep.subr.bf16.mxu0 0
        %1608 = vmatpush1.bf16.msra.mxu0 0
        %1609 = vmatprep.subr.bf16.mxu0 0
        %1610 = vmatpush1.bf16.msra.mxu0 0
        %1611 = vmatprep.mubr.bf16.mxu0 0
        %1612 = vmatmul.mubr.bf16.gmra.mrb[0].mxu0 %v1568
        %v1613 = vpop.f32.mrb[0].mxu0
        %v1614 = vadd.f32 0.0, %v1613
        %v1615 = vpop.f32.mrb[0].mxu0
        %v1616 = vpop.f32.mrb[0].mxu0
        %v1617 = vadd.f32 0.0, %v1616
        %v1618 = vpop.f32.mrb[0].mxu0
        %1619 = vmatprep.mubr.bf16.mxu0 0
        %1620 = vmatmul.mubr.bf16.gmra.mrb[0].mxu0 %v1571
        %v1621 = vpop.f32.mrb[0].mxu0
        %v1622 = vadd.f32 0.0, %v1621
        %v1623 = vpop.f32.mrb[0].mxu0
        %v1624 = vpop.f32.mrb[0].mxu0
        %v1625 = vadd.f32 0.0, %v1624
        %v1626 = vpop.f32.mrb[0].mxu0
        %1627 = vmatprep.mubr.bf16.mxu0 0
        %1628 = vmatmul.mubr.bf16.gmra.mrb[0].mxu0 %v1574
        %v1629 = vpop.f32.mrb[0].mxu0
        %v1630 = vadd.f32 0.0, %v1629
        %v1631 = vpop.f32.mrb[0].mxu0
        %v1632 = vpop.f32.mrb[0].mxu0
        %v1633 = vadd.f32 0.0, %v1632
        %v1634 = vpop.f32.mrb[0].mxu0
        %1635 = vmatprep.mubr.bf16.mxu0 0
        %1636 = vmatmul.mubr.bf16.gmra.mrb[0].mxu0 %v1577
        %v1637 = vpop.f32.mrb[0].mxu0
        %v1638 = vadd.f32 0.0, %v1637
        %v1639 = vpop.f32.mrb[0].mxu0
        %v1640 = vpop.f32.mrb[0].mxu0
        %v1641 = vadd.f32 0.0, %v1640
        %v1642 = vpop.f32.mrb[0].mxu0
        %1643 = vdwg.mxu0
        %1644 = vmax.xlane.f32.xlu0 %v1614
        %v1645 = vpop.xlane.xlu0 %1644
        %1646 = vmax.xlane.f32.xlu0 %v1617
        %v1647 = vpop.xlane.xlu0 %1646
        %1648 = vmax.xlane.f32.xlu0 %v1622
        %v1649 = vpop.xlane.xlu0 %1648
        %1650 = vmax.xlane.f32.xlu0 %v1625
        %v1651 = vpop.xlane.xlu0 %1650
        %1652 = vmax.xlane.f32.xlu0 %v1630
        %v1653 = vpop.xlane.xlu0 %1652
        %1654 = vmax.xlane.f32.xlu0 %v1633
        %v1655 = vpop.xlane.xlu0 %1654
        %1656 = vmax.xlane.f32.xlu0 %v1638
        %v1657 = vpop.xlane.xlu0 %1656
        %1658 = vmax.xlane.f32.xlu0 %v1641
        %v1659 = vpop.xlane.xlu0 %1658
        %v1660 = vsub.f32 %v1614, %v1645
        %v1661 = vsub.f32 %v1617, %v1647
        %v1662 = vsub.f32 %v1622, %v1649
        %v1663 = vsub.f32 %v1625, %v1651
        %v1664 = vsub.f32 %v1630, %v1653
        %v1665 = vsub.f32 %v1633, %v1655
        %v1666 = vsub.f32 %v1638, %v1657
        %v1667 = vsub.f32 %v1641, %v1659
        %v1668 = vmul.f32 %v1660, 1.442695
        %v1669 = vpow.pop %v1668
        %v1670 = vmul.f32 %v1661, 1.442695
        %v1671 = vpow.pop %v1670
        %v1672 = vmul.f32 %v1662, 1.442695
        %v1673 = vpow.pop %v1672
        %v1674 = vmul.f32 %v1663, 1.442695
        %v1675 = vpow.pop %v1674
        %v1676 = vmul.f32 %v1664, 1.442695
        %v1677 = vpow.pop %v1676
        %v1678 = vmul.f32 %v1665, 1.442695
        %v1679 = vpow.pop %v1678
        %v1680 = vmul.f32 %v1666, 1.442695
        %v1681 = vpow.pop %v1680
        %v1682 = vmul.f32 %v1667, 1.442695
        %v1683 = vpow.pop %v1682
        %1684 = vadd.xlane.f32.xlu0 %v1669
        %v1685 = vpop.xlane.xlu0 %1684
        %1686 = vadd.xlane.f32.xlu0 %v1671
        %v1687 = vpop.xlane.xlu0 %1686
        %1688 = vadd.xlane.f32.xlu0 %v1673
        %v1689 = vpop.xlane.xlu0 %1688
        %1690 = vadd.xlane.f32.xlu0 %v1675
        %v1691 = vpop.xlane.xlu0 %1690
        %1692 = vadd.xlane.f32.xlu0 %v1677
        %v1693 = vpop.xlane.xlu0 %1692
        %1694 = vadd.xlane.f32.xlu0 %v1679
        %v1695 = vpop.xlane.xlu0 %1694
        %1696 = vadd.xlane.f32.xlu0 %v1681
        %v1697 = vpop.xlane.xlu0 %1696
        %1698 = vadd.xlane.f32.xlu0 %v1683
        %v1699 = vpop.xlane.xlu0 %1698
        %v1700 = vpack.c.bf16 %v1671, %v1669
        %v1701 = vpack.c.bf16 %v1675, %v1673
        %v1702 = vpack.c.bf16 %v1679, %v1677
        %v1703 = vpack.c.bf16 %v1683, %v1681
        %s1704 = smul.addr %s1552, 8
        %s1705 = scalar_lea.vmem [#allocation3], %s1704
        %v1706 = vld [vmem:[%s1705] sm:$0xff]
        %1707 = vmatprep.subr.bf16.mxu0 0
        %1708 = vmatpush1.bf16.xpose.msra.mxu0 %v1706
        %1709 = vmatprep.subr.bf16.mxu0 0
        %1710 = vmatpush1.bf16.xpose.msra.mxu0 0
        %1711 = vmatprep.subr.bf16.mxu0 0
        %1712 = vmatpush1.bf16.xpose.msra.mxu0 0
        %1713 = vmatprep.subr.bf16.mxu0 0
        %1714 = vmatpush1.bf16.xpose.msra.mxu0 0
        %1715 = vmatprep.subr.bf16.mxu0 0
        %1716 = vmatpush1.bf16.xpose.msra.mxu0 0
        %1717 = vmatprep.subr.bf16.mxu0 0
        %1718 = vmatpush1.bf16.xpose.msra.mxu0 0
        %1719 = vmatprep.subr.bf16.mxu0 0
        %1720 = vmatpush1.bf16.xpose.msra.mxu0 0
        %1721 = vmatprep.subr.bf16.mxu0 0
        %1722 = vmatpush1.bf16.xpose.msra.mxu0 0
        %1723 = vmatprep.subr.bf16.mxu0 0
        %1724 = vmatpush1.bf16.xpose.msra.mxu0 0
        %1725 = vmatprep.subr.bf16.mxu0 0
        %1726 = vmatpush1.bf16.xpose.msra.mxu0 0
        %1727 = vmatprep.subr.bf16.mxu0 0
        %1728 = vmatpush1.bf16.xpose.msra.mxu0 0
        %1729 = vmatprep.subr.bf16.mxu0 0
        %1730 = vmatpush1.bf16.xpose.msra.mxu0 0
        %1731 = vmatprep.subr.bf16.mxu0 0
        %1732 = vmatpush1.bf16.xpose.msra.mxu0 0
        %1733 = vmatprep.subr.bf16.mxu0 0
        %1734 = vmatpush1.bf16.xpose.msra.mxu0 0
        %1735 = vmatprep.subr.bf16.mxu0 0
        %1736 = vmatpush1.bf16.xpose.msra.mxu0 0
        %1737 = vmatprep.subr.bf16.mxu0 0
        %1738 = vmatpush1.bf16.xpose.msra.mxu0 0
        %1739 = vmatprep.mubr.bf16.mxu0 0
        %1740 = vmatmul.mubr.bf16.gmra.mrb[0].mxu0 %v1700
        %v1741 = vpop.f32.mrb[0].mxu0
        %v1742 = vadd.f32 0.0, %v1741
        %v1743 = vpop.f32.mrb[0].mxu0
        %v1744 = vpop.f32.mrb[0].mxu0
        %v1745 = vadd.f32 0.0, %v1744
        %v1746 = vpop.f32.mrb[0].mxu0
        %1747 = vmatprep.mubr.bf16.mxu0 0
        %1748 = vmatmul.mubr.bf16.gmra.mrb[0].mxu0 %v1701
        %v1749 = vpop.f32.mrb[0].mxu0
        %v1750 = vadd.f32 0.0, %v1749
        %v1751 = vpop.f32.mrb[0].mxu0
        %v1752 = vpop.f32.mrb[0].mxu0
        %v1753 = vadd.f32 0.0, %v1752
        %v1754 = vpop.f32.mrb[0].mxu0
        %1755 = vmatprep.mubr.bf16.mxu0 0
        %1756 = vmatmul.mubr.bf16.gmra.mrb[0].mxu0 %v1702
        %v1757 = vpop.f32.mrb[0].mxu0
        %v1758 = vadd.f32 0.0, %v1757
        %v1759 = vpop.f32.mrb[0].mxu0
        %v1760 = vpop.f32.mrb[0].mxu0
        %v1761 = vadd.f32 0.0, %v1760
        %v1762 = vpop.f32.mrb[0].mxu0
        %1763 = vmatprep.mubr.bf16.mxu0 0
        %1764 = vmatmul.mubr.bf16.gmra.mrb[0].mxu0 %v1703
        %v1765 = vpop.f32.mrb[0].mxu0
        %v1766 = vadd.f32 0.0, %v1765
        %v1767 = vpop.f32.mrb[0].mxu0
        %v1768 = vpop.f32.mrb[0].mxu0
        %v1769 = vadd.f32 0.0, %v1768
        %v1770 = vpop.f32.mrb[0].mxu0
        %1771 = vdwg.mxu0
        %v1772 = vrcp.pop %v1685
        %v1773 = vrcp.pop %v1687
        %v1774 = vrcp.pop %v1689
        %v1775 = vrcp.pop %v1691
        %v1776 = vrcp.pop %v1693
        %v1777 = vrcp.pop %v1695
        %v1778 = vrcp.pop %v1697
        %v1779 = vrcp.pop %v1699
        %v1780 = vmul.f32 %v1742, %v1772
        %v1781 = vmul.f32 %v1745, %v1773
        %v1782 = vmul.f32 %v1750, %v1774
        %v1783 = vmul.f32 %v1753, %v1775
        %v1784 = vmul.f32 %v1758, %v1776
        %v1785 = vmul.f32 %v1761, %v1777
        %v1786 = vmul.f32 %v1766, %v1778
        %v1787 = vmul.f32 %v1769, %v1779
        %v1788 = vpack.c.bf16 %v1781, %v1780
        %v1789 = vpack.c.bf16 %v1783, %v1782
        %v1790 = vpack.c.bf16 %v1785, %v1784
        %v1791 = vpack.c.bf16 %v1787, %v1786
        %s1792 = smul.addr %s1557, 8
        %s1793 = scalar_lea.vmem [#allocation5], %s1792
        %1794 = vst.msk [vmem:[%s1793] sm:$0xff] %vm1491, %v1788
        %1795 = vst.msk [vmem:[%s1793 + $0x8] sm:$0xff] %vm1491, %v1789
        %1796 = vst.msk [vmem:[%s1793 + $0x10] sm:$0xff] %vm1491, %v1790
        %1797 = vst.msk [vmem:[%s1793 + $0x18] sm:$0xff] %vm1491, %v1791
      $region89: #{tpu_custom_call.1} parent=79 // loop_footer
        %s1556 = sadd.s32 1, %s1552
      $region90: #{tpu_custom_call.1} parent=79 // loop_footer_branch
        %1551 = sbr.rel target = $region86
      $region91: #{tpu_custom_call.1} parent=79 // loop_exit
        _
      %v1798 = vld [vmem:[#allocation5] sm:$0xff]
      %v1799 = vld [vmem:[#allocation5 + $0x8] sm:$0xff]
      %v1800 = vld [vmem:[#allocation5 + $0x10] sm:$0xff]
      %v1801 = vld [vmem:[#allocation5 + $0x18] sm:$0xff]
      %1802 = vst.msk [vmem:[#allocation6] sm:$0xff] %vm1491, %v1798
      %1803 = vst.msk [vmem:[#allocation6 + $0x8] sm:$0xff] %vm1491, %v1799
      %1804 = vst.msk [vmem:[#allocation6 + $0x10] sm:$0xff] %vm1491, %v1800
      %1805 = vst.msk [vmem:[#allocation6 + $0x18] sm:$0xff] %vm1491, %v1801
      %s1806 = scalar_lea.vmem [#allocation5], 32
      %v1807 = vld [vmem:[%s1806] sm:$0xff]
      %v1808 = vld [vmem:[%s1806 + $0x8] sm:$0xff]
      %v1809 = vld [vmem:[%s1806 + $0x10] sm:$0xff]
      %v1810 = vld [vmem:[%s1806 + $0x18] sm:$0xff]
      %1815 = vrot.lane.b32.xlu0 %v1807, 16
      %v1816 = vpop.permute.xlu0 %1815
      %1817 = vrot.lane.b32.xlu0 %v1808, 16
      %v1818 = vpop.permute.xlu0 %1817
      %1819 = vrot.lane.b32.xlu0 %v1809, 16
      %v1820 = vpop.permute.xlu0 %1819
      %1821 = vrot.lane.b32.xlu0 %v1810, 16
      %v1822 = vpop.permute.xlu0 %1821
      %vm1827 = vcmask 261248
      %1828 = vst.msk [vmem:[#allocation6] sm:$0xff] %vm1827, %v1816
      %1829 = vst.msk [vmem:[#allocation6 + $0x8] sm:$0xff] %vm1827, %v1818
      %1830 = vst.msk [vmem:[#allocation6 + $0x10] sm:$0xff] %vm1827, %v1820
      %1831 = vst.msk [vmem:[#allocation6 + $0x18] sm:$0xff] %vm1827, %v1822
      %s1832 = scalar_lea.vmem [#allocation5], 64
      %v1833 = vld [vmem:[%s1832] sm:$0xff]
      %v1834 = vld [vmem:[%s1832 + $0x8] sm:$0xff]
      %v1835 = vld [vmem:[%s1832 + $0x10] sm:$0xff]
      %v1836 = vld [vmem:[%s1832 + $0x18] sm:$0xff]
      %1841 = vrot.lane.b32.xlu0 %v1833, 32
      %v1842 = vpop.permute.xlu0 %1841
      %1843 = vrot.lane.b32.xlu0 %v1834, 32
      %v1844 = vpop.permute.xlu0 %1843
      %1845 = vrot.lane.b32.xlu0 %v1835, 32
      %v1846 = vpop.permute.xlu0 %1845
      %1847 = vrot.lane.b32.xlu0 %v1836, 32
      %v1848 = vpop.permute.xlu0 %1847
      %vm1853 = vcmask 392448
      %1854 = vst.msk [vmem:[#allocation6] sm:$0xff] %vm1853, %v1842
      %1855 = vst.msk [vmem:[#allocation6 + $0x8] sm:$0xff] %vm1853, %v1844
      %1856 = vst.msk [vmem:[#allocation6 + $0x10] sm:$0xff] %vm1853, %v1846
      %1857 = vst.msk [vmem:[#allocation6 + $0x18] sm:$0xff] %vm1853, %v1848
      %s1858 = scalar_lea.vmem [#allocation5], 96
      %v1859 = vld [vmem:[%s1858] sm:$0xff]
      %v1860 = vld [vmem:[%s1858 + $0x8] sm:$0xff]
      %v1861 = vld [vmem:[%s1858 + $0x10] sm:$0xff]
      %v1862 = vld [vmem:[%s1858 + $0x18] sm:$0xff]
      %1867 = vrot.lane.b32.xlu0 %v1859, 48
      %v1868 = vpop.permute.xlu0 %1867
      %1869 = vrot.lane.b32.xlu0 %v1860, 48
      %v1870 = vpop.permute.xlu0 %1869
      %1871 = vrot.lane.b32.xlu0 %v1861, 48
      %v1872 = vpop.permute.xlu0 %1871
      %1873 = vrot.lane.b32.xlu0 %v1862, 48
      %v1874 = vpop.permute.xlu0 %1873
      %vm1879 = vcmask 523648
      %1880 = vst.msk [vmem:[#allocation6] sm:$0xff] %vm1879, %v1868
      %1881 = vst.msk [vmem:[#allocation6 + $0x8] sm:$0xff] %vm1879, %v1870
      %1882 = vst.msk [vmem:[#allocation6 + $0x10] sm:$0xff] %vm1879, %v1872
      %1883 = vst.msk [vmem:[#allocation6 + $0x18] sm:$0xff] %vm1879, %v1874
      %v1884 = vld [vmem:[#allocation6] sm:$0xff]
      %v1885 = vld [vmem:[#allocation6 + $0x8] sm:$0xff]
      %v1886 = vld [vmem:[#allocation6 + $0x10] sm:$0xff]
      %v1887 = vld [vmem:[#allocation6 + $0x18] sm:$0xff]
      %v1888 = vld [vmem:[%s9] sm:$0xf]
      %v1889 = vld [vmem:[%s9 + $0x4] sm:$0xf]
      %v1890 = vld [vmem:[%s9 + $0x8] sm:$0xf]
      %v1891 = vld [vmem:[%s9 + $0xc] sm:$0xf]
      %v1892 = vld [vmem:[%s9 + $0x10] sm:$0xf]
      %v1893 = vld [vmem:[%s9 + $0x14] sm:$0xf]
      %v1894 = vld [vmem:[%s9 + $0x18] sm:$0xf]
      %v1895 = vld [vmem:[%s9 + $0x1c] sm:$0xf]
      %v1896 = vld [vmem:[%s10] sm:$0x1]
      %v1898 = vlaneseq
      %v1899 = vshrl.u32 %v1898, 7
      %v1900 = vsub.s32 0, %v1899
      %v1901 = vrot.slane %v1896, %v1900
      %v1911 = vunpack.c.l.b16 %v1888
      %v1912 = vunpack.c.l.b16 %v1889
      %v1913 = vunpack.c.l.b16 %v1890
      %v1914 = vunpack.c.l.b16 %v1891
      %v1915 = vunpack.c.l.b16 %v1892
      %v1916 = vunpack.c.l.b16 %v1893
      %v1917 = vunpack.c.l.b16 %v1894
      %v1918 = vunpack.c.l.b16 %v1895
      %v1919 = vpack.c.b16 %v1912, %v1911
      %v1920 = vpack.c.b16 %v1914, %v1913
      %v1921 = vpack.c.b16 %v1916, %v1915
      %v1922 = vpack.c.b16 %v1918, %v1917
      %v1928 = vsel %vm1228, %v1884, 0
      %v1931 = vsel %vm1228, %v1885, 0
      %v1934 = vsel %vm1228, %v1886, 0
      %v1937 = vsel %vm1228, %v1887, 0
      %1939 = vmatprep.subr.bf16.mxu0 0
      %1940 = vmatpush1.bf16.msra.mxu0 %v1919
      %1941 = vmatprep.subr.bf16.mxu0 0
      %1942 = vmatpush1.bf16.msra.mxu0 %v1920
      %1943 = vmatprep.subr.bf16.mxu0 0
      %1944 = vmatpush1.bf16.msra.mxu0 %v1921
      %1945 = vmatprep.subr.bf16.mxu0 0
      %1946 = vmatpush1.bf16.msra.mxu0 %v1922
      %1947 = vmatprep.subr.bf16.mxu0 0
      %1948 = vmatpush1.bf16.msra.mxu0 0
      %1949 = vmatprep.subr.bf16.mxu0 0
      %1950 = vmatpush1.bf16.msra.mxu0 0
      %1951 = vmatprep.subr.bf16.mxu0 0
      %1952 = vmatpush1.bf16.msra.mxu0 0
      %1953 = vmatprep.subr.bf16.mxu0 0
      %1954 = vmatpush1.bf16.msra.mxu0 0
      %1955 = vmatprep.subr.bf16.mxu0 0
      %1956 = vmatpush1.bf16.msra.mxu0 0
      %1957 = vmatprep.subr.bf16.mxu0 0
      %1958 = vmatpush1.bf16.msra.mxu0 0
      %1959 = vmatprep.subr.bf16.mxu0 0
      %1960 = vmatpush1.bf16.msra.mxu0 0
      %1961 = vmatprep.subr.bf16.mxu0 0
      %1962 = vmatpush1.bf16.msra.mxu0 0
      %1963 = vmatprep.subr.bf16.mxu0 0
      %1964 = vmatpush1.bf16.msra.mxu0 0
      %1965 = vmatprep.subr.bf16.mxu0 0
      %1966 = vmatpush1.bf16.msra.mxu0 0
      %1967 = vmatprep.subr.bf16.mxu0 0
      %1968 = vmatpush1.bf16.msra.mxu0 0
      %1969 = vmatprep.subr.bf16.mxu0 0
      %1970 = vmatpush1.bf16.msra.mxu0 0
      %1971 = vmatprep.mubr.bf16.mxu0 0
      %1972 = vmatmul.mubr.bf16.gmra.mrb[0].mxu0 %v1928
      %v1973 = vpop.f32.mrb[0].mxu0
      %v1974 = vadd.f32 %v1901, %v1973
      %v1975 = vpop.f32.mrb[0].mxu0
      %v1976 = vpop.f32.mrb[0].mxu0
      %v1977 = vadd.f32 %v1901, %v1976
      %v1978 = vpop.f32.mrb[0].mxu0
      %1979 = vmatprep.mubr.bf16.mxu0 0
      %1980 = vmatmul.mubr.bf16.gmra.mrb[0].mxu0 %v1931
      %v1981 = vpop.f32.mrb[0].mxu0
      %v1982 = vadd.f32 %v1901, %v1981
      %v1983 = vpop.f32.mrb[0].mxu0
      %v1984 = vpop.f32.mrb[0].mxu0
      %v1985 = vadd.f32 %v1901, %v1984
      %v1986 = vpop.f32.mrb[0].mxu0
      %1987 = vmatprep.mubr.bf16.mxu0 0
      %1988 = vmatmul.mubr.bf16.gmra.mrb[0].mxu0 %v1934
      %v1989 = vpop.f32.mrb[0].mxu0
      %v1990 = vadd.f32 %v1901, %v1989
      %v1991 = vpop.f32.mrb[0].mxu0
      %v1992 = vpop.f32.mrb[0].mxu0
      %v1993 = vadd.f32 %v1901, %v1992
      %v1994 = vpop.f32.mrb[0].mxu0
      %1995 = vmatprep.mubr.bf16.mxu0 0
      %1996 = vmatmul.mubr.bf16.gmra.mrb[0].mxu0 %v1937
      %v1997 = vpop.f32.mrb[0].mxu0
      %v1998 = vadd.f32 %v1901, %v1997
      %v1999 = vpop.f32.mrb[0].mxu0
      %v2000 = vpop.f32.mrb[0].mxu0
      %v2001 = vadd.f32 %v1901, %v2000
      %v2002 = vpop.f32.mrb[0].mxu0
      %2003 = vdwg.mxu0
      %v2004 = vlaneseq
      %v2005 = vshrl.u32 %v2004, 7
      %v2006 = vsub.s32 2, %v2005
      %v2007 = vrot.slane %v572, %v2006
      %v2008 = vmul.f32 %v1974, %v2007
      %v2009 = vmul.f32 %v1977, %v2007
      %v2010 = vmul.f32 %v1982, %v2007
      %v2011 = vmul.f32 %v1985, %v2007
      %v2012 = vmul.f32 %v1990, %v2007
      %v2013 = vmul.f32 %v1993, %v2007
      %v2014 = vmul.f32 %v1998, %v2007
      %v2015 = vmul.f32 %v2001, %v2007
      %v2016 = vadd.f32 %v1220, %v2008
      %v2017 = vadd.f32 %v1221, %v2009
      %v2018 = vadd.f32 %v1222, %v2010
      %v2019 = vadd.f32 %v1223, %v2011
      %v2020 = vadd.f32 %v1224, %v2012
      %v2021 = vadd.f32 %v1225, %v2013
      %v2022 = vadd.f32 %v1226, %v2014
      %v2023 = vadd.f32 %v1227, %v2015
      %v2024 = vsel %vm1228, %v2016, 0.0
      %2025 = vadd.xlane.f32.xlu0 %v2024
      %v2026 = vpop.xlane.xlu0 %2025
      %v2027 = vsel %vm1228, %v2017, 0.0
      %2028 = vadd.xlane.f32.xlu0 %v2027
      %v2029 = vpop.xlane.xlu0 %2028
      %v2030 = vsel %vm1228, %v2018, 0.0
      %2031 = vadd.xlane.f32.xlu0 %v2030
      %v2032 = vpop.xlane.xlu0 %2031
      %v2033 = vsel %vm1228, %v2019, 0.0
      %2034 = vadd.xlane.f32.xlu0 %v2033
      %v2035 = vpop.xlane.xlu0 %2034
      %v2036 = vsel %vm1228, %v2020, 0.0
      %2037 = vadd.xlane.f32.xlu0 %v2036
      %v2038 = vpop.xlane.xlu0 %2037
      %v2039 = vsel %vm1228, %v2021, 0.0
      %2040 = vadd.xlane.f32.xlu0 %v2039
      %v2041 = vpop.xlane.xlu0 %2040
      %v2042 = vsel %vm1228, %v2022, 0.0
      %2043 = vadd.xlane.f32.xlu0 %v2042
      %v2044 = vpop.xlane.xlu0 %2043
      %v2045 = vsel %vm1228, %v2023, 0.0
      %2046 = vadd.xlane.f32.xlu0 %v2045
      %v2047 = vpop.xlane.xlu0 %2046
      %v2048 = vmul.f32 %v2026, %v1253
      %v2049 = vmul.f32 %v2029, %v1253
      %v2050 = vmul.f32 %v2032, %v1253
      %v2051 = vmul.f32 %v2035, %v1253
      %v2052 = vmul.f32 %v2038, %v1253
      %v2053 = vmul.f32 %v2041, %v1253
      %v2054 = vmul.f32 %v2044, %v1253
      %v2055 = vmul.f32 %v2047, %v1253
      %v2056 = vsub.f32 %v2016, %v2048
      %v2057 = vsub.f32 %v2017, %v2049
      %v2058 = vsub.f32 %v2018, %v2050
      %v2059 = vsub.f32 %v2019, %v2051
      %v2060 = vsub.f32 %v2020, %v2052
      %v2061 = vsub.f32 %v2021, %v2053
      %v2062 = vsub.f32 %v2022, %v2054
      %v2063 = vsub.f32 %v2023, %v2055
      %v2064 = vmul.f32 %v2056, %v2056
      %v2065 = vmul.f32 %v2057, %v2057
      %v2066 = vmul.f32 %v2058, %v2058
      %v2067 = vmul.f32 %v2059, %v2059
      %v2068 = vmul.f32 %v2060, %v2060
      %v2069 = vmul.f32 %v2061, %v2061
      %v2070 = vmul.f32 %v2062, %v2062
      %v2071 = vmul.f32 %v2063, %v2063
      %v2072 = vsel %vm1228, %v2064, 0.0
      %2073 = vadd.xlane.f32.xlu0 %v2072
      %v2074 = vpop.xlane.xlu0 %2073
      %v2075 = vsel %vm1228, %v2065, 0.0
      %2076 = vadd.xlane.f32.xlu0 %v2075
      %v2077 = vpop.xlane.xlu0 %2076
      %v2078 = vsel %vm1228, %v2066, 0.0
      %2079 = vadd.xlane.f32.xlu0 %v2078
      %v2080 = vpop.xlane.xlu0 %2079
      %v2081 = vsel %vm1228, %v2067, 0.0
      %2082 = vadd.xlane.f32.xlu0 %v2081
      %v2083 = vpop.xlane.xlu0 %2082
      %v2084 = vsel %vm1228, %v2068, 0.0
      %2085 = vadd.xlane.f32.xlu0 %v2084
      %v2086 = vpop.xlane.xlu0 %2085
      %v2087 = vsel %vm1228, %v2069, 0.0
      %2088 = vadd.xlane.f32.xlu0 %v2087
      %v2089 = vpop.xlane.xlu0 %2088
      %v2090 = vsel %vm1228, %v2070, 0.0
      %2091 = vadd.xlane.f32.xlu0 %v2090
      %v2092 = vpop.xlane.xlu0 %2091
      %v2093 = vsel %vm1228, %v2071, 0.0
      %2094 = vadd.xlane.f32.xlu0 %v2093
      %v2095 = vpop.xlane.xlu0 %2094
      %v2096 = vmul.f32 %v2074, %v1253
      %v2097 = vmul.f32 %v2077, %v1253
      %v2098 = vmul.f32 %v2080, %v1253
      %v2099 = vmul.f32 %v2083, %v1253
      %v2100 = vmul.f32 %v2086, %v1253
      %v2101 = vmul.f32 %v2089, %v1253
      %v2102 = vmul.f32 %v2092, %v1253
      %v2103 = vmul.f32 %v2095, %v1253
      %v2104 = vadd.f32 %v2096, 1e-06
      %v2105 = vadd.f32 %v2097, 1e-06
      %v2106 = vadd.f32 %v2098, 1e-06
      %v2107 = vadd.f32 %v2099, 1e-06
      %v2108 = vadd.f32 %v2100, 1e-06
      %v2109 = vadd.f32 %v2101, 1e-06
      %v2110 = vadd.f32 %v2102, 1e-06
      %v2111 = vadd.f32 %v2103, 1e-06
      %v2112 = vrsqrt.pop %v2104
      %v2113 = vrsqrt.pop %v2105
      %v2114 = vrsqrt.pop %v2106
      %v2115 = vrsqrt.pop %v2107
      %v2116 = vrsqrt.pop %v2108
      %v2117 = vrsqrt.pop %v2109
      %v2118 = vrsqrt.pop %v2110
      %v2119 = vrsqrt.pop %v2111
      %v2120 = vmul.f32 %v2056, %v2112
      %v2121 = vmul.f32 %v2057, %v2113
      %v2122 = vmul.f32 %v2058, %v2114
      %v2123 = vmul.f32 %v2059, %v2115
      %v2124 = vmul.f32 %v2060, %v2116
      %v2125 = vmul.f32 %v2061, %v2117
      %v2126 = vmul.f32 %v2062, %v2118
      %v2127 = vmul.f32 %v2063, %v2119
      %v2128 = vlaneseq
      %v2129 = vshrl.u32 %v2128, 7
      %v2130 = vsub.s32 4, %v2129
      %v2131 = vrot.slane %v1334, %v2130
      %v2132 = vmul.f32 %v2120, %v2131
      %v2133 = vmul.f32 %v2121, %v2131
      %v2134 = vmul.f32 %v2122, %v2131
      %v2135 = vmul.f32 %v2123, %v2131
      %v2136 = vmul.f32 %v2124, %v2131
      %v2137 = vmul.f32 %v2125, %v2131
      %v2138 = vmul.f32 %v2126, %v2131
      %v2139 = vmul.f32 %v2127, %v2131
      %v2140 = vlaneseq
      %v2141 = vshrl.u32 %v2140, 7
      %v2142 = vsub.s32 3, %v2141
      %v2143 = vrot.slane %v572, %v2142
      %v2144 = vadd.f32 %v2132, %v2143
      %v2145 = vadd.f32 %v2133, %v2143
      %v2146 = vadd.f32 %v2134, %v2143
      %v2147 = vadd.f32 %v2135, %v2143
      %v2148 = vadd.f32 %v2136, %v2143
      %v2149 = vadd.f32 %v2137, %v2143
      %v2150 = vadd.f32 %v2138, %v2143
      %v2151 = vadd.f32 %v2139, %v2143
      %v2152 = vpack.c.bf16 %v2145, %v2144
      %v2153 = vpack.c.bf16 %v2147, %v2146
      %v2154 = vpack.c.bf16 %v2149, %v2148
      %v2155 = vpack.c.bf16 %v2151, %v2150
      %v2156 = vld [vmem:[%s11] sm:$0xff]
      %v2157 = vld [vmem:[%s11 + $0x8] sm:$0xff]
      %v2158 = vld [vmem:[%s11 + $0x10] sm:$0xff]
      %v2159 = vld [vmem:[%s11 + $0x18] sm:$0xff]
      %v2160 = vld [vmem:[%s11 + $0x20] sm:$0xff]
      %v2161 = vld [vmem:[%s11 + $0x28] sm:$0xff]
      %v2162 = vld [vmem:[%s11 + $0x30] sm:$0xff]
      %v2163 = vld [vmem:[%s11 + $0x38] sm:$0xff]
      %v2164 = vld [vmem:[%s12] sm:$0x3]
      %v2166 = vlaneseq
      %v2167 = vshrl.u32 %v2166, 7
      %v2168 = vsub.s32 0, %v2167
      %v2169 = vrot.slane %v2164, %v2168
      %v2170 = vlaneseq
      %v2171 = vshrl.u32 %v2170, 7
      %v2172 = vsub.s32 1, %v2171
      %v2173 = vrot.slane %v2164, %v2172
      %v2184 = vunpack.c.l.b16 %v2156
      %v2185 = vunpack.c.h.b16 %v2156
      %v2186 = vunpack.c.l.b16 %v2157
      %v2187 = vunpack.c.h.b16 %v2157
      %v2188 = vunpack.c.l.b16 %v2158
      %v2189 = vunpack.c.h.b16 %v2158
      %v2190 = vunpack.c.l.b16 %v2159
      %v2191 = vunpack.c.h.b16 %v2159
      %v2192 = vunpack.c.l.b16 %v2160
      %v2193 = vunpack.c.h.b16 %v2160
      %v2194 = vunpack.c.l.b16 %v2161
      %v2195 = vunpack.c.h.b16 %v2161
      %v2196 = vunpack.c.l.b16 %v2162
      %v2197 = vunpack.c.h.b16 %v2162
      %v2198 = vunpack.c.l.b16 %v2163
      %v2199 = vunpack.c.h.b16 %v2163
      %v2200 = vpack.c.b16 %v2186, %v2184
      %v2201 = vpack.c.b16 %v2187, %v2185
      %v2202 = vpack.c.b16 %v2190, %v2188
      %v2203 = vpack.c.b16 %v2191, %v2189
      %v2204 = vpack.c.b16 %v2194, %v2192
      %v2205 = vpack.c.b16 %v2195, %v2193
      %v2206 = vpack.c.b16 %v2198, %v2196
      %v2207 = vpack.c.b16 %v2199, %v2197
      %v2217 = vsel %vm1228, %v2152, 0
      %v2220 = vsel %vm1228, %v2153, 0
      %v2223 = vsel %vm1228, %v2154, 0
      %v2226 = vsel %vm1228, %v2155, 0
      %2228 = vmatprep.subr.bf16.mxu0 %v2201
      %2229 = vmatpush1.bf16.msra.mxu0 %v2200
      %2230 = vmatprep.subr.bf16.mxu0 %v2203
      %2231 = vmatpush1.bf16.msra.mxu0 %v2202
      %2232 = vmatprep.subr.bf16.mxu0 %v2205
      %2233 = vmatpush1.bf16.msra.mxu0 %v2204
      %2234 = vmatprep.subr.bf16.mxu0 %v2207
      %2235 = vmatpush1.bf16.msra.mxu0 %v2206
      %2236 = vmatprep.subr.bf16.mxu0 0
      %2237 = vmatpush1.bf16.msra.mxu0 0
      %2238 = vmatprep.subr.bf16.mxu0 0
      %2239 = vmatpush1.bf16.msra.mxu0 0
      %2240 = vmatprep.subr.bf16.mxu0 0
      %2241 = vmatpush1.bf16.msra.mxu0 0
      %2242 = vmatprep.subr.bf16.mxu0 0
      %2243 = vmatpush1.bf16.msra.mxu0 0
      %2244 = vmatprep.subr.bf16.mxu0 0
      %2245 = vmatpush1.bf16.msra.mxu0 0
      %2246 = vmatprep.subr.bf16.mxu0 0
      %2247 = vmatpush1.bf16.msra.mxu0 0
      %2248 = vmatprep.subr.bf16.mxu0 0
      %2249 = vmatpush1.bf16.msra.mxu0 0
      %2250 = vmatprep.subr.bf16.mxu0 0
      %2251 = vmatpush1.bf16.msra.mxu0 0
      %2252 = vmatprep.subr.bf16.mxu0 0
      %2253 = vmatpush1.bf16.msra.mxu0 0
      %2254 = vmatprep.subr.bf16.mxu0 0
      %2255 = vmatpush1.bf16.msra.mxu0 0
      %2256 = vmatprep.subr.bf16.mxu0 0
      %2257 = vmatpush1.bf16.msra.mxu0 0
      %2258 = vmatprep.subr.bf16.mxu0 0
      %2259 = vmatpush1.bf16.msra.mxu0 0
      %2260 = vmatprep.mubr.bf16.mxu0 0
      %2261 = vmatmul.mubr.bf16.gmra.mrb[0].mxu0 %v2217
      %v2262 = vpop.f32.mrb[0].mxu0
      %v2263 = vadd.f32 %v2169, %v2262
      %v2264 = vpop.f32.mrb[0].mxu0
      %v2265 = vadd.f32 %v2173, %v2264
      %v2266 = vpop.f32.mrb[0].mxu0
      %v2267 = vadd.f32 %v2169, %v2266
      %v2268 = vpop.f32.mrb[0].mxu0
      %v2269 = vadd.f32 %v2173, %v2268
      %2270 = vmatprep.mubr.bf16.mxu0 0
      %2271 = vmatmul.mubr.bf16.gmra.mrb[0].mxu0 %v2220
      %v2272 = vpop.f32.mrb[0].mxu0
      %v2273 = vadd.f32 %v2169, %v2272
      %v2274 = vpop.f32.mrb[0].mxu0
      %v2275 = vadd.f32 %v2173, %v2274
      %v2276 = vpop.f32.mrb[0].mxu0
      %v2277 = vadd.f32 %v2169, %v2276
      %v2278 = vpop.f32.mrb[0].mxu0
      %v2279 = vadd.f32 %v2173, %v2278
      %2280 = vmatprep.mubr.bf16.mxu0 0
      %2281 = vmatmul.mubr.bf16.gmra.mrb[0].mxu0 %v2223
      %v2282 = vpop.f32.mrb[0].mxu0
      %v2283 = vadd.f32 %v2169, %v2282
      %v2284 = vpop.f32.mrb[0].mxu0
      %v2285 = vadd.f32 %v2173, %v2284
      %v2286 = vpop.f32.mrb[0].mxu0
      %v2287 = vadd.f32 %v2169, %v2286
      %v2288 = vpop.f32.mrb[0].mxu0
      %v2289 = vadd.f32 %v2173, %v2288
      %2290 = vmatprep.mubr.bf16.mxu0 0
      %2291 = vmatmul.mubr.bf16.gmra.mrb[0].mxu0 %v2226
      %v2292 = vpop.f32.mrb[0].mxu0
      %v2293 = vadd.f32 %v2169, %v2292
      %v2294 = vpop.f32.mrb[0].mxu0
      %v2295 = vadd.f32 %v2173, %v2294
      %v2296 = vpop.f32.mrb[0].mxu0
      %v2297 = vadd.f32 %v2169, %v2296
      %v2298 = vpop.f32.mrb[0].mxu0
      %v2299 = vadd.f32 %v2173, %v2298
      %2300 = vdwg.mxu0
      %v2301 = vmul.f32 %v2263, %v2263
      %v2302 = vmul.f32 %v2265, %v2265
      %v2303 = vmul.f32 %v2267, %v2267
      %v2304 = vmul.f32 %v2269, %v2269
      %v2305 = vmul.f32 %v2273, %v2273
      %v2306 = vmul.f32 %v2275, %v2275
      %v2307 = vmul.f32 %v2277, %v2277
      %v2308 = vmul.f32 %v2279, %v2279
      %v2309 = vmul.f32 %v2283, %v2283
      %v2310 = vmul.f32 %v2285, %v2285
      %v2311 = vmul.f32 %v2287, %v2287
      %v2312 = vmul.f32 %v2289, %v2289
      %v2313 = vmul.f32 %v2293, %v2293
      %v2314 = vmul.f32 %v2295, %v2295
      %v2315 = vmul.f32 %v2297, %v2297
      %v2316 = vmul.f32 %v2299, %v2299
      %v2317 = vmul.f32 %v2263, %v2301
      %v2318 = vmul.f32 %v2265, %v2302
      %v2319 = vmul.f32 %v2267, %v2303
      %v2320 = vmul.f32 %v2269, %v2304
      %v2321 = vmul.f32 %v2273, %v2305
      %v2322 = vmul.f32 %v2275, %v2306
      %v2323 = vmul.f32 %v2277, %v2307
      %v2324 = vmul.f32 %v2279, %v2308
      %v2325 = vmul.f32 %v2283, %v2309
      %v2326 = vmul.f32 %v2285, %v2310
      %v2327 = vmul.f32 %v2287, %v2311
      %v2328 = vmul.f32 %v2289, %v2312
      %v2329 = vmul.f32 %v2293, %v2313
      %v2330 = vmul.f32 %v2295, %v2314
      %v2331 = vmul.f32 %v2297, %v2315
      %v2332 = vmul.f32 %v2299, %v2316
      %v2333 = vmul.f32 %v2317, 0.044715
      %v2334 = vmul.f32 %v2318, 0.044715
      %v2335 = vmul.f32 %v2319, 0.044715
      %v2336 = vmul.f32 %v2320, 0.044715
      %v2337 = vmul.f32 %v2321, 0.044715
      %v2338 = vmul.f32 %v2322, 0.044715
      %v2339 = vmul.f32 %v2323, 0.044715
      %v2340 = vmul.f32 %v2324, 0.044715
      %v2341 = vmul.f32 %v2325, 0.044715
      %v2342 = vmul.f32 %v2326, 0.044715
      %v2343 = vmul.f32 %v2327, 0.044715
      %v2344 = vmul.f32 %v2328, 0.044715
      %v2345 = vmul.f32 %v2329, 0.044715
      %v2346 = vmul.f32 %v2330, 0.044715
      %v2347 = vmul.f32 %v2331, 0.044715
      %v2348 = vmul.f32 %v2332, 0.044715
      %v2349 = vadd.f32 %v2263, %v2333
      %v2350 = vadd.f32 %v2265, %v2334
      %v2351 = vadd.f32 %v2267, %v2335
      %v2352 = vadd.f32 %v2269, %v2336
      %v2353 = vadd.f32 %v2273, %v2337
      %v2354 = vadd.f32 %v2275, %v2338
      %v2355 = vadd.f32 %v2277, %v2339
      %v2356 = vadd.f32 %v2279, %v2340
      %v2357 = vadd.f32 %v2283, %v2341
      %v2358 = vadd.f32 %v2285, %v2342
      %v2359 = vadd.f32 %v2287, %v2343
      %v2360 = vadd.f32 %v2289, %v2344
      %v2361 = vadd.f32 %v2293, %v2345
      %v2362 = vadd.f32 %v2295, %v2346
      %v2363 = vadd.f32 %v2297, %v2347
      %v2364 = vadd.f32 %v2299, %v2348
      %v2365 = vmul.f32 %v2349, 0.7978846
      %v2366 = vmul.f32 %v2350, 0.7978846
      %v2367 = vmul.f32 %v2351, 0.7978846
      %v2368 = vmul.f32 %v2352, 0.7978846
      %v2369 = vmul.f32 %v2353, 0.7978846
      %v2370 = vmul.f32 %v2354, 0.7978846
      %v2371 = vmul.f32 %v2355, 0.7978846
      %v2372 = vmul.f32 %v2356, 0.7978846
      %v2373 = vmul.f32 %v2357, 0.7978846
      %v2374 = vmul.f32 %v2358, 0.7978846
      %v2375 = vmul.f32 %v2359, 0.7978846
      %v2376 = vmul.f32 %v2360, 0.7978846
      %v2377 = vmul.f32 %v2361, 0.7978846
      %v2378 = vmul.f32 %v2362, 0.7978846
      %v2379 = vmul.f32 %v2363, 0.7978846
      %v2380 = vmul.f32 %v2364, 0.7978846
      %v2381 = vtanh.pop %v2365
      %v2382 = vtanh.pop %v2366
      %v2383 = vtanh.pop %v2367
      %v2384 = vtanh.pop %v2368
      %v2385 = vtanh.pop %v2369
      %v2386 = vtanh.pop %v2370
      %v2387 = vtanh.pop %v2371
      %v2388 = vtanh.pop %v2372
      %v2389 = vtanh.pop %v2373
      %v2390 = vtanh.pop %v2374
      %v2391 = vtanh.pop %v2375
      %v2392 = vtanh.pop %v2376
      %v2393 = vtanh.pop %v2377
      %v2394 = vtanh.pop %v2378
      %v2395 = vtanh.pop %v2379
      %v2396 = vtanh.pop %v2380
      %v2397 = vadd.f32 %v2381, 1.0
      %v2398 = vadd.f32 %v2382, 1.0
      %v2399 = vadd.f32 %v2383, 1.0
      %v2400 = vadd.f32 %v2384, 1.0
      %v2401 = vadd.f32 %v2385, 1.0
      %v2402 = vadd.f32 %v2386, 1.0
      %v2403 = vadd.f32 %v2387, 1.0
      %v2404 = vadd.f32 %v2388, 1.0
      %v2405 = vadd.f32 %v2389, 1.0
      %v2406 = vadd.f32 %v2390, 1.0
      %v2407 = vadd.f32 %v2391, 1.0
      %v2408 = vadd.f32 %v2392, 1.0
      %v2409 = vadd.f32 %v2393, 1.0
      %v2410 = vadd.f32 %v2394, 1.0
      %v2411 = vadd.f32 %v2395, 1.0
      %v2412 = vadd.f32 %v2396, 1.0
      %v2413 = vmul.f32 %v2397, 0.5
      %v2414 = vmul.f32 %v2398, 0.5
      %v2415 = vmul.f32 %v2399, 0.5
      %v2416 = vmul.f32 %v2400, 0.5
      %v2417 = vmul.f32 %v2401, 0.5
      %v2418 = vmul.f32 %v2402, 0.5
      %v2419 = vmul.f32 %v2403, 0.5
      %v2420 = vmul.f32 %v2404, 0.5
      %v2421 = vmul.f32 %v2405, 0.5
      %v2422 = vmul.f32 %v2406, 0.5
      %v2423 = vmul.f32 %v2407, 0.5
      %v2424 = vmul.f32 %v2408, 0.5
      %v2425 = vmul.f32 %v2409, 0.5
      %v2426 = vmul.f32 %v2410, 0.5
      %v2427 = vmul.f32 %v2411, 0.5
      %v2428 = vmul.f32 %v2412, 0.5
      %v2429 = vmul.f32 %v2263, %v2413
      %v2430 = vmul.f32 %v2265, %v2414
      %v2431 = vmul.f32 %v2267, %v2415
      %v2432 = vmul.f32 %v2269, %v2416
      %v2433 = vmul.f32 %v2273, %v2417
      %v2434 = vmul.f32 %v2275, %v2418
      %v2435 = vmul.f32 %v2277, %v2419
      %v2436 = vmul.f32 %v2279, %v2420
      %v2437 = vmul.f32 %v2283, %v2421
      %v2438 = vmul.f32 %v2285, %v2422
      %v2439 = vmul.f32 %v2287, %v2423
      %v2440 = vmul.f32 %v2289, %v2424
      %v2441 = vmul.f32 %v2293, %v2425
      %v2442 = vmul.f32 %v2295, %v2426
      %v2443 = vmul.f32 %v2297, %v2427
      %v2444 = vmul.f32 %v2299, %v2428
      %v2445 = vpack.c.bf16 %v2431, %v2429
      %v2446 = vpack.c.bf16 %v2432, %v2430
      %v2447 = vpack.c.bf16 %v2435, %v2433
      %v2448 = vpack.c.bf16 %v2436, %v2434
      %v2449 = vpack.c.bf16 %v2439, %v2437
      %v2450 = vpack.c.bf16 %v2440, %v2438
      %v2451 = vpack.c.bf16 %v2443, %v2441
      %v2452 = vpack.c.bf16 %v2444, %v2442
      %v2453 = vld [vmem:[%s13] sm:$0xf]
      %v2454 = vld [vmem:[%s13 + $0x4] sm:$0xf]
      %v2455 = vld [vmem:[%s13 + $0x8] sm:$0xf]
      %v2456 = vld [vmem:[%s13 + $0xc] sm:$0xf]
      %v2457 = vld [vmem:[%s13 + $0x10] sm:$0xf]
      %v2458 = vld [vmem:[%s13 + $0x14] sm:$0xf]
      %v2459 = vld [vmem:[%s13 + $0x18] sm:$0xf]
      %v2460 = vld [vmem:[%s13 + $0x1c] sm:$0xf]
      %v2461 = vld [vmem:[%s13 + $0x20] sm:$0xf]
      %v2462 = vld [vmem:[%s13 + $0x24] sm:$0xf]
      %v2463 = vld [vmem:[%s13 + $0x28] sm:$0xf]
      %v2464 = vld [vmem:[%s13 + $0x2c] sm:$0xf]
      %v2465 = vld [vmem:[%s13 + $0x30] sm:$0xf]
      %v2466 = vld [vmem:[%s13 + $0x34] sm:$0xf]
      %v2467 = vld [vmem:[%s13 + $0x38] sm:$0xf]
      %v2468 = vld [vmem:[%s13 + $0x3c] sm:$0xf]
      %v2469 = vld [vmem:[%s13 + $0x40] sm:$0xf]
      %v2470 = vld [vmem:[%s13 + $0x44] sm:$0xf]
      %v2471 = vld [vmem:[%s13 + $0x48] sm:$0xf]
      %v2472 = vld [vmem:[%s13 + $0x4c] sm:$0xf]
      %v2473 = vld [vmem:[%s13 + $0x50] sm:$0xf]
      %v2474 = vld [vmem:[%s13 + $0x54] sm:$0xf]
      %v2475 = vld [vmem:[%s13 + $0x58] sm:$0xf]
      %v2476 = vld [vmem:[%s13 + $0x5c] sm:$0xf]
      %v2477 = vld [vmem:[%s13 + $0x60] sm:$0xf]
      %v2478 = vld [vmem:[%s13 + $0x64] sm:$0xf]
      %v2479 = vld [vmem:[%s13 + $0x68] sm:$0xf]
      %v2480 = vld [vmem:[%s13 + $0x6c] sm:$0xf]
      %v2481 = vld [vmem:[%s13 + $0x70] sm:$0xf]
      %v2482 = vld [vmem:[%s13 + $0x74] sm:$0xf]
      %v2483 = vld [vmem:[%s13 + $0x78] sm:$0xf]
      %v2484 = vld [vmem:[%s13 + $0x7c] sm:$0xf]
      %v2485 = vld [vmem:[%s14] sm:$0x1]
      %v2487 = vlaneseq
      %v2488 = vshrl.u32 %v2487, 7
      %v2489 = vsub.s32 0, %v2488
      %v2490 = vrot.slane %v2485, %v2489
      %v2524 = vunpack.c.l.b16 %v2453
      %v2525 = vunpack.c.l.b16 %v2454
      %v2526 = vunpack.c.l.b16 %v2455
      %v2527 = vunpack.c.l.b16 %v2456
      %v2528 = vunpack.c.l.b16 %v2457
      %v2529 = vunpack.c.l.b16 %v2458
      %v2530 = vunpack.c.l.b16 %v2459
      %v2531 = vunpack.c.l.b16 %v2460
      %v2532 = vunpack.c.l.b16 %v2461
      %v2533 = vunpack.c.l.b16 %v2462
      %v2534 = vunpack.c.l.b16 %v2463
      %v2535 = vunpack.c.l.b16 %v2464
      %v2536 = vunpack.c.l.b16 %v2465
      %v2537 = vunpack.c.l.b16 %v2466
      %v2538 = vunpack.c.l.b16 %v2467
      %v2539 = vunpack.c.l.b16 %v2468
      %v2540 = vunpack.c.l.b16 %v2469
      %v2541 = vunpack.c.l.b16 %v2470
      %v2542 = vunpack.c.l.b16 %v2471
      %v2543 = vunpack.c.l.b16 %v2472
      %v2544 = vunpack.c.l.b16 %v2473
      %v2545 = vunpack.c.l.b16 %v2474
      %v2546 = vunpack.c.l.b16 %v2475
      %v2547 = vunpack.c.l.b16 %v2476
      %v2548 = vunpack.c.l.b16 %v2477
      %v2549 = vunpack.c.l.b16 %v2478
      %v2550 = vunpack.c.l.b16 %v2479
      %v2551 = vunpack.c.l.b16 %v2480
      %v2552 = vunpack.c.l.b16 %v2481
      %v2553 = vunpack.c.l.b16 %v2482
      %v2554 = vunpack.c.l.b16 %v2483
      %v2555 = vunpack.c.l.b16 %v2484
      %v2556 = vpack.c.b16 %v2525, %v2524
      %v2557 = vpack.c.b16 %v2527, %v2526
      %v2558 = vpack.c.b16 %v2529, %v2528
      %v2559 = vpack.c.b16 %v2531, %v2530
      %v2560 = vpack.c.b16 %v2533, %v2532
      %v2561 = vpack.c.b16 %v2535, %v2534
      %v2562 = vpack.c.b16 %v2537, %v2536
      %v2563 = vpack.c.b16 %v2539, %v2538
      %v2564 = vpack.c.b16 %v2541, %v2540
      %v2565 = vpack.c.b16 %v2543, %v2542
      %v2566 = vpack.c.b16 %v2545, %v2544
      %v2567 = vpack.c.b16 %v2547, %v2546
      %v2568 = vpack.c.b16 %v2549, %v2548
      %v2569 = vpack.c.b16 %v2551, %v2550
      %v2570 = vpack.c.b16 %v2553, %v2552
      %v2571 = vpack.c.b16 %v2555, %v2554
      %2588 = vmatprep.subr.bf16.mxu0 0
      %2589 = vmatpush1.bf16.msra.mxu0 %v2556
      %2590 = vmatprep.subr.bf16.mxu0 0
      %2591 = vmatpush1.bf16.msra.mxu0 %v2557
      %2592 = vmatprep.subr.bf16.mxu0 0
      %2593 = vmatpush1.bf16.msra.mxu0 %v2558
      %2594 = vmatprep.subr.bf16.mxu0 0
      %2595 = vmatpush1.bf16.msra.mxu0 %v2559
      %2596 = vmatprep.subr.bf16.mxu0 0
      %2597 = vmatpush1.bf16.msra.mxu0 %v2560
      %2598 = vmatprep.subr.bf16.mxu0 0
      %2599 = vmatpush1.bf16.msra.mxu0 %v2561
      %2600 = vmatprep.subr.bf16.mxu0 0
      %2601 = vmatpush1.bf16.msra.mxu0 %v2562
      %2602 = vmatprep.subr.bf16.mxu0 0
      %2603 = vmatpush1.bf16.msra.mxu0 %v2563
      %2604 = vmatprep.subr.bf16.mxu0 0
      %2605 = vmatpush1.bf16.msra.mxu0 %v2564
      %2606 = vmatprep.subr.bf16.mxu0 0
      %2607 = vmatpush1.bf16.msra.mxu0 %v2565
      %2608 = vmatprep.subr.bf16.mxu0 0
      %2609 = vmatpush1.bf16.msra.mxu0 %v2566
      %2610 = vmatprep.subr.bf16.mxu0 0
      %2611 = vmatpush1.bf16.msra.mxu0 %v2567
      %2612 = vmatprep.subr.bf16.mxu0 0
      %2613 = vmatpush1.bf16.msra.mxu0 %v2568
      %2614 = vmatprep.subr.bf16.mxu0 0
      %2615 = vmatpush1.bf16.msra.mxu0 %v2569
      %2616 = vmatprep.subr.bf16.mxu0 0
      %2617 = vmatpush1.bf16.msra.mxu0 %v2570
      %2618 = vmatprep.subr.bf16.mxu0 0
      %2619 = vmatpush1.bf16.msra.mxu0 %v2571
      %2620 = vmatprep.mubr.bf16.mxu0 %v2446
      %2621 = vmatmul.mubr.bf16.gmra.mrb[0].mxu0 %v2445
      %v2622 = vpop.f32.mrb[0].mxu0
      %v2623 = vadd.f32 %v2490, %v2622
      %v2624 = vpop.f32.mrb[0].mxu0
      %v2625 = vpop.f32.mrb[0].mxu0
      %v2626 = vadd.f32 %v2490, %v2625
      %v2627 = vpop.f32.mrb[0].mxu0
      %2628 = vmatprep.mubr.bf16.mxu0 %v2448
      %2629 = vmatmul.mubr.bf16.gmra.mrb[0].mxu0 %v2447
      %v2630 = vpop.f32.mrb[0].mxu0
      %v2631 = vadd.f32 %v2490, %v2630
      %v2632 = vpop.f32.mrb[0].mxu0
      %v2633 = vpop.f32.mrb[0].mxu0
      %v2634 = vadd.f32 %v2490, %v2633
      %v2635 = vpop.f32.mrb[0].mxu0
      %2636 = vmatprep.mubr.bf16.mxu0 %v2450
      %2637 = vmatmul.mubr.bf16.gmra.mrb[0].mxu0 %v2449
      %v2638 = vpop.f32.mrb[0].mxu0
      %v2639 = vadd.f32 %v2490, %v2638
      %v2640 = vpop.f32.mrb[0].mxu0
      %v2641 = vpop.f32.mrb[0].mxu0
      %v2642 = vadd.f32 %v2490, %v2641
      %v2643 = vpop.f32.mrb[0].mxu0
      %2644 = vmatprep.mubr.bf16.mxu0 %v2452
      %2645 = vmatmul.mubr.bf16.gmra.mrb[0].mxu0 %v2451
      %v2646 = vpop.f32.mrb[0].mxu0
      %v2647 = vadd.f32 %v2490, %v2646
      %v2648 = vpop.f32.mrb[0].mxu0
      %v2649 = vpop.f32.mrb[0].mxu0
      %v2650 = vadd.f32 %v2490, %v2649
      %v2651 = vpop.f32.mrb[0].mxu0
      %2652 = vdwg.mxu0
      %v2653 = vlaneseq
      %v2654 = vshrl.u32 %v2653, 7
      %v2655 = vsub.s32 5, %v2654
      %v2656 = vrot.slane %v572, %v2655
      %v2657 = vmul.f32 %v2623, %v2656
      %v2658 = vmul.f32 %v2626, %v2656
      %v2659 = vmul.f32 %v2631, %v2656
      %v2660 = vmul.f32 %v2634, %v2656
      %v2661 = vmul.f32 %v2639, %v2656
      %v2662 = vmul.f32 %v2642, %v2656
      %v2663 = vmul.f32 %v2647, %v2656
      %v2664 = vmul.f32 %v2650, %v2656
      %v2665 = vadd.f32 %v2016, %v2657
      %v2666 = vadd.f32 %v2017, %v2658
      %v2667 = vadd.f32 %v2018, %v2659
      %v2668 = vadd.f32 %v2019, %v2660
      %v2669 = vadd.f32 %v2020, %v2661
      %v2670 = vadd.f32 %v2021, %v2662
      %v2671 = vadd.f32 %v2022, %v2663
      %v2672 = vadd.f32 %v2023, %v2664
      %2673 = vst.msk [vmem:[%s569] sm:$0xff] %vm1228, %v2665
      %2674 = vst.msk [vmem:[%s569 + $0x8] sm:$0xff] %vm1228, %v2666
      %2675 = vst.msk [vmem:[%s569 + $0x10] sm:$0xff] %vm1228, %v2667
      %2676 = vst.msk [vmem:[%s569 + $0x18] sm:$0xff] %vm1228, %v2668
      %2677 = vst.msk [vmem:[%s569 + $0x20] sm:$0xff] %vm1228, %v2669
      %2678 = vst.msk [vmem:[%s569 + $0x28] sm:$0xff] %vm1228, %v2670
      %2679 = vst.msk [vmem:[%s569 + $0x30] sm:$0xff] %vm1228, %v2671
      %2680 = vst.msk [vmem:[%s569 + $0x38] sm:$0xff] %vm1228, %v2672
      %s2681 = smul.u32 8, %s31
      %p2682 = scmp.lt.s32.totalorder %s30, 1
      %s2683 = scalar_select %p2682, %s30, 1
      %p2684 = scmp.lt.s32.totalorder %s2681, 15
      %s2685 = scalar_select %p2684, %s2681, 15
      %s2686 = smul.addr %s2683, 16
      %s2687 = sadd.s32 %s2685, %s2686
      %s2688 = smul.addr %s2687, 8
      %s2689 = scalar_lea.vmem %s15, %s2688
      // Predicated region
      $region92: #{tpu_custom_call.1} parent=79 // pred_check
        %p2690 = pneg %p390
      $region93: #{tpu_custom_call.1} parent=79 // pred_check_branch
        %2692 = sbr.rel (%p2690) target = $region95
      $region94: #{tpu_custom_call.1} parent=79 // pred_region
        %s2693 = smul.u32 8, %s31
      $region95: #{tpu_custom_call.1} parent=79 // pred_fallthru
        _
    $region80: #{tpu_custom_call.1} parent=5 // pred_fallthru
      _
    %p2694 = scmp.le.s32.totalorder 2, %s21
    // Predicated region
    $region96: #{tpu_custom_call.1} parent=5 // pred_check
      %p2695 = pneg %p2694
    $region97: #{tpu_custom_call.1} parent=5 // pred_check_branch
      %2697 = sbr.rel (%p2695) target = $region99
    $region98: #{tpu_custom_call.1} parent=5 // pred_region
      %s2698 = ssub.s32 %s21, 2
      // Predicated region
      $region100: #{tpu_custom_call.1} parent=98 // pred_check
        %p2699 = pneg %p396
      $region101: #{tpu_custom_call.1} parent=98 // pred_check_branch
        %2701 = sbr.rel (%p2699) target = $region103
      $region102: #{tpu_custom_call.1} parent=98 // pred_region
        %s2702 = smul.u32 8, %s33
        %p2703 = scmp.lt.s32.totalorder %s32, 1
        %s2704 = scalar_select %p2703, %s32, 1
        %p2705 = scmp.lt.s32.totalorder %s2702, 15
        %s2706 = scalar_select %p2705, %s2702, 15
        %s2707 = smul.addr %s2704, 16
        %s2708 = sadd.s32 %s2706, %s2707
        %s2709 = smul.addr %s2708, 8
        %s2710 = scalar_lea.vmem %s15, %s2709
      $region103: #{tpu_custom_call.1} parent=98 // pred_fallthru
        _
    $region99: #{tpu_custom_call.1} parent=5 // pred_fallthru
      _
  $region6: #{tpu_custom_call.1} parent=0 // loop_footer
    %s25 = sadd.s32 1, %s21
  $region7: #{tpu_custom_call.1} parent=0 // loop_footer_branch
    %20 = sbr.rel target = $region3
  $region8: #{tpu_custom_call.1} parent=0 // loop_exit
    _

</llo_original>
